<compile_context>
chip_gen: v5e
topology: v5e:2x2
jax: 0.10.0
libtpu: 0.0.40
codegen_flags: <defaults>
</compile_context>

<pallas_src>
import jax
import jax.numpy as jnp
from jax import lax
from jax.experimental import pallas as pl
from jax.experimental.pallas import tpu as pltpu

_EPS = 1e-6


def _make_acloss_kernel(*, C, TH, W, h_tiled, cls_target, ragged,
                        compute_length, compute_region,
                        length_scale, region_scale, use_roll):
    """Builds the ACLoss kernel with all shapes / flags baked in statically."""

    def kernel(*refs):
        refs = list(refs)
        pred_ref = refs.pop(0)
        halo_ref = refs.pop(0) if (compute_length and h_tiled) else None
        tgt_ref = refs.pop(0) if compute_region else None
        valid_ref = refs.pop(0) if ragged else None
        out_ref = refs.pop(0)

        x = pred_ref[...].astype(jnp.float32)               # (BN, C, TH, W)

        # Per-slab validity for the ragged tail block along N (NaN-safe select).
        slab_ok = (valid_ref[...] > 0.0) if ragged else None  # (BN, 1, 1, 1)

        def masked_sum(elems, mask):
            m = mask
            if slab_ok is not None:
                m = slab_ok if m is None else (m & slab_ok)
            if m is None:
                return jnp.sum(elems, keepdims=True)
            return jnp.sum(jnp.where(m, elems, 0.0), keepdims=True)

        acc = jnp.zeros((1, 1, 1, 1), jnp.float32)

        # ------------------------------ region term ------------------------
        if compute_region:
            if cls_target:
                # t in {0,1}  =>  x*(t-1)^2 + (1-x)*t^2 == where(t, 1-x, x).
                cls4 = tgt_ref[...].astype(jnp.int32)[:, None, :, :]
                region_elems = None
                for c in range(C):            # C is tiny (2 for this loss)
                    xc = x[:, c:c + 1, :, :]
                    e = jnp.where(cls4 == c, 1.0 - xc, xc)
                    region_elems = e if region_elems is None else region_elems + e
                acc += region_scale * masked_sum(region_elems, None)
            else:
                t = tgt_ref[...].astype(jnp.float32)        # dense / soft target
                acc += region_scale * masked_sum(x + t * t - 2.0 * x * t, None)

        # ------------------------------ length term ------------------------
        if compute_length:
            #   dy[a,b] = x[a+2,b] - x[a+1,b]   (interior rows a <= H-3)
            #   dx[a,b] = x[a,b+2] - x[a,b+1]   (interior cols b <= W-3)
            if use_roll:
                # XLU rolls + border masks: vreg-aligned, no relayout copies.
                xu1 = pltpu.roll(x, (TH - 1) % TH, axis=2)   # x[(a+1) % TH]
                xu2 = pltpu.roll(x, (TH - 2) % TH, axis=2)   # x[(a+2) % TH]
                xl1 = pltpu.roll(x, (W - 1) % W, axis=3)     # x[:, (b+1) % W]
                xl2 = pltpu.roll(x, (W - 2) % W, axis=3)     # x[:, (b+2) % W]
                dy = xu2 - xu1
                dx = xl2 - xl1
                delta = dy * dy + dx * dx                    # >= 0, abs() dropped
                rows = lax.broadcasted_iota(jnp.int32, (1, 1, TH, W), 2)
                cols = lax.broadcasted_iota(jnp.int32, (1, 1, TH, W), 3)
                col_ok = cols <= (W - 3)
                ok = (rows <= (TH - 3)) & col_ok
                acc += length_scale * masked_sum(jnp.sqrt(delta + _EPS), ok)
            else:
                dy = x[:, :, 2:, :-2] - x[:, :, 1:-1, :-2]
                dx = x[:, :, :-2, 2:] - x[:, :, :-2, 1:-1]
                delta = dy * dy + dx * dx
                acc += length_scale * masked_sum(jnp.sqrt(delta + _EPS), None)

            if h_tiled:
                # Rows TH-2 / TH-1 of this H-tile need the first two rows of
                # the next tile (2-row halo, shipped as an 8-row aligned block).
                # The last H-tile has no interior rows there -> gated off.
                not_last = (pl.program_id(1) + 1) < pl.num_programs(1)
                xh = halo_ref[...].astype(jnp.float32)       # (BN, C, 8, W)
                bsum = jnp.zeros((1, 1, 1, 1), jnp.float32)
                for k in (2, 1):                             # local row TH - k
                    r1 = x[:, :, TH - 1:TH, :] if k == 2 else xh[:, :, 0:1, :]
                    r2 = xh[:, :, 0:1, :] if k == 2 else xh[:, :, 1:2, :]
                    if use_roll:
                        dyb = r2 - r1
                        dxb = dx[:, :, TH - k:TH - k + 1, :]   # reuse lane diffs
                        db = dyb * dyb + dxb * dxb
                        bsum += masked_sum(jnp.sqrt(db + _EPS),
                                           col_ok[:, :, :1, :])
                    else:
                        xa = x[:, :, TH - k:TH - k + 1, :]
                        dyb = (r2 - r1)[:, :, :, :-2]
                        dxb = xa[:, :, :, 2:] - xa[:, :, :, 1:-1]
                        db = dyb * dyb + dxb * dxb
                        bsum += masked_sum(jnp.sqrt(db + _EPS), None)
                acc += length_scale * jnp.where(not_last, bsum, 0.0)

        out_ref[...] = acc

    return kernel


def _vmem_capacity_bytes():
    try:
        return int(pltpu.get_tpu_info().vmem_capacity_bytes)
    except Exception:                 # unknown chip / query unavailable
        return 64 * 2**20             # conservative: v7x per-TensorCore VMEM


def ac_loss(output, target, num_classes: int, region_weight: float = 0.5,
            *, max_block_elems=None):
    """Pallas TPU implementation of ACLoss.forward for 4-D (NCHW) inputs."""
    assert 0.0 <= region_weight <= 1.0, 'region_weight must be between 0 and 1'
    # TODO(synk): the 5-D (NCDHW) volumetric branch of the reference module is
    # not implemented by this kernel.
    assert output.ndim == 4, 'only 2D (NCHW) data supported by this kernel'
    assert output.shape[2] == output.shape[3], 'All spatial dims must have the same size'

    N, C, H, W = output.shape
    compute_length = region_weight < 1.0
    compute_region = region_weight > 0.0

    cls_target = target.ndim == output.ndim - 1
    if compute_region and cls_target:
        assert num_classes == C, 'class-index targets require num_classes == C'
        assert target.shape == (N, H, W)
        # torch: one_hot(target).transpose(1, -1)  =>  effective dense target
        # T[n,c,i,j] = (target[n,j,i] == c).  Ship only the (spatially
        # transposed) class-index map; the one-hot compare happens in-kernel.
        tgt_arr = jnp.swapaxes(target, 1, 2).astype(
            jnp.int8 if num_classes <= 127 else jnp.int32)
    elif compute_region:
        assert target.shape == output.shape
        tgt_arr = target                 # dense / soft target, source dtype
    else:
        tgt_arr = None                   # region term statically skipped

    # -------- generation-aware tile sizing & physical-VMEM clamp --------
    vmem_budget = (_vmem_capacity_bytes() * 3) // 4   # ~48 MiB v7x, ~96 MiB v5e/v6e
    pred_b = output.dtype.itemsize
    if compute_region:
        tgt_b = tgt_arr.dtype.itemsize / C if cls_target else tgt_arr.dtype.itemsize
    else:
        tgt_b = 0.0
    # double-buffered pred + double-buffered target + ~10 block-sized f32
    # temporaries (rolls / diffs / masks / select results).
    bytes_per_elem = 2 * pred_b + 2 * tgt_b + 10 * 4
    target_elems = max(8 * 128, int(vmem_budget / bytes_per_elem))
    if max_block_elems is not None:
        target_elems = min(target_elems, int(max_block_elems))

    plane = C * H * W
    if plane <= target_elems:
        TH, BN = H, max(1, min(N, target_elems // plane))
    else:
        BN, TH = 1, H
        for cand in range(8, H, 8):      # largest 8-aligned divisor that fits
            if H % cand == 0 and C * cand * W <= target_elems:
                TH = cand
        # TODO(synk): if even (1, C, TH, W) cannot fit (huge W, or H without an
        # 8-aligned divisor), additionally tile W (needs a 2-column halo) or
        # fold spatial dims lane-dense for small W.
    h_tiled = TH < H
    n_h = H // TH
    grid_n = -(-N // BN)
    ragged = (N % BN) != 0

    # Normalizations and component weights are static -> folded into per-block
    # scales so each grid step emits a single pre-weighted partial.
    denom_len = max(1, N * C * max(0, H - 2) * max(0, W - 2))
    denom_reg = N * C * H * W
    length_scale = float((1.0 - region_weight) / denom_len)
    region_scale = float(region_weight / denom_reg)

    in_specs = [pl.BlockSpec((BN, C, TH, W), lambda i, h: (i, 0, h, 0))]
    inputs = [output]
    if compute_length and h_tiled:
        th8, last_blk = TH // 8, H // 8 - 1   # TH<H, TH%8==0, H%TH==0 => H%8==0
        in_specs.append(pl.BlockSpec(
            (BN, C, 8, W),
            lambda i, h: (i, 0, jnp.minimum((h + 1) * th8, last_blk), 0)))
        inputs.append(output)                 # 2-row halo view of the same array
    if compute_region:
        if cls_target:
            in_specs.append(pl.BlockSpec((BN, TH, W), lambda i, h: (i, h, 0)))
        else:
            in_specs.append(pl.BlockSpec((BN, C, TH, W), lambda i, h: (i, 0, h, 0)))
        inputs.append(tgt_arr)
    if ragged:
        slab_w = (jnp.arange(grid_n * BN) < N).astype(jnp.float32)
        inputs.append(slab_w.reshape(grid_n * BN, 1, 1, 1))
        in_specs.append(pl.BlockSpec((BN, 1, 1, 1), lambda i, h: (i, 0, 0, 0)))

    def _call(use_roll):
        kernel = _make_acloss_kernel(
            C=C, TH=TH, W=W, h_tiled=h_tiled, cls_target=cls_target,
            ragged=ragged, compute_length=compute_length,
            compute_region=compute_region, length_scale=length_scale,
            region_scale=region_scale, use_roll=use_roll)
        return pl.pallas_call(
            kernel,
            out_shape=jax.ShapeDtypeStruct((grid_n, n_h, 1, 1), jnp.float32),
            grid=(grid_n, n_h),
            in_specs=in_specs,
            out_specs=pl.BlockSpec((1, 1, 1, 1), lambda i, h: (i, h, 0, 0)),
            compiler_params=pltpu.CompilerParams(
                # Every step writes its own pre-weighted partial -> both grid
                # axes are independent (v7x megacore can split either).
                dimension_semantics=("parallel", "parallel"),
                vmem_limit_bytes=int(vmem_budget)),
        )(*inputs)

    try:
        partials = _call(use_roll=True)       # XLU roll + border mask (preferred)
    except Exception:
        # TODO(synk): drop the cropped-slice fallback once pltpu.roll lowering
        # for blocked 4-D operands is guaranteed on all deployed toolchains.
        partials = _call(use_roll=False)

    return jnp.sum(partials)                  # tiny final combine


def ac_loss_ref(output, target, num_classes: int, region_weight: float = 0.5):
    """Pure-JAX reference mirroring the PyTorch module (for verification)."""
    if target.ndim == output.ndim - 1:
        target = jax.nn.one_hot(target, num_classes, dtype=output.dtype)
        target = jnp.swapaxes(target, 1, -1)
    target = target.astype(output.dtype)

    dy = output[:, :, 1:, :] - output[:, :, :-1, :]
    dx = output[:, :, :, 1:] - output[:, :, :, :-1]
    dy = dy[:, :, 1:, :-2] ** 2
    dx = dx[:, :, :-2, 1:] ** 2
    delta_pred = jnp.abs(dy + dx)
    length = jnp.mean(jnp.sqrt(delta_pred + 1e-6))

    region_in = jnp.mean(output * (target - 1.0) ** 2)
    region_out = jnp.mean((1.0 - output) * target ** 2)
    region = region_in + region_out

    return (1.0 - region_weight) * length + region_weight * region


if __name__ == "__main__":
    num_classes = 2
    key = jax.random.PRNGKey(0)
    k1, k2, k3, k4, k5 = jax.random.split(key, 5)

    checks = []

    # Main case: class-index target, NCHW, lane-native spatial size.
    logits = jax.random.normal(k1, (2, num_classes, 128, 128), jnp.float32)
    output = jax.nn.softmax(logits, axis=1)
    target = jax.random.randint(k2, (2, 128, 128), 0, num_classes, jnp.int32)
    for rw in (0.5, 0.0, 1.0):            # also exercises the static term gating
        checks.append((ac_loss(output, target, num_classes, rw),
                       ac_loss_ref(output, target, num_classes, rw)))

    # Dense / soft target path (target already has the output's shape).
    dense_t = jax.nn.softmax(jax.random.normal(k3, output.shape), axis=1)
    checks.append((ac_loss(output, dense_t, num_classes, 0.5),
                   ac_loss_ref(output, dense_t, num_classes, 0.5)))

    # Ragged tail block along N (N=3 processed with BN=2 slabs per step).
    out3 = jax.nn.softmax(
        jax.random.normal(k4, (3, num_classes, 128, 128), jnp.float32), axis=1)
    tgt3 = jax.random.randint(k5, (3, 128, 128), 0, num_classes, jnp.int32)
    checks.append((ac_loss(out3, tgt3, num_classes, 0.5,
                           max_block_elems=2 * num_classes * 128 * 128),
                   ac_loss_ref(out3, tgt3, num_classes, 0.5)))

    # H-tiled (2-row halo) path, forced via a small block budget.
    out_b = jax.nn.softmax(
        jax.random.normal(k3, (1, num_classes, 256, 256), jnp.float32), axis=1)
    tgt_b = jax.random.randint(k4, (1, 256, 256), 0, num_classes, jnp.int32)
    checks.append((ac_loss(out_b, tgt_b, num_classes, 0.5, max_block_elems=40_000),
                   ac_loss_ref(out_b, tgt_b, num_classes, 0.5)))

    for got, want in checks:
        got = jax.block_until_ready(got)
        want = jax.block_until_ready(want)
        assert jnp.allclose(got, want, rtol=1e-4, atol=1e-6), (got, want)

    print("KERNEL_OK")
</pallas_src>

<mosaic_0001>
module attributes {stable_mosaic.version = 11 : i64} {
  func.func @kernel(%arg0: i32, %arg1: i32, %arg2: memref<2x2x128x128xf32, #tpu.memory_space<vmem>>, %arg3: memref<2x128x128xi8, #tpu.memory_space<vmem>>, %arg4: memref<1x1x1x1xf32, #tpu.memory_space<vmem>>) attributes {dimension_semantics = [#tpu.dimension_semantics<parallel>, #tpu.dimension_semantics<parallel>], iteration_bounds = array<i64: 1, 1>, scalar_prefetch = 0 : i64, scratch_operands = 0 : i64, tpu.core_type = #tpu.core_type<tc>, window_params = [{transform_indices = @transform_0, window_bounds = array<i64: 2, 2, 128, 128>}, {transform_indices = @transform_1, window_bounds = array<i64: 2, 128, 128>}, {transform_indices = @transform_2, window_bounds = array<i64: 1, 1, 1, 1>}]} {
    %c0 = arith.constant 0 : index
    %c0_0 = arith.constant 0 : index
    %c0_1 = arith.constant 0 : index
    %c0_2 = arith.constant 0 : index
    %0 = vector.load %arg2[%c0, %c0_0, %c0_1, %c0_2] : memref<2x2x128x128xf32, #tpu.memory_space<vmem>>, vector<2x2x128x128xf32>
    %cst = arith.constant 0.000000e+00 : f32
    %1 = vector.broadcast %cst : f32 to vector<1x1x1x1xf32>
    %c0_3 = arith.constant 0 : index
    %c0_4 = arith.constant 0 : index
    %c0_5 = arith.constant 0 : index
    %2 = vector.load %arg3[%c0_3, %c0_4, %c0_5] : memref<2x128x128xi8, #tpu.memory_space<vmem>>, vector<2x128x128xi8>
    %3 = arith.extsi %2 : vector<2x128x128xi8> to vector<2x128x128xi32>
    %4 = vector.shape_cast %3 : vector<2x128x128xi32> to vector<2x1x128x128xi32>
    %5 = vector.extract_strided_slice %0 {offsets = [0, 0, 0, 0], sizes = [2, 1, 128, 128], strides = [1, 1, 1, 1]} : vector<2x2x128x128xf32> to vector<2x1x128x128xf32>
    %c0_i32 = arith.constant 0 : i32
    %6 = vector.broadcast %c0_i32 : i32 to vector<2x1x128x128xi32>
    %7 = arith.cmpi eq, %4, %6 : vector<2x1x128x128xi32>
    %cst_6 = arith.constant 1.000000e+00 : f32
    %8 = vector.broadcast %cst_6 : f32 to vector<2x1x128x128xf32>
    %9 = arith.subf %8, %5 : vector<2x1x128x128xf32>
    %10 = arith.select %7, %9, %5 : vector<2x1x128x128xi1>, vector<2x1x128x128xf32>
    %11 = vector.extract_strided_slice %0 {offsets = [0, 1, 0, 0], sizes = [2, 1, 128, 128], strides = [1, 1, 1, 1]} : vector<2x2x128x128xf32> to vector<2x1x128x128xf32>
    %c1_i32 = arith.constant 1 : i32
    %12 = vector.broadcast %c1_i32 : i32 to vector<2x1x128x128xi32>
    %13 = arith.cmpi eq, %4, %12 : vector<2x1x128x128xi32>
    %cst_7 = arith.constant 1.000000e+00 : f32
    %14 = vector.broadcast %cst_7 : f32 to vector<2x1x128x128xf32>
    %15 = arith.subf %14, %11 : vector<2x1x128x128xf32>
    %16 = arith.select %13, %15, %11 : vector<2x1x128x128xi1>, vector<2x1x128x128xf32>
    %17 = arith.addf %10, %16 : vector<2x1x128x128xf32>
    %18 = vector.shape_cast %17 : vector<2x1x128x128xf32> to vector<1x2x1x128x128xf32>
    %cst_8 = arith.constant dense<0.000000e+00> : vector<1xf32>
    %19 = vector.multi_reduction <add>, %18, %cst_8 [1, 2, 3, 4] : vector<1x2x1x128x128xf32> to vector<1xf32>
    %20 = vector.shape_cast %19 : vector<1xf32> to vector<1x1x1x1x1xf32>
    %21 = vector.extract %20[0, 0, 0, 0, 0] : f32 from vector<1x1x1x1x1xf32>
    %22 = vector.broadcast %21 : f32 to vector<1x1x1x1xf32>
    %cst_9 = arith.constant 7.62939453E-6 : f32
    %23 = vector.broadcast %cst_9 : f32 to vector<1x1x1x1xf32>
    %24 = arith.mulf %23, %22 : vector<1x1x1x1xf32>
    %25 = arith.addf %1, %24 : vector<1x1x1x1xf32>
    %c127_i32 = arith.constant 127 : i32
    %26 = tpu.dynamic_rotate %0 by %c127_i32 dim 2 : vector<2x2x128x128xf32>, i32 -> vector<2x2x128x128xf32>
    %c126_i32 = arith.constant 126 : i32
    %27 = tpu.dynamic_rotate %0 by %c126_i32 dim 2 : vector<2x2x128x128xf32>, i32 -> vector<2x2x128x128xf32>
    %c127_i32_10 = arith.constant 127 : i32
    %28 = tpu.dynamic_rotate %0 by %c127_i32_10 dim 3 : vector<2x2x128x128xf32>, i32 -> vector<2x2x128x128xf32>
    %c126_i32_11 = arith.constant 126 : i32
    %29 = tpu.dynamic_rotate %0 by %c126_i32_11 dim 3 : vector<2x2x128x128xf32>, i32 -> vector<2x2x128x128xf32>
    %30 = arith.subf %27, %26 : vector<2x2x128x128xf32>
    %31 = arith.subf %29, %28 : vector<2x2x128x128xf32>
    %32 = arith.mulf %30, %30 : vector<2x2x128x128xf32>
    %33 = arith.mulf %31, %31 : vector<2x2x128x128xf32>
    %34 = arith.addf %32, %33 : vector<2x2x128x128xf32>
    %35 = tpu.iota {dimensions = array<i32: 2>} : vector<1x1x128x128xi32>
    %36 = tpu.iota {dimensions = array<i32: 3>} : vector<1x1x128x128xi32>
    %c125_i32 = arith.constant 125 : i32
    %37 = vector.broadcast %c125_i32 : i32 to vector<1x1x128x128xi32>
    %38 = arith.cmpi sle, %36, %37 : vector<1x1x128x128xi32>
    %c125_i32_12 = arith.constant 125 : i32
    %39 = vector.broadcast %c125_i32_12 : i32 to vector<1x1x128x128xi32>
    %40 = arith.cmpi sle, %35, %39 : vector<1x1x128x128xi32>
    %41 = arith.andi %40, %38 : vector<1x1x128x128xi1>
    %cst_13 = arith.constant 9.99999997E-7 : f32
    %42 = vector.broadcast %cst_13 : f32 to vector<2x2x128x128xf32>
    %43 = arith.addf %34, %42 : vector<2x2x128x128xf32>
    %44 = math.sqrt %43 : vector<2x2x128x128xf32>
    %cst_14 = arith.constant 0.000000e+00 : f32
    %45 = vector.shape_cast %41 : vector<1x1x128x128xi1> to vector<1x1x128x128xi1>
    %46 = vector.broadcast %45 : vector<1x1x128x128xi1> to vector<2x2x128x128xi1>
    %47 = vector.broadcast %cst_14 : f32 to vector<2x2x128x128xf32>
    %48 = arith.select %46, %44, %47 : vector<2x2x128x128xi1>, vector<2x2x128x128xf32>
    %49 = vector.shape_cast %48 : vector<2x2x128x128xf32> to vector<1x2x2x128x128xf32>
    %cst_15 = arith.constant dense<0.000000e+00> : vector<1xf32>
    %50 = vector.multi_reduction <add>, %49, %cst_15 [1, 2, 3, 4] : vector<1x2x2x128x128xf32> to vector<1xf32>
    %51 = vector.shape_cast %50 : vector<1xf32> to vector<1x1x1x1x1xf32>
    %52 = vector.extract %51[0, 0, 0, 0, 0] : f32 from vector<1x1x1x1x1xf32>
    %53 = vector.broadcast %52 : f32 to vector<1x1x1x1xf32>
    %cst_16 = arith.constant 7.873520e-06 : f32
    %54 = vector.broadcast %cst_16 : f32 to vector<1x1x1x1xf32>
    %55 = arith.mulf %54, %53 : vector<1x1x1x1xf32>
    %56 = arith.addf %25, %55 : vector<1x1x1x1xf32>
    %c0_17 = arith.constant 0 : index
    %c0_18 = arith.constant 0 : index
    %c0_19 = arith.constant 0 : index
    %c0_20 = arith.constant 0 : index
    %57 = vector.load %arg4[%c0_17, %c0_18, %c0_19, %c0_20] : memref<1x1x1x1xf32, #tpu.memory_space<vmem>>, vector<1x1x1x1xf32>
    tpu.vector_store %arg4[%c0_17, %c0_18, %c0_19, %c0_20], %56 {strides = array<i32>} : memref<1x1x1x1xf32, #tpu.memory_space<vmem>>, vector<1x1x1x1xf32>,
    return
  }
  func.func @transform_0(%arg0: i32, %arg1: i32) -> (i32, i32, i32, i32) {
    %c0_i32 = arith.constant 0 : i32
    %c0_i32_0 = arith.constant 0 : i32
    %c0_i32_1 = arith.constant 0 : i32
    return %arg0, %c0_i32, %arg1, %c0_i32_0 : i32, i32, i32, i32
  }
  func.func @transform_1(%arg0: i32, %arg1: i32) -> (i32, i32, i32) {
    %c0_i32 = arith.constant 0 : i32
    %c0_i32_0 = arith.constant 0 : i32
    return %arg0, %arg1, %c0_i32 : i32, i32, i32
  }
  func.func @transform_2(%arg0: i32, %arg1: i32) -> (i32, i32, i32, i32) {
    %c0_i32 = arith.constant 0 : i32
    %c0_i32_0 = arith.constant 0 : i32
    %c0_i32_1 = arith.constant 0 : i32
    return %arg0, %arg1, %c0_i32, %c0_i32_0 : i32, i32, i32, i32
  }
}

module attributes {stable_mosaic.version = 11 : i64} {
  func.func @kernel(%arg0: i32, %arg1: i32, %arg2: memref<2x2x128x128xf32, #tpu.memory_space<vmem>>, %arg3: memref<2x128x128xi8, #tpu.memory_space<vmem>>, %arg4: memref<1x1x1x1xf32, #tpu.memory_space<vmem>>) attributes {dimension_semantics = [#tpu.dimension_semantics<parallel>, #tpu.dimension_semantics<parallel>], iteration_bounds = array<i64: 1, 1>, scalar_prefetch = 0 : i64, scratch_operands = 0 : i64, tpu.core_type = #tpu.core_type<tc>, window_params = [{transform_indices = @transform_0, window_bounds = array<i64: 2, 2, 128, 128>}, {transform_indices = @transform_1, window_bounds = array<i64: 2, 128, 128>}, {transform_indices = @transform_2, window_bounds = array<i64: 1, 1, 1, 1>}]} {
    %c0 = arith.constant 0 : index
    %c0_0 = arith.constant 0 : index
    %c0_1 = arith.constant 0 : index
    %c0_2 = arith.constant 0 : index
    %0 = vector.load %arg2[%c0, %c0_0, %c0_1, %c0_2] : memref<2x2x128x128xf32, #tpu.memory_space<vmem>>, vector<2x2x128x128xf32>
    %cst = arith.constant 0.000000e+00 : f32
    %1 = vector.broadcast %cst : f32 to vector<1x1x1x1xf32>
    %c0_3 = arith.constant 0 : index
    %c0_4 = arith.constant 0 : index
    %c0_5 = arith.constant 0 : index
    %2 = vector.load %arg3[%c0_3, %c0_4, %c0_5] : memref<2x128x128xi8, #tpu.memory_space<vmem>>, vector<2x128x128xi8>
    %3 = arith.extsi %2 : vector<2x128x128xi8> to vector<2x128x128xi32>
    %4 = vector.shape_cast %3 : vector<2x128x128xi32> to vector<2x1x128x128xi32>
    %5 = vector.extract_strided_slice %0 {offsets = [0, 0, 0, 0], sizes = [2, 1, 128, 128], strides = [1, 1, 1, 1]} : vector<2x2x128x128xf32> to vector<2x1x128x128xf32>
    %c0_i32 = arith.constant 0 : i32
    %6 = vector.broadcast %c0_i32 : i32 to vector<2x1x128x128xi32>
    %7 = arith.cmpi eq, %4, %6 : vector<2x1x128x128xi32>
    %cst_6 = arith.constant 1.000000e+00 : f32
    %8 = vector.broadcast %cst_6 : f32 to vector<2x1x128x128xf32>
    %9 = arith.subf %8, %5 : vector<2x1x128x128xf32>
    %10 = arith.select %7, %9, %5 : vector<2x1x128x128xi1>, vector<2x1x128x128xf32>
    %11 = vector.extract_strided_slice %0 {offsets = [0, 1, 0, 0], sizes = [2, 1, 128, 128], strides = [1, 1, 1, 1]} : vector<2x2x128x128xf32> to vector<2x1x128x128xf32>
    %c1_i32 = arith.constant 1 : i32
    %12 = vector.broadcast %c1_i32 : i32 to vector<2x1x128x128xi32>
    %13 = arith.cmpi eq, %4, %12 : vector<2x1x128x128xi32>
    %cst_7 = arith.constant 1.000000e+00 : f32
    %14 = vector.broadcast %cst_7 : f32 to vector<2x1x128x128xf32>
    %15 = arith.subf %14, %11 : vector<2x1x128x128xf32>
    %16 = arith.select %13, %15, %11 : vector<2x1x128x128xi1>, vector<2x1x128x128xf32>
    %17 = arith.addf %10, %16 : vector<2x1x128x128xf32>
    %18 = vector.shape_cast %17 : vector<2x1x128x128xf32> to vector<1x2x1x128x128xf32>
    %cst_8 = arith.constant dense<0.000000e+00> : vector<1xf32>
    %19 = vector.multi_reduction <add>, %18, %cst_8 [1, 2, 3, 4] : vector<1x2x1x128x128xf32> to vector<1xf32>
    %20 = vector.shape_cast %19 : vector<1xf32> to vector<1x1x1x1x1xf32>
    %21 = vector.extract %20[0, 0, 0, 0, 0] : f32 from vector<1x1x1x1x1xf32>
    %22 = vector.broadcast %21 : f32 to vector<1x1x1x1xf32>
    %cst_9 = arith.constant 7.62939453E-6 : f32
    %23 = vector.broadcast %cst_9 : f32 to vector<1x1x1x1xf32>
    %24 = arith.mulf %23, %22 : vector<1x1x1x1xf32>
    %25 = arith.addf %1, %24 : vector<1x1x1x1xf32>
    %26 = vector.extract_strided_slice %0 {offsets = [0, 0, 2, 0], sizes = [2, 2, 126, 126], strides = [1, 1, 1, 1]} : vector<2x2x128x128xf32> to vector<2x2x126x126xf32>
    %27 = vector.extract_strided_slice %0 {offsets = [0, 0, 1, 0], sizes = [2, 2, 126, 126], strides = [1, 1, 1, 1]} : vector<2x2x128x128xf32> to vector<2x2x126x126xf32>
    %28 = arith.subf %26, %27 : vector<2x2x126x126xf32>
    %29 = vector.extract_strided_slice %0 {offsets = [0, 0, 0, 2], sizes = [2, 2, 126, 126], strides = [1, 1, 1, 1]} : vector<2x2x128x128xf32> to vector<2x2x126x126xf32>
    %30 = vector.extract_strided_slice %0 {offsets = [0, 0, 0, 1], sizes = [2, 2, 126, 126], strides = [1, 1, 1, 1]} : vector<2x2x128x128xf32> to vector<2x2x126x126xf32>
    %31 = arith.subf %29, %30 : vector<2x2x126x126xf32>
    %32 = arith.mulf %28, %28 : vector<2x2x126x126xf32>
    %33 = arith.mulf %31, %31 : vector<2x2x126x126xf32>
    %34 = arith.addf %32, %33 : vector<2x2x126x126xf32>
    %cst_10 = arith.constant 9.99999997E-7 : f32
    %35 = vector.broadcast %cst_10 : f32 to vector<2x2x126x126xf32>
    %36 = arith.addf %34, %35 : vector<2x2x126x126xf32>
    %37 = math.sqrt %36 : vector<2x2x126x126xf32>
    %38 = vector.shape_cast %37 : vector<2x2x126x126xf32> to vector<1x2x2x126x126xf32>
    %cst_11 = arith.constant dense<0.000000e+00> : vector<1xf32>
    %39 = vector.multi_reduction <add>, %38, %cst_11 [1, 2, 3, 4] : vector<1x2x2x126x126xf32> to vector<1xf32>
    %40 = vector.shape_cast %39 : vector<1xf32> to vector<1x1x1x1x1xf32>
    %41 = vector.extract %40[0, 0, 0, 0, 0] : f32 from vector<1x1x1x1x1xf32>
    %42 = vector.broadcast %41 : f32 to vector<1x1x1x1xf32>
    %cst_12 = arith.constant 7.873520e-06 : f32
    %43 = vector.broadcast %cst_12 : f32 to vector<1x1x1x1xf32>
    %44 = arith.mulf %43, %42 : vector<1x1x1x1xf32>
    %45 = arith.addf %25, %44 : vector<1x1x1x1xf32>
    %c0_13 = arith.constant 0 : index
    %c0_14 = arith.constant 0 : index
    %c0_15 = arith.constant 0 : index
    %c0_16 = arith.constant 0 : index
    %46 = vector.load %arg4[%c0_13, %c0_14, %c0_15, %c0_16] : memref<1x1x1x1xf32, #tpu.memory_space<vmem>>, vector<1x1x1x1xf32>
    tpu.vector_store %arg4[%c0_13, %c0_14, %c0_15, %c0_16], %45 {strides = array<i32>} : memref<1x1x1x1xf32, #tpu.memory_space<vmem>>, vector<1x1x1x1xf32>,
    return
  }
  func.func @transform_0(%arg0: i32, %arg1: i32) -> (i32, i32, i32, i32) {
    %c0_i32 = arith.constant 0 : i32
    %c0_i32_0 = arith.constant 0 : i32
    %c0_i32_1 = arith.constant 0 : i32
    return %arg0, %c0_i32, %arg1, %c0_i32_0 : i32, i32, i32, i32
  }
  func.func @transform_1(%arg0: i32, %arg1: i32) -> (i32, i32, i32) {
    %c0_i32 = arith.constant 0 : i32
    %c0_i32_0 = arith.constant 0 : i32
    return %arg0, %arg1, %c0_i32 : i32, i32, i32
  }
  func.func @transform_2(%arg0: i32, %arg1: i32) -> (i32, i32, i32, i32) {
    %c0_i32 = arith.constant 0 : i32
    %c0_i32_0 = arith.constant 0 : i32
    %c0_i32_1 = arith.constant 0 : i32
    return %arg0, %arg1, %c0_i32, %c0_i32_0 : i32, i32, i32, i32
  }
}

</mosaic_0001>

<llo_original>
// kernel: tpu_custom_call.1
$region0: #{tpu_custom_call.1}
  #allocation0 [shape = 'u32[]', space=smem, size = 0x4, offset = 0x4, fixed_abs, tag = 'smem constant byte address 0x4 - core index']
  #allocation1 [shape = 'u32[72,128]{1,0:T(1,128)}', space=vmem, size = 0x9000, scoped, tag = 'internal scratch']
  %s0 = inlined_call_operand.hbm [shape: f32[2,2,128,128], index: 0, kind: input, shape index: {}]
  %s1 = inlined_call_operand.hbm [shape: s8[2,128,128], index: 1, kind: input, shape index: {}]
  %s2 = inlined_call_operand.hbm [shape: f32[1,1,1,1], index: 2, kind: output, shape index: {}]
  %s3 = sld [smem:[#allocation0]]
  $region26: #{tpu_custom_call.1} parent=0
    _
  %s5 = ssub.s32 1, %s3
  %s6 = scalar_select 0, %s5, %s3
  $region1: #{tpu_custom_call.1} parent=0
    #allocation2 [shape = 'u8[262144]{0}', space=vmem, size = 0x40000, scoped, tag = 'input window, operand 0, single buffered']
    #allocation3 [shape = 's32[1]{0}', space=sflag, size = 0x4, scoped, tag = 'scoped memory for tpu_custom_call.1']
    #allocation4 [shape = 's32[1]{0}', space=sflag, size = 0x4, scoped, tag = 'scoped memory for tpu_custom_call.1']
    #allocation5 [shape = 'u8[32768]{0}', space=vmem, size = 0x8000, scoped, tag = 'input window, operand 1, single buffered']
    #allocation6 [shape = 's32[1]{0}', space=sflag, size = 0x4, scoped, tag = 'scoped memory for tpu_custom_call.1']
    #allocation7 [shape = 'u8[512]{0}', space=vmem, size = 0x400, scoped, tag = 'output window, operand 0, single buffered']
    %7 = vsyncpa [#allocation3], 0
    %8 = vsyncpa [#allocation6], 0
    %9 = vsyncpa [#allocation4], 0
    // Predicated region
    $region2: #{tpu_custom_call.1} parent=1 // pred_check
      _
    $region3: #{tpu_custom_call.1} parent=1 // pred_check_branch
      %11 = sbr.rel (0) target = $region5
    $region4: #{tpu_custom_call.1} parent=1 // pred_region
      %13 = vsyncadd [#allocation3], 0
      %s14 = sshll.u32 %s0, 4
      %s15 = int_to_ptr.hbm [resolvable:$true] %s14
      %s16 = sshll.u32 [#allocation2], 4
      %s17 = int_to_ptr.vmem [resolvable:$true] %s16
      %22 = dma.hbm_to_vmem [thread:$0]  %s15, 8192, %s17, [#allocation3], 128, 128, 8
    $region5: #{tpu_custom_call.1} parent=1 // pred_fallthru
      _
    // Predicated region
    $region6: #{tpu_custom_call.1} parent=1 // pred_check
      _
    $region7: #{tpu_custom_call.1} parent=1 // pred_check_branch
      %24 = sbr.rel (0) target = $region9
    $region8: #{tpu_custom_call.1} parent=1 // pred_region
      %26 = vsyncadd [#allocation6], 0
      %s27 = sshll.u32 %s1, 4
      %s28 = int_to_ptr.hbm [resolvable:$true] %s27
      %s29 = sshll.u32 [#allocation5], 4
      %s30 = int_to_ptr.vmem [resolvable:$true] %s29
      %35 = dma.hbm_to_vmem [thread:$0]  %s28, 1024, %s30, [#allocation6], 128, 128, 8
    $region9: #{tpu_custom_call.1} parent=1 // pred_fallthru
      _
    // Predicated region
    $region10: #{tpu_custom_call.1} parent=1 // pred_check
      _
    $region11: #{tpu_custom_call.1} parent=1 // pred_check_branch
      %37 = sbr.rel (0) target = $region13
    $region12: #{tpu_custom_call.1} parent=1 // pred_region
      %39 = dma.done [#allocation3], 8192
    $region13: #{tpu_custom_call.1} parent=1 // pred_fallthru
      _
    // Predicated region
    $region14: #{tpu_custom_call.1} parent=1 // pred_check
      _
    $region15: #{tpu_custom_call.1} parent=1 // pred_check_branch
      %41 = sbr.rel (0) target = $region17
    $region16: #{tpu_custom_call.1} parent=1 // pred_region
      %43 = dma.done [#allocation6], 1024
    $region17: #{tpu_custom_call.1} parent=1 // pred_fallthru
      _
    %v44 = vld [vmem:[#allocation2] sm:$0xff]
    %v45 = vld [vmem:[#allocation2 + $0x8] sm:$0xff]
    %v46 = vld [vmem:[#allocation2 + $0x10] sm:$0xff]
    %v47 = vld [vmem:[#allocation2 + $0x18] sm:$0xff]
    %v48 = vld [vmem:[#allocation2 + $0x20] sm:$0xff]
    %v49 = vld [vmem:[#allocation2 + $0x28] sm:$0xff]
    %v50 = vld [vmem:[#allocation2 + $0x30] sm:$0xff]
    %v51 = vld [vmem:[#allocation2 + $0x38] sm:$0xff]
    %v52 = vld [vmem:[#allocation2 + $0x40] sm:$0xff]
    %v53 = vld [vmem:[#allocation2 + $0x48] sm:$0xff]
    %v54 = vld [vmem:[#allocation2 + $0x50] sm:$0xff]
    %v55 = vld [vmem:[#allocation2 + $0x58] sm:$0xff]
    %v56 = vld [vmem:[#allocation2 + $0x60] sm:$0xff]
    %v57 = vld [vmem:[#allocation2 + $0x68] sm:$0xff]
    %v58 = vld [vmem:[#allocation2 + $0x70] sm:$0xff]
    %v59 = vld [vmem:[#allocation2 + $0x78] sm:$0xff]
    %v60 = vld [vmem:[#allocation2 + $0x80] sm:$0xff]
    %v61 = vld [vmem:[#allocation2 + $0x88] sm:$0xff]
    %v62 = vld [vmem:[#allocation2 + $0x90] sm:$0xff]
    %v63 = vld [vmem:[#allocation2 + $0x98] sm:$0xff]
    %v64 = vld [vmem:[#allocation2 + $0xa0] sm:$0xff]
    %v65 = vld [vmem:[#allocation2 + $0xa8] sm:$0xff]
    %v66 = vld [vmem:[#allocation2 + $0xb0] sm:$0xff]
    %v67 = vld [vmem:[#allocation2 + $0xb8] sm:$0xff]
    %v68 = vld [vmem:[#allocation2 + $0xc0] sm:$0xff]
    %v69 = vld [vmem:[#allocation2 + $0xc8] sm:$0xff]
    %v70 = vld [vmem:[#allocation2 + $0xd0] sm:$0xff]
    %v71 = vld [vmem:[#allocation2 + $0xd8] sm:$0xff]
    %v72 = vld [vmem:[#allocation2 + $0xe0] sm:$0xff]
    %v73 = vld [vmem:[#allocation2 + $0xe8] sm:$0xff]
    %v74 = vld [vmem:[#allocation2 + $0xf0] sm:$0xff]
    %v75 = vld [vmem:[#allocation2 + $0xf8] sm:$0xff]
    %v76 = vld [vmem:[#allocation2 + $0x100] sm:$0xff]
    %v77 = vld [vmem:[#allocation2 + $0x108] sm:$0xff]
    %v78 = vld [vmem:[#allocation2 + $0x110] sm:$0xff]
    %v79 = vld [vmem:[#allocation2 + $0x118] sm:$0xff]
    %v80 = vld [vmem:[#allocation2 + $0x120] sm:$0xff]
    %v81 = vld [vmem:[#allocation2 + $0x128] sm:$0xff]
    %v82 = vld [vmem:[#allocation2 + $0x130] sm:$0xff]
    %v83 = vld [vmem:[#allocation2 + $0x138] sm:$0xff]
    %v84 = vld [vmem:[#allocation2 + $0x140] sm:$0xff]
    %v85 = vld [vmem:[#allocation2 + $0x148] sm:$0xff]
    %v86 = vld [vmem:[#allocation2 + $0x150] sm:$0xff]
    %v87 = vld [vmem:[#allocation2 + $0x158] sm:$0xff]
    %v88 = vld [vmem:[#allocation2 + $0x160] sm:$0xff]
    %v89 = vld [vmem:[#allocation2 + $0x168] sm:$0xff]
    %v90 = vld [vmem:[#allocation2 + $0x170] sm:$0xff]
    %v91 = vld [vmem:[#allocation2 + $0x178] sm:$0xff]
    %v92 = vld [vmem:[#allocation2 + $0x180] sm:$0xff]
    %v93 = vld [vmem:[#allocation2 + $0x188] sm:$0xff]
    %v94 = vld [vmem:[#allocation2 + $0x190] sm:$0xff]
    %v95 = vld [vmem:[#allocation2 + $0x198] sm:$0xff]
    %v96 = vld [vmem:[#allocation2 + $0x1a0] sm:$0xff]
    %v97 = vld [vmem:[#allocation2 + $0x1a8] sm:$0xff]
    %v98 = vld [vmem:[#allocation2 + $0x1b0] sm:$0xff]
    %v99 = vld [vmem:[#allocation2 + $0x1b8] sm:$0xff]
    %v100 = vld [vmem:[#allocation2 + $0x1c0] sm:$0xff]
    %v101 = vld [vmem:[#allocation2 + $0x1c8] sm:$0xff]
    %v102 = vld [vmem:[#allocation2 + $0x1d0] sm:$0xff]
    %v103 = vld [vmem:[#allocation2 + $0x1d8] sm:$0xff]
    %v104 = vld [vmem:[#allocation2 + $0x1e0] sm:$0xff]
    %v105 = vld [vmem:[#allocation2 + $0x1e8] sm:$0xff]
    %v106 = vld [vmem:[#allocation2 + $0x1f0] sm:$0xff]
    %v107 = vld [vmem:[#allocation2 + $0x1f8] sm:$0xff]
    %v108 = vld [vmem:[#allocation5] sm:$0xff]
    %v109 = vld [vmem:[#allocation5 + $0x8] sm:$0xff]
    %v110 = vld [vmem:[#allocation5 + $0x10] sm:$0xff]
    %v111 = vld [vmem:[#allocation5 + $0x18] sm:$0xff]
    %v112 = vld [vmem:[#allocation5 + $0x20] sm:$0xff]
    %v113 = vld [vmem:[#allocation5 + $0x28] sm:$0xff]
    %v114 = vld [vmem:[#allocation5 + $0x30] sm:$0xff]
    %v115 = vld [vmem:[#allocation5 + $0x38] sm:$0xff]
    %v116 = vunpack.c.0.s8 %v108
    %v117 = vunpack.c.1.s8 %v108
    %v118 = vunpack.c.2.s8 %v108
    %v119 = vunpack.c.3.s8 %v108
    %v120 = vunpack.c.0.s8 %v109
    %v121 = vunpack.c.1.s8 %v109
    %v122 = vunpack.c.2.s8 %v109
    %v123 = vunpack.c.3.s8 %v109
    %v124 = vunpack.c.0.s8 %v110
    %v125 = vunpack.c.1.s8 %v110
    %v126 = vunpack.c.2.s8 %v110
    %v127 = vunpack.c.3.s8 %v110
    %v128 = vunpack.c.0.s8 %v111
    %v129 = vunpack.c.1.s8 %v111
    %v130 = vunpack.c.2.s8 %v111
    %v131 = vunpack.c.3.s8 %v111
    %v132 = vunpack.c.0.s8 %v112
    %v133 = vunpack.c.1.s8 %v112
    %v134 = vunpack.c.2.s8 %v112
    %v135 = vunpack.c.3.s8 %v112
    %v136 = vunpack.c.0.s8 %v113
    %v137 = vunpack.c.1.s8 %v113
    %v138 = vunpack.c.2.s8 %v113
    %v139 = vunpack.c.3.s8 %v113
    %v140 = vunpack.c.0.s8 %v114
    %v141 = vunpack.c.1.s8 %v114
    %v142 = vunpack.c.2.s8 %v114
    %v143 = vunpack.c.3.s8 %v114
    %v144 = vunpack.c.0.s8 %v115
    %v145 = vunpack.c.1.s8 %v115
    %v146 = vunpack.c.2.s8 %v115
    %v147 = vunpack.c.3.s8 %v115
    %vm148 = vcmp.eq.s32.totalorder %v116, 0
    %vm149 = vcmp.eq.s32.totalorder %v117, 0
    %vm150 = vcmp.eq.s32.totalorder %v118, 0
    %vm151 = vcmp.eq.s32.totalorder %v119, 0
    %vm152 = vcmp.eq.s32.totalorder %v120, 0
    %vm153 = vcmp.eq.s32.totalorder %v121, 0
    %vm154 = vcmp.eq.s32.totalorder %v122, 0
    %vm155 = vcmp.eq.s32.totalorder %v123, 0
    %vm156 = vcmp.eq.s32.totalorder %v124, 0
    %vm157 = vcmp.eq.s32.totalorder %v125, 0
    %vm158 = vcmp.eq.s32.totalorder %v126, 0
    %vm159 = vcmp.eq.s32.totalorder %v127, 0
    %vm160 = vcmp.eq.s32.totalorder %v128, 0
    %vm161 = vcmp.eq.s32.totalorder %v129, 0
    %vm162 = vcmp.eq.s32.totalorder %v130, 0
    %vm163 = vcmp.eq.s32.totalorder %v131, 0
    %vm164 = vcmp.eq.s32.totalorder %v132, 0
    %vm165 = vcmp.eq.s32.totalorder %v133, 0
    %vm166 = vcmp.eq.s32.totalorder %v134, 0
    %vm167 = vcmp.eq.s32.totalorder %v135, 0
    %vm168 = vcmp.eq.s32.totalorder %v136, 0
    %vm169 = vcmp.eq.s32.totalorder %v137, 0
    %vm170 = vcmp.eq.s32.totalorder %v138, 0
    %vm171 = vcmp.eq.s32.totalorder %v139, 0
    %vm172 = vcmp.eq.s32.totalorder %v140, 0
    %vm173 = vcmp.eq.s32.totalorder %v141, 0
    %vm174 = vcmp.eq.s32.totalorder %v142, 0
    %vm175 = vcmp.eq.s32.totalorder %v143, 0
    %vm176 = vcmp.eq.s32.totalorder %v144, 0
    %vm177 = vcmp.eq.s32.totalorder %v145, 0
    %vm178 = vcmp.eq.s32.totalorder %v146, 0
    %vm179 = vcmp.eq.s32.totalorder %v147, 0
    %v180 = vsub.f32 1.0, %v44
    %v181 = vsub.f32 1.0, %v45
    %v182 = vsub.f32 1.0, %v46
    %v183 = vsub.f32 1.0, %v47
    %v184 = vsub.f32 1.0, %v48
    %v185 = vsub.f32 1.0, %v49
    %v186 = vsub.f32 1.0, %v50
    %v187 = vsub.f32 1.0, %v51
    %v188 = vsub.f32 1.0, %v52
    %v189 = vsub.f32 1.0, %v53
    %v190 = vsub.f32 1.0, %v54
    %v191 = vsub.f32 1.0, %v55
    %v192 = vsub.f32 1.0, %v56
    %v193 = vsub.f32 1.0, %v57
    %v194 = vsub.f32 1.0, %v58
    %v195 = vsub.f32 1.0, %v59
    %v196 = vsub.f32 1.0, %v76
    %v197 = vsub.f32 1.0, %v77
    %v198 = vsub.f32 1.0, %v78
    %v199 = vsub.f32 1.0, %v79
    %v200 = vsub.f32 1.0, %v80
    %v201 = vsub.f32 1.0, %v81
    %v202 = vsub.f32 1.0, %v82
    %v203 = vsub.f32 1.0, %v83
    %v204 = vsub.f32 1.0, %v84
    %v205 = vsub.f32 1.0, %v85
    %v206 = vsub.f32 1.0, %v86
    %v207 = vsub.f32 1.0, %v87
    %v208 = vsub.f32 1.0, %v88
    %v209 = vsub.f32 1.0, %v89
    %v210 = vsub.f32 1.0, %v90
    %v211 = vsub.f32 1.0, %v91
    %v212 = vsel %vm148, %v180, %v44
    %v213 = vsel %vm149, %v181, %v45
    %v214 = vsel %vm150, %v182, %v46
    %v215 = vsel %vm151, %v183, %v47
    %v216 = vsel %vm152, %v184, %v48
    %v217 = vsel %vm153, %v185, %v49
    %v218 = vsel %vm154, %v186, %v50
    %v219 = vsel %vm155, %v187, %v51
    %v220 = vsel %vm156, %v188, %v52
    %v221 = vsel %vm157, %v189, %v53
    %v222 = vsel %vm158, %v190, %v54
    %v223 = vsel %vm159, %v191, %v55
    %v224 = vsel %vm160, %v192, %v56
    %v225 = vsel %vm161, %v193, %v57
    %v226 = vsel %vm162, %v194, %v58
    %v227 = vsel %vm163, %v195, %v59
    %v228 = vsel %vm164, %v196, %v76
    %v229 = vsel %vm165, %v197, %v77
    %v230 = vsel %vm166, %v198, %v78
    %v231 = vsel %vm167, %v199, %v79
    %v232 = vsel %vm168, %v200, %v80
    %v233 = vsel %vm169, %v201, %v81
    %v234 = vsel %vm170, %v202, %v82
    %v235 = vsel %vm171, %v203, %v83
    %v236 = vsel %vm172, %v204, %v84
    %v237 = vsel %vm173, %v205, %v85
    %v238 = vsel %vm174, %v206, %v86
    %v239 = vsel %vm175, %v207, %v87
    %v240 = vsel %vm176, %v208, %v88
    %v241 = vsel %vm177, %v209, %v89
    %v242 = vsel %vm178, %v210, %v90
    %v243 = vsel %vm179, %v211, %v91
    %vm244 = vcmp.eq.s32.totalorder %v116, 1
    %vm245 = vcmp.eq.s32.totalorder %v117, 1
    %vm246 = vcmp.eq.s32.totalorder %v118, 1
    %vm247 = vcmp.eq.s32.totalorder %v119, 1
    %vm248 = vcmp.eq.s32.totalorder %v120, 1
    %vm249 = vcmp.eq.s32.totalorder %v121, 1
    %vm250 = vcmp.eq.s32.totalorder %v122, 1
    %vm251 = vcmp.eq.s32.totalorder %v123, 1
    %vm252 = vcmp.eq.s32.totalorder %v124, 1
    %vm253 = vcmp.eq.s32.totalorder %v125, 1
    %vm254 = vcmp.eq.s32.totalorder %v126, 1
    %vm255 = vcmp.eq.s32.totalorder %v127, 1
    %vm256 = vcmp.eq.s32.totalorder %v128, 1
    %vm257 = vcmp.eq.s32.totalorder %v129, 1
    %vm258 = vcmp.eq.s32.totalorder %v130, 1
    %vm259 = vcmp.eq.s32.totalorder %v131, 1
    %vm260 = vcmp.eq.s32.totalorder %v132, 1
    %vm261 = vcmp.eq.s32.totalorder %v133, 1
    %vm262 = vcmp.eq.s32.totalorder %v134, 1
    %vm263 = vcmp.eq.s32.totalorder %v135, 1
    %vm264 = vcmp.eq.s32.totalorder %v136, 1
    %vm265 = vcmp.eq.s32.totalorder %v137, 1
    %vm266 = vcmp.eq.s32.totalorder %v138, 1
    %vm267 = vcmp.eq.s32.totalorder %v139, 1
    %vm268 = vcmp.eq.s32.totalorder %v140, 1
    %vm269 = vcmp.eq.s32.totalorder %v141, 1
    %vm270 = vcmp.eq.s32.totalorder %v142, 1
    %vm271 = vcmp.eq.s32.totalorder %v143, 1
    %vm272 = vcmp.eq.s32.totalorder %v144, 1
    %vm273 = vcmp.eq.s32.totalorder %v145, 1
    %vm274 = vcmp.eq.s32.totalorder %v146, 1
    %vm275 = vcmp.eq.s32.totalorder %v147, 1
    %v276 = vsub.f32 1.0, %v60
    %v277 = vsub.f32 1.0, %v61
    %v278 = vsub.f32 1.0, %v62
    %v279 = vsub.f32 1.0, %v63
    %v280 = vsub.f32 1.0, %v64
    %v281 = vsub.f32 1.0, %v65
    %v282 = vsub.f32 1.0, %v66
    %v283 = vsub.f32 1.0, %v67
    %v284 = vsub.f32 1.0, %v68
    %v285 = vsub.f32 1.0, %v69
    %v286 = vsub.f32 1.0, %v70
    %v287 = vsub.f32 1.0, %v71
    %v288 = vsub.f32 1.0, %v72
    %v289 = vsub.f32 1.0, %v73
    %v290 = vsub.f32 1.0, %v74
    %v291 = vsub.f32 1.0, %v75
    %v292 = vsub.f32 1.0, %v92
    %v293 = vsub.f32 1.0, %v93
    %v294 = vsub.f32 1.0, %v94
    %v295 = vsub.f32 1.0, %v95
    %v296 = vsub.f32 1.0, %v96
    %v297 = vsub.f32 1.0, %v97
    %v298 = vsub.f32 1.0, %v98
    %v299 = vsub.f32 1.0, %v99
    %v300 = vsub.f32 1.0, %v100
    %v301 = vsub.f32 1.0, %v101
    %v302 = vsub.f32 1.0, %v102
    %v303 = vsub.f32 1.0, %v103
    %v304 = vsub.f32 1.0, %v104
    %v305 = vsub.f32 1.0, %v105
    %v306 = vsub.f32 1.0, %v106
    %v307 = vsub.f32 1.0, %v107
    %v308 = vsel %vm244, %v276, %v60
    %v309 = vsel %vm245, %v277, %v61
    %v310 = vsel %vm246, %v278, %v62
    %v311 = vsel %vm247, %v279, %v63
    %v312 = vsel %vm248, %v280, %v64
    %v313 = vsel %vm249, %v281, %v65
    %v314 = vsel %vm250, %v282, %v66
    %v315 = vsel %vm251, %v283, %v67
    %v316 = vsel %vm252, %v284, %v68
    %v317 = vsel %vm253, %v285, %v69
    %v318 = vsel %vm254, %v286, %v70
    %v319 = vsel %vm255, %v287, %v71
    %v320 = vsel %vm256, %v288, %v72
    %v321 = vsel %vm257, %v289, %v73
    %v322 = vsel %vm258, %v290, %v74
    %v323 = vsel %vm259, %v291, %v75
    %v324 = vsel %vm260, %v292, %v92
    %v325 = vsel %vm261, %v293, %v93
    %v326 = vsel %vm262, %v294, %v94
    %v327 = vsel %vm263, %v295, %v95
    %v328 = vsel %vm264, %v296, %v96
    %v329 = vsel %vm265, %v297, %v97
    %v330 = vsel %vm266, %v298, %v98
    %v331 = vsel %vm267, %v299, %v99
    %v332 = vsel %vm268, %v300, %v100
    %v333 = vsel %vm269, %v301, %v101
    %v334 = vsel %vm270, %v302, %v102
    %v335 = vsel %vm271, %v303, %v103
    %v336 = vsel %vm272, %v304, %v104
    %v337 = vsel %vm273, %v305, %v105
    %v338 = vsel %vm274, %v306, %v106
    %v339 = vsel %vm275, %v307, %v107
    %v340 = vadd.f32 %v212, %v308
    %v341 = vadd.f32 %v213, %v309
    %v342 = vadd.f32 %v214, %v310
    %v343 = vadd.f32 %v215, %v311
    %v344 = vadd.f32 %v216, %v312
    %v345 = vadd.f32 %v217, %v313
    %v346 = vadd.f32 %v218, %v314
    %v347 = vadd.f32 %v219, %v315
    %v348 = vadd.f32 %v220, %v316
    %v349 = vadd.f32 %v221, %v317
    %v350 = vadd.f32 %v222, %v318
    %v351 = vadd.f32 %v223, %v319
    %v352 = vadd.f32 %v224, %v320
    %v353 = vadd.f32 %v225, %v321
    %v354 = vadd.f32 %v226, %v322
    %v355 = vadd.f32 %v227, %v323
    %v356 = vadd.f32 %v228, %v324
    %v357 = vadd.f32 %v229, %v325
    %v358 = vadd.f32 %v230, %v326
    %v359 = vadd.f32 %v231, %v327
    %v360 = vadd.f32 %v232, %v328
    %v361 = vadd.f32 %v233, %v329
    %v362 = vadd.f32 %v234, %v330
    %v363 = vadd.f32 %v235, %v331
    %v364 = vadd.f32 %v236, %v332
    %v365 = vadd.f32 %v237, %v333
    %v366 = vadd.f32 %v238, %v334
    %v367 = vadd.f32 %v239, %v335
    %v368 = vadd.f32 %v240, %v336
    %v369 = vadd.f32 %v241, %v337
    %v370 = vadd.f32 %v242, %v338
    %v371 = vadd.f32 %v243, %v339
    %v372 = vadd.f32 %v340, %v341
    %v373 = vadd.f32 %v372, %v342
    %v374 = vadd.f32 %v373, %v343
    %v375 = vadd.f32 %v374, %v344
    %v376 = vadd.f32 %v375, %v345
    %v377 = vadd.f32 %v376, %v346
    %v378 = vadd.f32 %v377, %v347
    %v379 = vadd.f32 %v378, %v348
    %v380 = vadd.f32 %v379, %v349
    %v381 = vadd.f32 %v380, %v350
    %v382 = vadd.f32 %v381, %v351
    %v383 = vadd.f32 %v382, %v352
    %v384 = vadd.f32 %v383, %v353
    %v385 = vadd.f32 %v384, %v354
    %v386 = vadd.f32 %v385, %v355
    %v387 = vadd.f32 %v386, %v356
    %v388 = vadd.f32 %v387, %v357
    %v389 = vadd.f32 %v388, %v358
    %v390 = vadd.f32 %v389, %v359
    %v391 = vadd.f32 %v390, %v360
    %v392 = vadd.f32 %v391, %v361
    %v393 = vadd.f32 %v392, %v362
    %v394 = vadd.f32 %v393, %v363
    %v395 = vadd.f32 %v394, %v364
    %v396 = vadd.f32 %v395, %v365
    %v397 = vadd.f32 %v396, %v366
    %v398 = vadd.f32 %v397, %v367
    %v399 = vadd.f32 %v398, %v368
    %v400 = vadd.f32 %v399, %v369
    %v401 = vadd.f32 %v400, %v370
    %v402 = vadd.f32 %v401, %v371
    %403 = vadd.xlane.f32.xlu0 %v402
    %v404 = vpop.xlane.xlu0 %403
    %v405 = vrot.slane %v404, 4
    %v406 = vadd.f32 %v404, %v405
    %v407 = vrot.slane %v406, 2
    %v408 = vadd.f32 %v406, %v407
    %v409 = vrot.slane %v408, 1
    %v410 = vadd.f32 %v408, %v409
    %s411 = vtos %v410
    %v412 = vstv %s411
    %v413 = vmul.f32 %v412, 7.6293945e-06
    %v414 = vadd.f32 %v413, 0.0
    %v415 = vrot.slane %v44, 1
    %v416 = vrot.slane %v60, 1
    %v417 = vrot.slane %v76, 1
    %v418 = vrot.slane %v92, 1
    %v419 = vrot.slane %v45, 1
    %v420 = vrot.slane %v61, 1
    %v421 = vrot.slane %v77, 1
    %v422 = vrot.slane %v93, 1
    %v423 = vrot.slane %v46, 1
    %v424 = vrot.slane %v62, 1
    %v425 = vrot.slane %v78, 1
    %v426 = vrot.slane %v94, 1
    %v427 = vrot.slane %v47, 1
    %v428 = vrot.slane %v63, 1
    %v429 = vrot.slane %v79, 1
    %v430 = vrot.slane %v95, 1
    %v431 = vrot.slane %v48, 1
    %v432 = vrot.slane %v64, 1
    %v433 = vrot.slane %v80, 1
    %v434 = vrot.slane %v96, 1
    %v435 = vrot.slane %v49, 1
    %v436 = vrot.slane %v65, 1
    %v437 = vrot.slane %v81, 1
    %v438 = vrot.slane %v97, 1
    %v439 = vrot.slane %v50, 1
    %v440 = vrot.slane %v66, 1
    %v441 = vrot.slane %v82, 1
    %v442 = vrot.slane %v98, 1
    %v443 = vrot.slane %v51, 1
    %v444 = vrot.slane %v67, 1
    %v445 = vrot.slane %v83, 1
    %v446 = vrot.slane %v99, 1
    %v447 = vrot.slane %v52, 1
    %v448 = vrot.slane %v68, 1
    %v449 = vrot.slane %v84, 1
    %v450 = vrot.slane %v100, 1
    %v451 = vrot.slane %v53, 1
    %v452 = vrot.slane %v69, 1
    %v453 = vrot.slane %v85, 1
    %v454 = vrot.slane %v101, 1
    %v455 = vrot.slane %v54, 1
    %v456 = vrot.slane %v70, 1
    %v457 = vrot.slane %v86, 1
    %v458 = vrot.slane %v102, 1
    %v459 = vrot.slane %v55, 1
    %v460 = vrot.slane %v71, 1
    %v461 = vrot.slane %v87, 1
    %v462 = vrot.slane %v103, 1
    %v463 = vrot.slane %v56, 1
    %v464 = vrot.slane %v72, 1
    %v465 = vrot.slane %v88, 1
    %v466 = vrot.slane %v104, 1
    %v467 = vrot.slane %v57, 1
    %v468 = vrot.slane %v73, 1
    %v469 = vrot.slane %v89, 1
    %v470 = vrot.slane %v105, 1
    %v471 = vrot.slane %v58, 1
    %v472 = vrot.slane %v74, 1
    %v473 = vrot.slane %v90, 1
    %v474 = vrot.slane %v106, 1
    %v475 = vrot.slane %v59, 1
    %v476 = vrot.slane %v75, 1
    %v477 = vrot.slane %v91, 1
    %v478 = vrot.slane %v107, 1
    %v479 = vlaneseq
    %v480 = vshrl.u32 %v479, 7
    %vm481 = vcmp.lt.s32.totalorder %v480, 7
    %v482 = vsel %vm481, %v471, %v475
    %v483 = vsel %vm481, %v472, %v476
    %v484 = vsel %vm481, %v473, %v477
    %v485 = vsel %vm481, %v474, %v478
    %v486 = vsel %vm481, %v467, %v471
    %v487 = vsel %vm481, %v468, %v472
    %v488 = vsel %vm481, %v469, %v473
    %v489 = vsel %vm481, %v470, %v474
    %v490 = vsel %vm481, %v463, %v467
    %v491 = vsel %vm481, %v464, %v468
    %v492 = vsel %vm481, %v465, %v469
    %v493 = vsel %vm481, %v466, %v470
    %v494 = vsel %vm481, %v459, %v463
    %v495 = vsel %vm481, %v460, %v464
    %v496 = vsel %vm481, %v461, %v465
    %v497 = vsel %vm481, %v462, %v466
    %v498 = vsel %vm481, %v455, %v459
    %v499 = vsel %vm481, %v456, %v460
    %v500 = vsel %vm481, %v457, %v461
    %v501 = vsel %vm481, %v458, %v462
    %v502 = vsel %vm481, %v451, %v455
    %v503 = vsel %vm481, %v452, %v456
    %v504 = vsel %vm481, %v453, %v457
    %v505 = vsel %vm481, %v454, %v458
    %v506 = vsel %vm481, %v447, %v451
    %v507 = vsel %vm481, %v448, %v452
    %v508 = vsel %vm481, %v449, %v453
    %v509 = vsel %vm481, %v450, %v454
    %v510 = vsel %vm481, %v443, %v447
    %v511 = vsel %vm481, %v444, %v448
    %v512 = vsel %vm481, %v445, %v449
    %v513 = vsel %vm481, %v446, %v450
    %v514 = vsel %vm481, %v439, %v443
    %v515 = vsel %vm481, %v440, %v444
    %v516 = vsel %vm481, %v441, %v445
    %v517 = vsel %vm481, %v442, %v446
    %v518 = vsel %vm481, %v435, %v439
    %v519 = vsel %vm481, %v436, %v440
    %v520 = vsel %vm481, %v437, %v441
    %v521 = vsel %vm481, %v438, %v442
    %v522 = vsel %vm481, %v431, %v435
    %v523 = vsel %vm481, %v432, %v436
    %v524 = vsel %vm481, %v433, %v437
    %v525 = vsel %vm481, %v434, %v438
    %v526 = vsel %vm481, %v427, %v431
    %v527 = vsel %vm481, %v428, %v432
    %v528 = vsel %vm481, %v429, %v433
    %v529 = vsel %vm481, %v430, %v434
    %v530 = vsel %vm481, %v423, %v427
    %v531 = vsel %vm481, %v424, %v428
    %v532 = vsel %vm481, %v425, %v429
    %v533 = vsel %vm481, %v426, %v430
    %v534 = vsel %vm481, %v419, %v423
    %v535 = vsel %vm481, %v420, %v424
    %v536 = vsel %vm481, %v421, %v425
    %v537 = vsel %vm481, %v422, %v426
    %v538 = vsel %vm481, %v415, %v419
    %v539 = vsel %vm481, %v416, %v420
    %v540 = vsel %vm481, %v417, %v421
    %v541 = vsel %vm481, %v418, %v422
    %v542 = vsel %vm481, %v475, %v415
    %v543 = vsel %vm481, %v476, %v416
    %v544 = vsel %vm481, %v477, %v417
    %v545 = vsel %vm481, %v478, %v418
    %v546 = vrot.slane %v44, 2
    %v547 = vrot.slane %v60, 2
    %v548 = vrot.slane %v76, 2
    %v549 = vrot.slane %v92, 2
    %v550 = vrot.slane %v45, 2
    %v551 = vrot.slane %v61, 2
    %v552 = vrot.slane %v77, 2
    %v553 = vrot.slane %v93, 2
    %v554 = vrot.slane %v46, 2
    %v555 = vrot.slane %v62, 2
    %v556 = vrot.slane %v78, 2
    %v557 = vrot.slane %v94, 2
    %v558 = vrot.slane %v47, 2
    %v559 = vrot.slane %v63, 2
    %v560 = vrot.slane %v79, 2
    %v561 = vrot.slane %v95, 2
    %v562 = vrot.slane %v48, 2
    %v563 = vrot.slane %v64, 2
    %v564 = vrot.slane %v80, 2
    %v565 = vrot.slane %v96, 2
    %v566 = vrot.slane %v49, 2
    %v567 = vrot.slane %v65, 2
    %v568 = vrot.slane %v81, 2
    %v569 = vrot.slane %v97, 2
    %v570 = vrot.slane %v50, 2
    %v571 = vrot.slane %v66, 2
    %v572 = vrot.slane %v82, 2
    %v573 = vrot.slane %v98, 2
    %v574 = vrot.slane %v51, 2
    %v575 = vrot.slane %v67, 2
    %v576 = vrot.slane %v83, 2
    %v577 = vrot.slane %v99, 2
    %v578 = vrot.slane %v52, 2
    %v579 = vrot.slane %v68, 2
    %v580 = vrot.slane %v84, 2
    %v581 = vrot.slane %v100, 2
    %v582 = vrot.slane %v53, 2
    %v583 = vrot.slane %v69, 2
    %v584 = vrot.slane %v85, 2
    %v585 = vrot.slane %v101, 2
    %v586 = vrot.slane %v54, 2
    %v587 = vrot.slane %v70, 2
    %v588 = vrot.slane %v86, 2
    %v589 = vrot.slane %v102, 2
    %v590 = vrot.slane %v55, 2
    %v591 = vrot.slane %v71, 2
    %v592 = vrot.slane %v87, 2
    %v593 = vrot.slane %v103, 2
    %v594 = vrot.slane %v56, 2
    %v595 = vrot.slane %v72, 2
    %v596 = vrot.slane %v88, 2
    %v597 = vrot.slane %v104, 2
    %v598 = vrot.slane %v57, 2
    %v599 = vrot.slane %v73, 2
    %v600 = vrot.slane %v89, 2
    %v601 = vrot.slane %v105, 2
    %v602 = vrot.slane %v58, 2
    %v603 = vrot.slane %v74, 2
    %v604 = vrot.slane %v90, 2
    %v605 = vrot.slane %v106, 2
    %v606 = vrot.slane %v59, 2
    %v607 = vrot.slane %v75, 2
    %v608 = vrot.slane %v91, 2
    %v609 = vrot.slane %v107, 2
    %vm610 = vcmp.lt.s32.totalorder %v480, 6
    %v611 = vsel %vm610, %v602, %v606
    %v612 = vsel %vm610, %v603, %v607
    %v613 = vsel %vm610, %v604, %v608
    %v614 = vsel %vm610, %v605, %v609
    %v615 = vsel %vm610, %v598, %v602
    %v616 = vsel %vm610, %v599, %v603
    %v617 = vsel %vm610, %v600, %v604
    %v618 = vsel %vm610, %v601, %v605
    %v619 = vsel %vm610, %v594, %v598
    %v620 = vsel %vm610, %v595, %v599
    %v621 = vsel %vm610, %v596, %v600
    %v622 = vsel %vm610, %v597, %v601
    %v623 = vsel %vm610, %v590, %v594
    %v624 = vsel %vm610, %v591, %v595
    %v625 = vsel %vm610, %v592, %v596
    %v626 = vsel %vm610, %v593, %v597
    %v627 = vsel %vm610, %v586, %v590
    %v628 = vsel %vm610, %v587, %v591
    %v629 = vsel %vm610, %v588, %v592
    %v630 = vsel %vm610, %v589, %v593
    %v631 = vsel %vm610, %v582, %v586
    %v632 = vsel %vm610, %v583, %v587
    %v633 = vsel %vm610, %v584, %v588
    %v634 = vsel %vm610, %v585, %v589
    %v635 = vsel %vm610, %v578, %v582
    %v636 = vsel %vm610, %v579, %v583
    %v637 = vsel %vm610, %v580, %v584
    %v638 = vsel %vm610, %v581, %v585
    %v639 = vsel %vm610, %v574, %v578
    %v640 = vsel %vm610, %v575, %v579
    %v641 = vsel %vm610, %v576, %v580
    %v642 = vsel %vm610, %v577, %v581
    %v643 = vsel %vm610, %v570, %v574
    %v644 = vsel %vm610, %v571, %v575
    %v645 = vsel %vm610, %v572, %v576
    %v646 = vsel %vm610, %v573, %v577
    %v647 = vsel %vm610, %v566, %v570
    %v648 = vsel %vm610, %v567, %v571
    %v649 = vsel %vm610, %v568, %v572
    %v650 = vsel %vm610, %v569, %v573
    %v651 = vsel %vm610, %v562, %v566
    %v652 = vsel %vm610, %v563, %v567
    %v653 = vsel %vm610, %v564, %v568
    %v654 = vsel %vm610, %v565, %v569
    %v655 = vsel %vm610, %v558, %v562
    %v656 = vsel %vm610, %v559, %v563
    %v657 = vsel %vm610, %v560, %v564
    %v658 = vsel %vm610, %v561, %v565
    %v659 = vsel %vm610, %v554, %v558
    %v660 = vsel %vm610, %v555, %v559
    %v661 = vsel %vm610, %v556, %v560
    %v662 = vsel %vm610, %v557, %v561
    %v663 = vsel %vm610, %v550, %v554
    %v664 = vsel %vm610, %v551, %v555
    %v665 = vsel %vm610, %v552, %v556
    %v666 = vsel %vm610, %v553, %v557
    %v667 = vsel %vm610, %v546, %v550
    %v668 = vsel %vm610, %v547, %v551
    %v669 = vsel %vm610, %v548, %v552
    %v670 = vsel %vm610, %v549, %v553
    %v671 = vsel %vm610, %v606, %v546
    %v672 = vsel %vm610, %v607, %v547
    %v673 = vsel %vm610, %v608, %v548
    %v674 = vsel %vm610, %v609, %v549
    %675 = vrot.lane.b32.xlu0 %v44, 127
    %v676 = vpop.permute.xlu0 %675
    %677 = vrot.lane.b32.xlu0 %v45, 127
    %v678 = vpop.permute.xlu0 %677
    %679 = vrot.lane.b32.xlu0 %v46, 127
    %v680 = vpop.permute.xlu0 %679
    %681 = vrot.lane.b32.xlu0 %v47, 127
    %v682 = vpop.permute.xlu0 %681
    %683 = vrot.lane.b32.xlu0 %v48, 127
    %v684 = vpop.permute.xlu0 %683
    %685 = vrot.lane.b32.xlu0 %v49, 127
    %v686 = vpop.permute.xlu0 %685
    %687 = vrot.lane.b32.xlu0 %v50, 127
    %v688 = vpop.permute.xlu0 %687
    %689 = vrot.lane.b32.xlu0 %v51, 127
    %v690 = vpop.permute.xlu0 %689
    %691 = vrot.lane.b32.xlu0 %v52, 127
    %v692 = vpop.permute.xlu0 %691
    %693 = vrot.lane.b32.xlu0 %v53, 127
    %v694 = vpop.permute.xlu0 %693
    %695 = vrot.lane.b32.xlu0 %v54, 127
    %v696 = vpop.permute.xlu0 %695
    %697 = vrot.lane.b32.xlu0 %v55, 127
    %v698 = vpop.permute.xlu0 %697
    %699 = vrot.lane.b32.xlu0 %v56, 127
    %v700 = vpop.permute.xlu0 %699
    %701 = vrot.lane.b32.xlu0 %v57, 127
    %v702 = vpop.permute.xlu0 %701
    %703 = vrot.lane.b32.xlu0 %v58, 127
    %v704 = vpop.permute.xlu0 %703
    %705 = vrot.lane.b32.xlu0 %v59, 127
    %v706 = vpop.permute.xlu0 %705
    %707 = vrot.lane.b32.xlu0 %v60, 127
    %v708 = vpop.permute.xlu0 %707
    %709 = vrot.lane.b32.xlu0 %v61, 127
    %v710 = vpop.permute.xlu0 %709
    %711 = vrot.lane.b32.xlu0 %v62, 127
    %v712 = vpop.permute.xlu0 %711
    %713 = vrot.lane.b32.xlu0 %v63, 127
    %v714 = vpop.permute.xlu0 %713
    %715 = vrot.lane.b32.xlu0 %v64, 127
    %v716 = vpop.permute.xlu0 %715
    %717 = vrot.lane.b32.xlu0 %v65, 127
    %v718 = vpop.permute.xlu0 %717
    %719 = vrot.lane.b32.xlu0 %v66, 127
    %v720 = vpop.permute.xlu0 %719
    %721 = vrot.lane.b32.xlu0 %v67, 127
    %v722 = vpop.permute.xlu0 %721
    %723 = vrot.lane.b32.xlu0 %v68, 127
    %v724 = vpop.permute.xlu0 %723
    %725 = vrot.lane.b32.xlu0 %v69, 127
    %v726 = vpop.permute.xlu0 %725
    %727 = vrot.lane.b32.xlu0 %v70, 127
    %v728 = vpop.permute.xlu0 %727
    %729 = vrot.lane.b32.xlu0 %v71, 127
    %v730 = vpop.permute.xlu0 %729
    %731 = vrot.lane.b32.xlu0 %v72, 127
    %v732 = vpop.permute.xlu0 %731
    %733 = vrot.lane.b32.xlu0 %v73, 127
    %v734 = vpop.permute.xlu0 %733
    %735 = vrot.lane.b32.xlu0 %v74, 127
    %v736 = vpop.permute.xlu0 %735
    %737 = vrot.lane.b32.xlu0 %v75, 127
    %v738 = vpop.permute.xlu0 %737
    %739 = vrot.lane.b32.xlu0 %v76, 127
    %v740 = vpop.permute.xlu0 %739
    %741 = vrot.lane.b32.xlu0 %v77, 127
    %v742 = vpop.permute.xlu0 %741
    %743 = vrot.lane.b32.xlu0 %v78, 127
    %v744 = vpop.permute.xlu0 %743
    %745 = vrot.lane.b32.xlu0 %v79, 127
    %v746 = vpop.permute.xlu0 %745
    %747 = vrot.lane.b32.xlu0 %v80, 127
    %v748 = vpop.permute.xlu0 %747
    %749 = vrot.lane.b32.xlu0 %v81, 127
    %v750 = vpop.permute.xlu0 %749
    %751 = vrot.lane.b32.xlu0 %v82, 127
    %v752 = vpop.permute.xlu0 %751
    %753 = vrot.lane.b32.xlu0 %v83, 127
    %v754 = vpop.permute.xlu0 %753
    %755 = vrot.lane.b32.xlu0 %v84, 127
    %v756 = vpop.permute.xlu0 %755
    %757 = vrot.lane.b32.xlu0 %v85, 127
    %v758 = vpop.permute.xlu0 %757
    %759 = vrot.lane.b32.xlu0 %v86, 127
    %v760 = vpop.permute.xlu0 %759
    %761 = vrot.lane.b32.xlu0 %v87, 127
    %v762 = vpop.permute.xlu0 %761
    %763 = vrot.lane.b32.xlu0 %v88, 127
    %v764 = vpop.permute.xlu0 %763
    %765 = vrot.lane.b32.xlu0 %v89, 127
    %v766 = vpop.permute.xlu0 %765
    %767 = vrot.lane.b32.xlu0 %v90, 127
    %v768 = vpop.permute.xlu0 %767
    %769 = vrot.lane.b32.xlu0 %v91, 127
    %v770 = vpop.permute.xlu0 %769
    %771 = vrot.lane.b32.xlu0 %v92, 127
    %v772 = vpop.permute.xlu0 %771
    %773 = vrot.lane.b32.xlu0 %v93, 127
    %v774 = vpop.permute.xlu0 %773
    %775 = vrot.lane.b32.xlu0 %v94, 127
    %v776 = vpop.permute.xlu0 %775
    %777 = vrot.lane.b32.xlu0 %v95, 127
    %v778 = vpop.permute.xlu0 %777
    %779 = vrot.lane.b32.xlu0 %v96, 127
    %v780 = vpop.permute.xlu0 %779
    %781 = vrot.lane.b32.xlu0 %v97, 127
    %v782 = vpop.permute.xlu0 %781
    %783 = vrot.lane.b32.xlu0 %v98, 127
    %v784 = vpop.permute.xlu0 %783
    %785 = vrot.lane.b32.xlu0 %v99, 127
    %v786 = vpop.permute.xlu0 %785
    %787 = vrot.lane.b32.xlu0 %v100, 127
    %v788 = vpop.permute.xlu0 %787
    %789 = vrot.lane.b32.xlu0 %v101, 127
    %v790 = vpop.permute.xlu0 %789
    %791 = vrot.lane.b32.xlu0 %v102, 127
    %v792 = vpop.permute.xlu0 %791
    %793 = vrot.lane.b32.xlu0 %v103, 127
    %v794 = vpop.permute.xlu0 %793
    %795 = vrot.lane.b32.xlu0 %v104, 127
    %v796 = vpop.permute.xlu0 %795
    %797 = vrot.lane.b32.xlu0 %v105, 127
    %v798 = vpop.permute.xlu0 %797
    %799 = vrot.lane.b32.xlu0 %v106, 127
    %v800 = vpop.permute.xlu0 %799
    %801 = vrot.lane.b32.xlu0 %v107, 127
    %v802 = vpop.permute.xlu0 %801
    %803 = vrot.lane.b32.xlu0 %v44, 126
    %v804 = vpop.permute.xlu0 %803
    %805 = vrot.lane.b32.xlu0 %v45, 126
    %v806 = vpop.permute.xlu0 %805
    %807 = vrot.lane.b32.xlu0 %v46, 126
    %v808 = vpop.permute.xlu0 %807
    %809 = vrot.lane.b32.xlu0 %v47, 126
    %v810 = vpop.permute.xlu0 %809
    %811 = vrot.lane.b32.xlu0 %v48, 126
    %v812 = vpop.permute.xlu0 %811
    %813 = vrot.lane.b32.xlu0 %v49, 126
    %v814 = vpop.permute.xlu0 %813
    %815 = vrot.lane.b32.xlu0 %v50, 126
    %v816 = vpop.permute.xlu0 %815
    %817 = vrot.lane.b32.xlu0 %v51, 126
    %v818 = vpop.permute.xlu0 %817
    %819 = vrot.lane.b32.xlu0 %v52, 126
    %v820 = vpop.permute.xlu0 %819
    %821 = vrot.lane.b32.xlu0 %v53, 126
    %v822 = vpop.permute.xlu0 %821
    %823 = vrot.lane.b32.xlu0 %v54, 126
    %v824 = vpop.permute.xlu0 %823
    %825 = vrot.lane.b32.xlu0 %v55, 126
    %v826 = vpop.permute.xlu0 %825
    %827 = vrot.lane.b32.xlu0 %v56, 126
    %v828 = vpop.permute.xlu0 %827
    %829 = vrot.lane.b32.xlu0 %v57, 126
    %v830 = vpop.permute.xlu0 %829
    %831 = vrot.lane.b32.xlu0 %v58, 126
    %v832 = vpop.permute.xlu0 %831
    %833 = vrot.lane.b32.xlu0 %v59, 126
    %v834 = vpop.permute.xlu0 %833
    %835 = vrot.lane.b32.xlu0 %v60, 126
    %v836 = vpop.permute.xlu0 %835
    %837 = vrot.lane.b32.xlu0 %v61, 126
    %v838 = vpop.permute.xlu0 %837
    %839 = vrot.lane.b32.xlu0 %v62, 126
    %v840 = vpop.permute.xlu0 %839
    %841 = vrot.lane.b32.xlu0 %v63, 126
    %v842 = vpop.permute.xlu0 %841
    %843 = vrot.lane.b32.xlu0 %v64, 126
    %v844 = vpop.permute.xlu0 %843
    %845 = vrot.lane.b32.xlu0 %v65, 126
    %v846 = vpop.permute.xlu0 %845
    %847 = vrot.lane.b32.xlu0 %v66, 126
    %v848 = vpop.permute.xlu0 %847
    %849 = vrot.lane.b32.xlu0 %v67, 126
    %v850 = vpop.permute.xlu0 %849
    %851 = vrot.lane.b32.xlu0 %v68, 126
    %v852 = vpop.permute.xlu0 %851
    %853 = vrot.lane.b32.xlu0 %v69, 126
    %v854 = vpop.permute.xlu0 %853
    %855 = vrot.lane.b32.xlu0 %v70, 126
    %v856 = vpop.permute.xlu0 %855
    %857 = vrot.lane.b32.xlu0 %v71, 126
    %v858 = vpop.permute.xlu0 %857
    %859 = vrot.lane.b32.xlu0 %v72, 126
    %v860 = vpop.permute.xlu0 %859
    %861 = vrot.lane.b32.xlu0 %v73, 126
    %v862 = vpop.permute.xlu0 %861
    %863 = vrot.lane.b32.xlu0 %v74, 126
    %v864 = vpop.permute.xlu0 %863
    %865 = vrot.lane.b32.xlu0 %v75, 126
    %v866 = vpop.permute.xlu0 %865
    %867 = vrot.lane.b32.xlu0 %v76, 126
    %v868 = vpop.permute.xlu0 %867
    %869 = vrot.lane.b32.xlu0 %v77, 126
    %v870 = vpop.permute.xlu0 %869
    %871 = vrot.lane.b32.xlu0 %v78, 126
    %v872 = vpop.permute.xlu0 %871
    %873 = vrot.lane.b32.xlu0 %v79, 126
    %v874 = vpop.permute.xlu0 %873
    %875 = vrot.lane.b32.xlu0 %v80, 126
    %v876 = vpop.permute.xlu0 %875
    %877 = vrot.lane.b32.xlu0 %v81, 126
    %v878 = vpop.permute.xlu0 %877
    %879 = vrot.lane.b32.xlu0 %v82, 126
    %v880 = vpop.permute.xlu0 %879
    %881 = vrot.lane.b32.xlu0 %v83, 126
    %v882 = vpop.permute.xlu0 %881
    %883 = vrot.lane.b32.xlu0 %v84, 126
    %v884 = vpop.permute.xlu0 %883
    %885 = vrot.lane.b32.xlu0 %v85, 126
    %v886 = vpop.permute.xlu0 %885
    %887 = vrot.lane.b32.xlu0 %v86, 126
    %v888 = vpop.permute.xlu0 %887
    %889 = vrot.lane.b32.xlu0 %v87, 126
    %v890 = vpop.permute.xlu0 %889
    %891 = vrot.lane.b32.xlu0 %v88, 126
    %v892 = vpop.permute.xlu0 %891
    %893 = vrot.lane.b32.xlu0 %v89, 126
    %v894 = vpop.permute.xlu0 %893
    %895 = vrot.lane.b32.xlu0 %v90, 126
    %v896 = vpop.permute.xlu0 %895
    %897 = vrot.lane.b32.xlu0 %v91, 126
    %v898 = vpop.permute.xlu0 %897
    %899 = vrot.lane.b32.xlu0 %v92, 126
    %v900 = vpop.permute.xlu0 %899
    %901 = vrot.lane.b32.xlu0 %v93, 126
    %v902 = vpop.permute.xlu0 %901
    %903 = vrot.lane.b32.xlu0 %v94, 126
    %v904 = vpop.permute.xlu0 %903
    %905 = vrot.lane.b32.xlu0 %v95, 126
    %v906 = vpop.permute.xlu0 %905
    %907 = vrot.lane.b32.xlu0 %v96, 126
    %v908 = vpop.permute.xlu0 %907
    %909 = vrot.lane.b32.xlu0 %v97, 126
    %v910 = vpop.permute.xlu0 %909
    %911 = vrot.lane.b32.xlu0 %v98, 126
    %v912 = vpop.permute.xlu0 %911
    %913 = vrot.lane.b32.xlu0 %v99, 126
    %v914 = vpop.permute.xlu0 %913
    %915 = vrot.lane.b32.xlu0 %v100, 126
    %v916 = vpop.permute.xlu0 %915
    %917 = vrot.lane.b32.xlu0 %v101, 126
    %v918 = vpop.permute.xlu0 %917
    %919 = vrot.lane.b32.xlu0 %v102, 126
    %v920 = vpop.permute.xlu0 %919
    %921 = vrot.lane.b32.xlu0 %v103, 126
    %v922 = vpop.permute.xlu0 %921
    %923 = vrot.lane.b32.xlu0 %v104, 126
    %v924 = vpop.permute.xlu0 %923
    %925 = vrot.lane.b32.xlu0 %v105, 126
    %v926 = vpop.permute.xlu0 %925
    %927 = vrot.lane.b32.xlu0 %v106, 126
    %v928 = vpop.permute.xlu0 %927
    %929 = vrot.lane.b32.xlu0 %v107, 126
    %v930 = vpop.permute.xlu0 %929
    %v931 = vsub.f32 %v667, %v538
    %v932 = vsub.f32 %v663, %v534
    %v933 = vsub.f32 %v659, %v530
    %v934 = vsub.f32 %v655, %v526
    %v935 = vsub.f32 %v651, %v522
    %v936 = vsub.f32 %v647, %v518
    %v937 = vsub.f32 %v643, %v514
    %v938 = vsub.f32 %v639, %v510
    %v939 = vsub.f32 %v635, %v506
    %v940 = vsub.f32 %v631, %v502
    %v941 = vsub.f32 %v627, %v498
    %v942 = vsub.f32 %v623, %v494
    %v943 = vsub.f32 %v619, %v490
    %v944 = vsub.f32 %v615, %v486
    %v945 = vsub.f32 %v611, %v482
    %v946 = vsub.f32 %v671, %v542
    %v947 = vsub.f32 %v668, %v539
    %v948 = vsub.f32 %v664, %v535
    %v949 = vsub.f32 %v660, %v531
    %v950 = vsub.f32 %v656, %v527
    %v951 = vsub.f32 %v652, %v523
    %v952 = vsub.f32 %v648, %v519
    %v953 = vsub.f32 %v644, %v515
    %v954 = vsub.f32 %v640, %v511
    %v955 = vsub.f32 %v636, %v507
    %v956 = vsub.f32 %v632, %v503
    %v957 = vsub.f32 %v628, %v499
    %v958 = vsub.f32 %v624, %v495
    %v959 = vsub.f32 %v620, %v491
    %v960 = vsub.f32 %v616, %v487
    %v961 = vsub.f32 %v612, %v483
    %v962 = vsub.f32 %v672, %v543
    %v963 = vsub.f32 %v669, %v540
    %v964 = vsub.f32 %v665, %v536
    %v965 = vsub.f32 %v661, %v532
    %v966 = vsub.f32 %v657, %v528
    %v967 = vsub.f32 %v653, %v524
    %v968 = vsub.f32 %v649, %v520
    %v969 = vsub.f32 %v645, %v516
    %v970 = vsub.f32 %v641, %v512
    %v971 = vsub.f32 %v637, %v508
    %v972 = vsub.f32 %v633, %v504
    %v973 = vsub.f32 %v629, %v500
    %v974 = vsub.f32 %v625, %v496
    %v975 = vsub.f32 %v621, %v492
    %v976 = vsub.f32 %v617, %v488
    %v977 = vsub.f32 %v613, %v484
    %v978 = vsub.f32 %v673, %v544
    %v979 = vsub.f32 %v670, %v541
    %v980 = vsub.f32 %v666, %v537
    %v981 = vsub.f32 %v662, %v533
    %v982 = vsub.f32 %v658, %v529
    %v983 = vsub.f32 %v654, %v525
    %v984 = vsub.f32 %v650, %v521
    %v985 = vsub.f32 %v646, %v517
    %v986 = vsub.f32 %v642, %v513
    %v987 = vsub.f32 %v638, %v509
    %v988 = vsub.f32 %v634, %v505
    %v989 = vsub.f32 %v630, %v501
    %v990 = vsub.f32 %v626, %v497
    %v991 = vsub.f32 %v622, %v493
    %v992 = vsub.f32 %v618, %v489
    %v993 = vsub.f32 %v614, %v485
    %v994 = vsub.f32 %v674, %v545
    %v995 = vsub.f32 %v804, %v676
    %v996 = vsub.f32 %v806, %v678
    %v997 = vsub.f32 %v808, %v680
    %v998 = vsub.f32 %v810, %v682
    %v999 = vsub.f32 %v812, %v684
    %v1000 = vsub.f32 %v814, %v686
    %v1001 = vsub.f32 %v816, %v688
    %v1002 = vsub.f32 %v818, %v690
    %v1003 = vsub.f32 %v820, %v692
    %v1004 = vsub.f32 %v822, %v694
    %v1005 = vsub.f32 %v824, %v696
    %v1006 = vsub.f32 %v826, %v698
    %v1007 = vsub.f32 %v828, %v700
    %v1008 = vsub.f32 %v830, %v702
    %v1009 = vsub.f32 %v832, %v704
    %v1010 = vsub.f32 %v834, %v706
    %v1011 = vsub.f32 %v836, %v708
    %v1012 = vsub.f32 %v838, %v710
    %v1013 = vsub.f32 %v840, %v712
    %v1014 = vsub.f32 %v842, %v714
    %v1015 = vsub.f32 %v844, %v716
    %v1016 = vsub.f32 %v846, %v718
    %v1017 = vsub.f32 %v848, %v720
    %v1018 = vsub.f32 %v850, %v722
    %v1019 = vsub.f32 %v852, %v724
    %v1020 = vsub.f32 %v854, %v726
    %v1021 = vsub.f32 %v856, %v728
    %v1022 = vsub.f32 %v858, %v730
    %v1023 = vsub.f32 %v860, %v732
    %v1024 = vsub.f32 %v862, %v734
    %v1025 = vsub.f32 %v864, %v736
    %v1026 = vsub.f32 %v866, %v738
    %v1027 = vsub.f32 %v868, %v740
    %v1028 = vsub.f32 %v870, %v742
    %v1029 = vsub.f32 %v872, %v744
    %v1030 = vsub.f32 %v874, %v746
    %v1031 = vsub.f32 %v876, %v748
    %v1032 = vsub.f32 %v878, %v750
    %v1033 = vsub.f32 %v880, %v752
    %v1034 = vsub.f32 %v882, %v754
    %v1035 = vsub.f32 %v884, %v756
    %v1036 = vsub.f32 %v886, %v758
    %v1037 = vsub.f32 %v888, %v760
    %v1038 = vsub.f32 %v890, %v762
    %v1039 = vsub.f32 %v892, %v764
    %v1040 = vsub.f32 %v894, %v766
    %v1041 = vsub.f32 %v896, %v768
    %v1042 = vsub.f32 %v898, %v770
    %v1043 = vsub.f32 %v900, %v772
    %v1044 = vsub.f32 %v902, %v774
    %v1045 = vsub.f32 %v904, %v776
    %v1046 = vsub.f32 %v906, %v778
    %v1047 = vsub.f32 %v908, %v780
    %v1048 = vsub.f32 %v910, %v782
    %v1049 = vsub.f32 %v912, %v784
    %v1050 = vsub.f32 %v914, %v786
    %v1051 = vsub.f32 %v916, %v788
    %v1052 = vsub.f32 %v918, %v790
    %v1053 = vsub.f32 %v920, %v792
    %v1054 = vsub.f32 %v922, %v794
    %v1055 = vsub.f32 %v924, %v796
    %v1056 = vsub.f32 %v926, %v798
    %v1057 = vsub.f32 %v928, %v800
    %v1058 = vsub.f32 %v930, %v802
    %v1059 = vmul.f32 %v931, %v931
    %v1060 = vmul.f32 %v932, %v932
    %v1061 = vmul.f32 %v933, %v933
    %v1062 = vmul.f32 %v934, %v934
    %v1063 = vmul.f32 %v935, %v935
    %v1064 = vmul.f32 %v936, %v936
    %v1065 = vmul.f32 %v937, %v937
    %v1066 = vmul.f32 %v938, %v938
    %v1067 = vmul.f32 %v939, %v939
    %v1068 = vmul.f32 %v940, %v940
    %v1069 = vmul.f32 %v941, %v941
    %v1070 = vmul.f32 %v942, %v942
    %v1071 = vmul.f32 %v943, %v943
    %v1072 = vmul.f32 %v944, %v944
    %v1073 = vmul.f32 %v945, %v945
    %v1074 = vmul.f32 %v946, %v946
    %v1075 = vmul.f32 %v947, %v947
    %v1076 = vmul.f32 %v948, %v948
    %v1077 = vmul.f32 %v949, %v949
    %v1078 = vmul.f32 %v950, %v950
    %v1079 = vmul.f32 %v951, %v951
    %v1080 = vmul.f32 %v952, %v952
    %v1081 = vmul.f32 %v953, %v953
    %v1082 = vmul.f32 %v954, %v954
    %v1083 = vmul.f32 %v955, %v955
    %v1084 = vmul.f32 %v956, %v956
    %v1085 = vmul.f32 %v957, %v957
    %v1086 = vmul.f32 %v958, %v958
    %v1087 = vmul.f32 %v959, %v959
    %v1088 = vmul.f32 %v960, %v960
    %v1089 = vmul.f32 %v961, %v961
    %v1090 = vmul.f32 %v962, %v962
    %v1091 = vmul.f32 %v963, %v963
    %v1092 = vmul.f32 %v964, %v964
    %v1093 = vmul.f32 %v965, %v965
    %v1094 = vmul.f32 %v966, %v966
    %v1095 = vmul.f32 %v967, %v967
    %v1096 = vmul.f32 %v968, %v968
    %v1097 = vmul.f32 %v969, %v969
    %v1098 = vmul.f32 %v970, %v970
    %v1099 = vmul.f32 %v971, %v971
    %v1100 = vmul.f32 %v972, %v972
    %v1101 = vmul.f32 %v973, %v973
    %v1102 = vmul.f32 %v974, %v974
    %v1103 = vmul.f32 %v975, %v975
    %v1104 = vmul.f32 %v976, %v976
    %v1105 = vmul.f32 %v977, %v977
    %v1106 = vmul.f32 %v978, %v978
    %v1107 = vmul.f32 %v979, %v979
    %v1108 = vmul.f32 %v980, %v980
    %v1109 = vmul.f32 %v981, %v981
    %v1110 = vmul.f32 %v982, %v982
    %v1111 = vmul.f32 %v983, %v983
    %v1112 = vmul.f32 %v984, %v984
    %v1113 = vmul.f32 %v985, %v985
    %v1114 = vmul.f32 %v986, %v986
    %v1115 = vmul.f32 %v987, %v987
    %v1116 = vmul.f32 %v988, %v988
    %v1117 = vmul.f32 %v989, %v989
    %v1118 = vmul.f32 %v990, %v990
    %v1119 = vmul.f32 %v991, %v991
    %v1120 = vmul.f32 %v992, %v992
    %v1121 = vmul.f32 %v993, %v993
    %v1122 = vmul.f32 %v994, %v994
    %v1123 = vmul.f32 %v995, %v995
    %v1124 = vmul.f32 %v996, %v996
    %v1125 = vmul.f32 %v997, %v997
    %v1126 = vmul.f32 %v998, %v998
    %v1127 = vmul.f32 %v999, %v999
    %v1128 = vmul.f32 %v1000, %v1000
    %v1129 = vmul.f32 %v1001, %v1001
    %v1130 = vmul.f32 %v1002, %v1002
    %v1131 = vmul.f32 %v1003, %v1003
    %v1132 = vmul.f32 %v1004, %v1004
    %v1133 = vmul.f32 %v1005, %v1005
    %v1134 = vmul.f32 %v1006, %v1006
    %v1135 = vmul.f32 %v1007, %v1007
    %v1136 = vmul.f32 %v1008, %v1008
    %v1137 = vmul.f32 %v1009, %v1009
    %v1138 = vmul.f32 %v1010, %v1010
    %v1139 = vmul.f32 %v1011, %v1011
    %v1140 = vmul.f32 %v1012, %v1012
    %v1141 = vmul.f32 %v1013, %v1013
    %v1142 = vmul.f32 %v1014, %v1014
    %v1143 = vmul.f32 %v1015, %v1015
    %v1144 = vmul.f32 %v1016, %v1016
    %v1145 = vmul.f32 %v1017, %v1017
    %v1146 = vmul.f32 %v1018, %v1018
    %v1147 = vmul.f32 %v1019, %v1019
    %v1148 = vmul.f32 %v1020, %v1020
    %v1149 = vmul.f32 %v1021, %v1021
    %v1150 = vmul.f32 %v1022, %v1022
    %v1151 = vmul.f32 %v1023, %v1023
    %v1152 = vmul.f32 %v1024, %v1024
    %v1153 = vmul.f32 %v1025, %v1025
    %v1154 = vmul.f32 %v1026, %v1026
    %v1155 = vmul.f32 %v1027, %v1027
    %v1156 = vmul.f32 %v1028, %v1028
    %v1157 = vmul.f32 %v1029, %v1029
    %v1158 = vmul.f32 %v1030, %v1030
    %v1159 = vmul.f32 %v1031, %v1031
    %v1160 = vmul.f32 %v1032, %v1032
    %v1161 = vmul.f32 %v1033, %v1033
    %v1162 = vmul.f32 %v1034, %v1034
    %v1163 = vmul.f32 %v1035, %v1035
    %v1164 = vmul.f32 %v1036, %v1036
    %v1165 = vmul.f32 %v1037, %v1037
    %v1166 = vmul.f32 %v1038, %v1038
    %v1167 = vmul.f32 %v1039, %v1039
    %v1168 = vmul.f32 %v1040, %v1040
    %v1169 = vmul.f32 %v1041, %v1041
    %v1170 = vmul.f32 %v1042, %v1042
    %v1171 = vmul.f32 %v1043, %v1043
    %v1172 = vmul.f32 %v1044, %v1044
    %v1173 = vmul.f32 %v1045, %v1045
    %v1174 = vmul.f32 %v1046, %v1046
    %v1175 = vmul.f32 %v1047, %v1047
    %v1176 = vmul.f32 %v1048, %v1048
    %v1177 = vmul.f32 %v1049, %v1049
    %v1178 = vmul.f32 %v1050, %v1050
    %v1179 = vmul.f32 %v1051, %v1051
    %v1180 = vmul.f32 %v1052, %v1052
    %v1181 = vmul.f32 %v1053, %v1053
    %v1182 = vmul.f32 %v1054, %v1054
    %v1183 = vmul.f32 %v1055, %v1055
    %v1184 = vmul.f32 %v1056, %v1056
    %v1185 = vmul.f32 %v1057, %v1057
    %v1186 = vmul.f32 %v1058, %v1058
    %v1187 = vadd.f32 %v1059, %v1123
    %v1188 = vadd.f32 %v1060, %v1124
    %v1189 = vadd.f32 %v1061, %v1125
    %v1190 = vadd.f32 %v1062, %v1126
    %v1191 = vadd.f32 %v1063, %v1127
    %v1192 = vadd.f32 %v1064, %v1128
    %v1193 = vadd.f32 %v1065, %v1129
    %v1194 = vadd.f32 %v1066, %v1130
    %v1195 = vadd.f32 %v1067, %v1131
    %v1196 = vadd.f32 %v1068, %v1132
    %v1197 = vadd.f32 %v1069, %v1133
    %v1198 = vadd.f32 %v1070, %v1134
    %v1199 = vadd.f32 %v1071, %v1135
    %v1200 = vadd.f32 %v1072, %v1136
    %v1201 = vadd.f32 %v1073, %v1137
    %v1202 = vadd.f32 %v1074, %v1138
    %v1203 = vadd.f32 %v1075, %v1139
    %v1204 = vadd.f32 %v1076, %v1140
    %v1205 = vadd.f32 %v1077, %v1141
    %v1206 = vadd.f32 %v1078, %v1142
    %v1207 = vadd.f32 %v1079, %v1143
    %v1208 = vadd.f32 %v1080, %v1144
    %v1209 = vadd.f32 %v1081, %v1145
    %v1210 = vadd.f32 %v1082, %v1146
    %v1211 = vadd.f32 %v1083, %v1147
    %v1212 = vadd.f32 %v1084, %v1148
    %v1213 = vadd.f32 %v1085, %v1149
    %v1214 = vadd.f32 %v1086, %v1150
    %v1215 = vadd.f32 %v1087, %v1151
    %v1216 = vadd.f32 %v1088, %v1152
    %v1217 = vadd.f32 %v1089, %v1153
    %v1218 = vadd.f32 %v1090, %v1154
    %v1219 = vadd.f32 %v1091, %v1155
    %v1220 = vadd.f32 %v1092, %v1156
    %v1221 = vadd.f32 %v1093, %v1157
    %v1222 = vadd.f32 %v1094, %v1158
    %v1223 = vadd.f32 %v1095, %v1159
    %v1224 = vadd.f32 %v1096, %v1160
    %v1225 = vadd.f32 %v1097, %v1161
    %v1226 = vadd.f32 %v1098, %v1162
    %v1227 = vadd.f32 %v1099, %v1163
    %v1228 = vadd.f32 %v1100, %v1164
    %v1229 = vadd.f32 %v1101, %v1165
    %v1230 = vadd.f32 %v1102, %v1166
    %v1231 = vadd.f32 %v1103, %v1167
    %v1232 = vadd.f32 %v1104, %v1168
    %v1233 = vadd.f32 %v1105, %v1169
    %v1234 = vadd.f32 %v1106, %v1170
    %v1235 = vadd.f32 %v1107, %v1171
    %v1236 = vadd.f32 %v1108, %v1172
    %v1237 = vadd.f32 %v1109, %v1173
    %v1238 = vadd.f32 %v1110, %v1174
    %v1239 = vadd.f32 %v1111, %v1175
    %v1240 = vadd.f32 %v1112, %v1176
    %v1241 = vadd.f32 %v1113, %v1177
    %v1242 = vadd.f32 %v1114, %v1178
    %v1243 = vadd.f32 %v1115, %v1179
    %v1244 = vadd.f32 %v1116, %v1180
    %v1245 = vadd.f32 %v1117, %v1181
    %v1246 = vadd.f32 %v1118, %v1182
    %v1247 = vadd.f32 %v1119, %v1183
    %v1248 = vadd.f32 %v1120, %v1184
    %v1249 = vadd.f32 %v1121, %v1185
    %v1250 = vadd.f32 %v1122, %v1186
    %v1251 = vadd.s32 %v480, 8
    %v1252 = vadd.s32 %v480, 16
    %v1253 = vadd.s32 %v480, 24
    %v1254 = vadd.s32 %v480, 32
    %v1255 = vadd.s32 %v480, 40
    %v1256 = vadd.s32 %v480, 48
    %v1257 = vadd.s32 %v480, 56
    %v1258 = vadd.s32 %v480, 64
    %v1259 = vadd.s32 %v480, 72
    %v1260 = vadd.s32 %v480, 80
    %v1261 = vadd.s32 %v480, 88
    %v1262 = vadd.s32 %v480, 96
    %v1263 = vadd.s32 %v480, 104
    %v1264 = vadd.s32 %v480, 112
    %v1265 = vadd.s32 %v480, 120
    %v1266 = vlaneseq
    %v1267 = vand.u32 %v1266, 127
    %vm1268 = vcmp.le.s32.totalorder %v1267, 125
    %vm1269 = vcmp.le.s32.totalorder %v480, 125
    %vm1270 = vcmp.le.s32.totalorder %v1251, 125
    %vm1271 = vcmp.le.s32.totalorder %v1252, 125
    %vm1272 = vcmp.le.s32.totalorder %v1253, 125
    %vm1273 = vcmp.le.s32.totalorder %v1254, 125
    %vm1274 = vcmp.le.s32.totalorder %v1255, 125
    %vm1275 = vcmp.le.s32.totalorder %v1256, 125
    %vm1276 = vcmp.le.s32.totalorder %v1257, 125
    %vm1277 = vcmp.le.s32.totalorder %v1258, 125
    %vm1278 = vcmp.le.s32.totalorder %v1259, 125
    %vm1279 = vcmp.le.s32.totalorder %v1260, 125
    %vm1280 = vcmp.le.s32.totalorder %v1261, 125
    %vm1281 = vcmp.le.s32.totalorder %v1262, 125
    %vm1282 = vcmp.le.s32.totalorder %v1263, 125
    %vm1283 = vcmp.le.s32.totalorder %v1264, 125
    %vm1284 = vcmp.le.s32.totalorder %v1265, 125
    %vm1285 = vmand %vm1269, %vm1268
    %vm1286 = vmand %vm1270, %vm1268
    %vm1287 = vmand %vm1271, %vm1268
    %vm1288 = vmand %vm1272, %vm1268
    %vm1289 = vmand %vm1273, %vm1268
    %vm1290 = vmand %vm1274, %vm1268
    %vm1291 = vmand %vm1275, %vm1268
    %vm1292 = vmand %vm1276, %vm1268
    %vm1293 = vmand %vm1277, %vm1268
    %vm1294 = vmand %vm1278, %vm1268
    %vm1295 = vmand %vm1279, %vm1268
    %vm1296 = vmand %vm1280, %vm1268
    %vm1297 = vmand %vm1281, %vm1268
    %vm1298 = vmand %vm1282, %vm1268
    %vm1299 = vmand %vm1283, %vm1268
    %vm1300 = vmand %vm1284, %vm1268
    %v1301 = vadd.f32 %v1187, 1e-06
    %v1302 = vadd.f32 %v1188, 1e-06
    %v1303 = vadd.f32 %v1189, 1e-06
    %v1304 = vadd.f32 %v1190, 1e-06
    %v1305 = vadd.f32 %v1191, 1e-06
    %v1306 = vadd.f32 %v1192, 1e-06
    %v1307 = vadd.f32 %v1193, 1e-06
    %v1308 = vadd.f32 %v1194, 1e-06
    %v1309 = vadd.f32 %v1195, 1e-06
    %v1310 = vadd.f32 %v1196, 1e-06
    %v1311 = vadd.f32 %v1197, 1e-06
    %v1312 = vadd.f32 %v1198, 1e-06
    %v1313 = vadd.f32 %v1199, 1e-06
    %v1314 = vadd.f32 %v1200, 1e-06
    %v1315 = vadd.f32 %v1201, 1e-06
    %v1316 = vadd.f32 %v1202, 1e-06
    %v1317 = vadd.f32 %v1203, 1e-06
    %v1318 = vadd.f32 %v1204, 1e-06
    %v1319 = vadd.f32 %v1205, 1e-06
    %v1320 = vadd.f32 %v1206, 1e-06
    %v1321 = vadd.f32 %v1207, 1e-06
    %v1322 = vadd.f32 %v1208, 1e-06
    %v1323 = vadd.f32 %v1209, 1e-06
    %v1324 = vadd.f32 %v1210, 1e-06
    %v1325 = vadd.f32 %v1211, 1e-06
    %v1326 = vadd.f32 %v1212, 1e-06
    %v1327 = vadd.f32 %v1213, 1e-06
    %v1328 = vadd.f32 %v1214, 1e-06
    %v1329 = vadd.f32 %v1215, 1e-06
    %v1330 = vadd.f32 %v1216, 1e-06
    %v1331 = vadd.f32 %v1217, 1e-06
    %v1332 = vadd.f32 %v1218, 1e-06
    %v1333 = vadd.f32 %v1219, 1e-06
    %v1334 = vadd.f32 %v1220, 1e-06
    %v1335 = vadd.f32 %v1221, 1e-06
    %v1336 = vadd.f32 %v1222, 1e-06
    %v1337 = vadd.f32 %v1223, 1e-06
    %v1338 = vadd.f32 %v1224, 1e-06
    %v1339 = vadd.f32 %v1225, 1e-06
    %v1340 = vadd.f32 %v1226, 1e-06
    %v1341 = vadd.f32 %v1227, 1e-06
    %v1342 = vadd.f32 %v1228, 1e-06
    %v1343 = vadd.f32 %v1229, 1e-06
    %v1344 = vadd.f32 %v1230, 1e-06
    %v1345 = vadd.f32 %v1231, 1e-06
    %v1346 = vadd.f32 %v1232, 1e-06
    %v1347 = vadd.f32 %v1233, 1e-06
    %v1348 = vadd.f32 %v1234, 1e-06
    %v1349 = vadd.f32 %v1235, 1e-06
    %v1350 = vadd.f32 %v1236, 1e-06
    %v1351 = vadd.f32 %v1237, 1e-06
    %v1352 = vadd.f32 %v1238, 1e-06
    %v1353 = vadd.f32 %v1239, 1e-06
    %v1354 = vadd.f32 %v1240, 1e-06
    %v1355 = vadd.f32 %v1241, 1e-06
    %v1356 = vadd.f32 %v1242, 1e-06
    %v1357 = vadd.f32 %v1243, 1e-06
    %v1358 = vadd.f32 %v1244, 1e-06
    %v1359 = vadd.f32 %v1245, 1e-06
    %v1360 = vadd.f32 %v1246, 1e-06
    %v1361 = vadd.f32 %v1247, 1e-06
    %v1362 = vadd.f32 %v1248, 1e-06
    %v1363 = vadd.f32 %v1249, 1e-06
    %v1364 = vadd.f32 %v1250, 1e-06
    %v1365 = vrsqrt.pop %v1301
    %v1366 = vmul.f32 %v1365, %v1301
    %v1367 = vmul.f32 %v1366, %v1365
    %v1368 = vmul.f32 0.5, %v1367
    %v1369 = vsub.f32 1.5, %v1368
    %v1370 = vmul.f32 %v1365, %v1369
    %v1371 = vmul.f32 %v1301, %v1370
    %vm1372 = vcmp.eq.f32.partialorder %v1301, inf
    %v1373 = vsel %vm1372, %v1301, %v1371
    %vm1374 = vcmp.eq.f32.partialorder %v1301, 0.0
    %v1375 = vand.u32 %v1301, 2147483648
    %v1376 = vsel %vm1374, %v1375, %v1373
    %v1377 = vrsqrt.pop %v1302
    %v1378 = vmul.f32 %v1377, %v1302
    %v1379 = vmul.f32 %v1378, %v1377
    %v1380 = vmul.f32 0.5, %v1379
    %v1381 = vsub.f32 1.5, %v1380
    %v1382 = vmul.f32 %v1377, %v1381
    %v1383 = vmul.f32 %v1302, %v1382
    %vm1384 = vcmp.eq.f32.partialorder %v1302, inf
    %v1385 = vsel %vm1384, %v1302, %v1383
    %vm1386 = vcmp.eq.f32.partialorder %v1302, 0.0
    %v1387 = vand.u32 %v1302, 2147483648
    %v1388 = vsel %vm1386, %v1387, %v1385
    %v1389 = vrsqrt.pop %v1303
    %v1390 = vmul.f32 %v1389, %v1303
    %v1391 = vmul.f32 %v1390, %v1389
    %v1392 = vmul.f32 0.5, %v1391
    %v1393 = vsub.f32 1.5, %v1392
    %v1394 = vmul.f32 %v1389, %v1393
    %v1395 = vmul.f32 %v1303, %v1394
    %vm1396 = vcmp.eq.f32.partialorder %v1303, inf
    %v1397 = vsel %vm1396, %v1303, %v1395
    %vm1398 = vcmp.eq.f32.partialorder %v1303, 0.0
    %v1399 = vand.u32 %v1303, 2147483648
    %v1400 = vsel %vm1398, %v1399, %v1397
    %v1401 = vrsqrt.pop %v1304
    %v1402 = vmul.f32 %v1401, %v1304
    %v1403 = vmul.f32 %v1402, %v1401
    %v1404 = vmul.f32 0.5, %v1403
    %v1405 = vsub.f32 1.5, %v1404
    %v1406 = vmul.f32 %v1401, %v1405
    %v1407 = vmul.f32 %v1304, %v1406
    %vm1408 = vcmp.eq.f32.partialorder %v1304, inf
    %v1409 = vsel %vm1408, %v1304, %v1407
    %vm1410 = vcmp.eq.f32.partialorder %v1304, 0.0
    %v1411 = vand.u32 %v1304, 2147483648
    %v1412 = vsel %vm1410, %v1411, %v1409
    %v1413 = vrsqrt.pop %v1305
    %v1414 = vmul.f32 %v1413, %v1305
    %v1415 = vmul.f32 %v1414, %v1413
    %v1416 = vmul.f32 0.5, %v1415
    %v1417 = vsub.f32 1.5, %v1416
    %v1418 = vmul.f32 %v1413, %v1417
    %v1419 = vmul.f32 %v1305, %v1418
    %vm1420 = vcmp.eq.f32.partialorder %v1305, inf
    %v1421 = vsel %vm1420, %v1305, %v1419
    %vm1422 = vcmp.eq.f32.partialorder %v1305, 0.0
    %v1423 = vand.u32 %v1305, 2147483648
    %v1424 = vsel %vm1422, %v1423, %v1421
    %v1425 = vrsqrt.pop %v1306
    %v1426 = vmul.f32 %v1425, %v1306
    %v1427 = vmul.f32 %v1426, %v1425
    %v1428 = vmul.f32 0.5, %v1427
    %v1429 = vsub.f32 1.5, %v1428
    %v1430 = vmul.f32 %v1425, %v1429
    %v1431 = vmul.f32 %v1306, %v1430
    %vm1432 = vcmp.eq.f32.partialorder %v1306, inf
    %v1433 = vsel %vm1432, %v1306, %v1431
    %vm1434 = vcmp.eq.f32.partialorder %v1306, 0.0
    %v1435 = vand.u32 %v1306, 2147483648
    %v1436 = vsel %vm1434, %v1435, %v1433
    %v1437 = vrsqrt.pop %v1307
    %v1438 = vmul.f32 %v1437, %v1307
    %v1439 = vmul.f32 %v1438, %v1437
    %v1440 = vmul.f32 0.5, %v1439
    %v1441 = vsub.f32 1.5, %v1440
    %v1442 = vmul.f32 %v1437, %v1441
    %v1443 = vmul.f32 %v1307, %v1442
    %vm1444 = vcmp.eq.f32.partialorder %v1307, inf
    %v1445 = vsel %vm1444, %v1307, %v1443
    %vm1446 = vcmp.eq.f32.partialorder %v1307, 0.0
    %v1447 = vand.u32 %v1307, 2147483648
    %v1448 = vsel %vm1446, %v1447, %v1445
    %v1449 = vrsqrt.pop %v1308
    %v1450 = vmul.f32 %v1449, %v1308
    %v1451 = vmul.f32 %v1450, %v1449
    %v1452 = vmul.f32 0.5, %v1451
    %v1453 = vsub.f32 1.5, %v1452
    %v1454 = vmul.f32 %v1449, %v1453
    %v1455 = vmul.f32 %v1308, %v1454
    %vm1456 = vcmp.eq.f32.partialorder %v1308, inf
    %v1457 = vsel %vm1456, %v1308, %v1455
    %vm1458 = vcmp.eq.f32.partialorder %v1308, 0.0
    %v1459 = vand.u32 %v1308, 2147483648
    %v1460 = vsel %vm1458, %v1459, %v1457
    %v1461 = vrsqrt.pop %v1309
    %v1462 = vmul.f32 %v1461, %v1309
    %v1463 = vmul.f32 %v1462, %v1461
    %v1464 = vmul.f32 0.5, %v1463
    %v1465 = vsub.f32 1.5, %v1464
    %v1466 = vmul.f32 %v1461, %v1465
    %v1467 = vmul.f32 %v1309, %v1466
    %vm1468 = vcmp.eq.f32.partialorder %v1309, inf
    %v1469 = vsel %vm1468, %v1309, %v1467
    %vm1470 = vcmp.eq.f32.partialorder %v1309, 0.0
    %v1471 = vand.u32 %v1309, 2147483648
    %v1472 = vsel %vm1470, %v1471, %v1469
    %v1473 = vrsqrt.pop %v1310
    %v1474 = vmul.f32 %v1473, %v1310
    %v1475 = vmul.f32 %v1474, %v1473
    %v1476 = vmul.f32 0.5, %v1475
    %v1477 = vsub.f32 1.5, %v1476
    %v1478 = vmul.f32 %v1473, %v1477
    %v1479 = vmul.f32 %v1310, %v1478
    %vm1480 = vcmp.eq.f32.partialorder %v1310, inf
    %v1481 = vsel %vm1480, %v1310, %v1479
    %vm1482 = vcmp.eq.f32.partialorder %v1310, 0.0
    %v1483 = vand.u32 %v1310, 2147483648
    %v1484 = vsel %vm1482, %v1483, %v1481
    %v1485 = vrsqrt.pop %v1311
    %v1486 = vmul.f32 %v1485, %v1311
    %v1487 = vmul.f32 %v1486, %v1485
    %v1488 = vmul.f32 0.5, %v1487
    %v1489 = vsub.f32 1.5, %v1488
    %v1490 = vmul.f32 %v1485, %v1489
    %v1491 = vmul.f32 %v1311, %v1490
    %vm1492 = vcmp.eq.f32.partialorder %v1311, inf
    %v1493 = vsel %vm1492, %v1311, %v1491
    %vm1494 = vcmp.eq.f32.partialorder %v1311, 0.0
    %v1495 = vand.u32 %v1311, 2147483648
    %v1496 = vsel %vm1494, %v1495, %v1493
    %v1497 = vrsqrt.pop %v1312
    %v1498 = vmul.f32 %v1497, %v1312
    %v1499 = vmul.f32 %v1498, %v1497
    %v1500 = vmul.f32 0.5, %v1499
    %v1501 = vsub.f32 1.5, %v1500
    %v1502 = vmul.f32 %v1497, %v1501
    %v1503 = vmul.f32 %v1312, %v1502
    %vm1504 = vcmp.eq.f32.partialorder %v1312, inf
    %v1505 = vsel %vm1504, %v1312, %v1503
    %vm1506 = vcmp.eq.f32.partialorder %v1312, 0.0
    %v1507 = vand.u32 %v1312, 2147483648
    %v1508 = vsel %vm1506, %v1507, %v1505
    %v1509 = vrsqrt.pop %v1313
    %v1510 = vmul.f32 %v1509, %v1313
    %v1511 = vmul.f32 %v1510, %v1509
    %v1512 = vmul.f32 0.5, %v1511
    %v1513 = vsub.f32 1.5, %v1512
    %v1514 = vmul.f32 %v1509, %v1513
    %v1515 = vmul.f32 %v1313, %v1514
    %vm1516 = vcmp.eq.f32.partialorder %v1313, inf
    %v1517 = vsel %vm1516, %v1313, %v1515
    %vm1518 = vcmp.eq.f32.partialorder %v1313, 0.0
    %v1519 = vand.u32 %v1313, 2147483648
    %v1520 = vsel %vm1518, %v1519, %v1517
    %v1521 = vrsqrt.pop %v1314
    %v1522 = vmul.f32 %v1521, %v1314
    %v1523 = vmul.f32 %v1522, %v1521
    %v1524 = vmul.f32 0.5, %v1523
    %v1525 = vsub.f32 1.5, %v1524
    %v1526 = vmul.f32 %v1521, %v1525
    %v1527 = vmul.f32 %v1314, %v1526
    %vm1528 = vcmp.eq.f32.partialorder %v1314, inf
    %v1529 = vsel %vm1528, %v1314, %v1527
    %vm1530 = vcmp.eq.f32.partialorder %v1314, 0.0
    %v1531 = vand.u32 %v1314, 2147483648
    %v1532 = vsel %vm1530, %v1531, %v1529
    %v1533 = vrsqrt.pop %v1315
    %v1534 = vmul.f32 %v1533, %v1315
    %v1535 = vmul.f32 %v1534, %v1533
    %v1536 = vmul.f32 0.5, %v1535
    %v1537 = vsub.f32 1.5, %v1536
    %v1538 = vmul.f32 %v1533, %v1537
    %v1539 = vmul.f32 %v1315, %v1538
    %vm1540 = vcmp.eq.f32.partialorder %v1315, inf
    %v1541 = vsel %vm1540, %v1315, %v1539
    %vm1542 = vcmp.eq.f32.partialorder %v1315, 0.0
    %v1543 = vand.u32 %v1315, 2147483648
    %v1544 = vsel %vm1542, %v1543, %v1541
    %v1545 = vrsqrt.pop %v1316
    %v1546 = vmul.f32 %v1545, %v1316
    %v1547 = vmul.f32 %v1546, %v1545
    %v1548 = vmul.f32 0.5, %v1547
    %v1549 = vsub.f32 1.5, %v1548
    %v1550 = vmul.f32 %v1545, %v1549
    %v1551 = vmul.f32 %v1316, %v1550
    %vm1552 = vcmp.eq.f32.partialorder %v1316, inf
    %v1553 = vsel %vm1552, %v1316, %v1551
    %vm1554 = vcmp.eq.f32.partialorder %v1316, 0.0
    %v1555 = vand.u32 %v1316, 2147483648
    %v1556 = vsel %vm1554, %v1555, %v1553
    %v1557 = vrsqrt.pop %v1317
    %v1558 = vmul.f32 %v1557, %v1317
    %v1559 = vmul.f32 %v1558, %v1557
    %v1560 = vmul.f32 0.5, %v1559
    %v1561 = vsub.f32 1.5, %v1560
    %v1562 = vmul.f32 %v1557, %v1561
    %v1563 = vmul.f32 %v1317, %v1562
    %vm1564 = vcmp.eq.f32.partialorder %v1317, inf
    %v1565 = vsel %vm1564, %v1317, %v1563
    %vm1566 = vcmp.eq.f32.partialorder %v1317, 0.0
    %v1567 = vand.u32 %v1317, 2147483648
    %v1568 = vsel %vm1566, %v1567, %v1565
    %v1569 = vrsqrt.pop %v1318
    %v1570 = vmul.f32 %v1569, %v1318
    %v1571 = vmul.f32 %v1570, %v1569
    %v1572 = vmul.f32 0.5, %v1571
    %v1573 = vsub.f32 1.5, %v1572
    %v1574 = vmul.f32 %v1569, %v1573
    %v1575 = vmul.f32 %v1318, %v1574
    %vm1576 = vcmp.eq.f32.partialorder %v1318, inf
    %v1577 = vsel %vm1576, %v1318, %v1575
    %vm1578 = vcmp.eq.f32.partialorder %v1318, 0.0
    %v1579 = vand.u32 %v1318, 2147483648
    %v1580 = vsel %vm1578, %v1579, %v1577
    %v1581 = vrsqrt.pop %v1319
    %v1582 = vmul.f32 %v1581, %v1319
    %v1583 = vmul.f32 %v1582, %v1581
    %v1584 = vmul.f32 0.5, %v1583
    %v1585 = vsub.f32 1.5, %v1584
    %v1586 = vmul.f32 %v1581, %v1585
    %v1587 = vmul.f32 %v1319, %v1586
    %vm1588 = vcmp.eq.f32.partialorder %v1319, inf
    %v1589 = vsel %vm1588, %v1319, %v1587
    %vm1590 = vcmp.eq.f32.partialorder %v1319, 0.0
    %v1591 = vand.u32 %v1319, 2147483648
    %v1592 = vsel %vm1590, %v1591, %v1589
    %v1593 = vrsqrt.pop %v1320
    %v1594 = vmul.f32 %v1593, %v1320
    %v1595 = vmul.f32 %v1594, %v1593
    %v1596 = vmul.f32 0.5, %v1595
    %v1597 = vsub.f32 1.5, %v1596
    %v1598 = vmul.f32 %v1593, %v1597
    %v1599 = vmul.f32 %v1320, %v1598
    %vm1600 = vcmp.eq.f32.partialorder %v1320, inf
    %v1601 = vsel %vm1600, %v1320, %v1599
    %vm1602 = vcmp.eq.f32.partialorder %v1320, 0.0
    %v1603 = vand.u32 %v1320, 2147483648
    %v1604 = vsel %vm1602, %v1603, %v1601
    %v1605 = vrsqrt.pop %v1321
    %v1606 = vmul.f32 %v1605, %v1321
    %v1607 = vmul.f32 %v1606, %v1605
    %v1608 = vmul.f32 0.5, %v1607
    %v1609 = vsub.f32 1.5, %v1608
    %v1610 = vmul.f32 %v1605, %v1609
    %v1611 = vmul.f32 %v1321, %v1610
    %vm1612 = vcmp.eq.f32.partialorder %v1321, inf
    %v1613 = vsel %vm1612, %v1321, %v1611
    %vm1614 = vcmp.eq.f32.partialorder %v1321, 0.0
    %v1615 = vand.u32 %v1321, 2147483648
    %v1616 = vsel %vm1614, %v1615, %v1613
    %v1617 = vrsqrt.pop %v1322
    %v1618 = vmul.f32 %v1617, %v1322
    %v1619 = vmul.f32 %v1618, %v1617
    %v1620 = vmul.f32 0.5, %v1619
    %v1621 = vsub.f32 1.5, %v1620
    %v1622 = vmul.f32 %v1617, %v1621
    %v1623 = vmul.f32 %v1322, %v1622
    %vm1624 = vcmp.eq.f32.partialorder %v1322, inf
    %v1625 = vsel %vm1624, %v1322, %v1623
    %vm1626 = vcmp.eq.f32.partialorder %v1322, 0.0
    %v1627 = vand.u32 %v1322, 2147483648
    %v1628 = vsel %vm1626, %v1627, %v1625
    %v1629 = vrsqrt.pop %v1323
    %v1630 = vmul.f32 %v1629, %v1323
    %v1631 = vmul.f32 %v1630, %v1629
    %v1632 = vmul.f32 0.5, %v1631
    %v1633 = vsub.f32 1.5, %v1632
    %v1634 = vmul.f32 %v1629, %v1633
    %v1635 = vmul.f32 %v1323, %v1634
    %vm1636 = vcmp.eq.f32.partialorder %v1323, inf
    %v1637 = vsel %vm1636, %v1323, %v1635
    %vm1638 = vcmp.eq.f32.partialorder %v1323, 0.0
    %v1639 = vand.u32 %v1323, 2147483648
    %v1640 = vsel %vm1638, %v1639, %v1637
    %v1641 = vrsqrt.pop %v1324
    %v1642 = vmul.f32 %v1641, %v1324
    %v1643 = vmul.f32 %v1642, %v1641
    %v1644 = vmul.f32 0.5, %v1643
    %v1645 = vsub.f32 1.5, %v1644
    %v1646 = vmul.f32 %v1641, %v1645
    %v1647 = vmul.f32 %v1324, %v1646
    %vm1648 = vcmp.eq.f32.partialorder %v1324, inf
    %v1649 = vsel %vm1648, %v1324, %v1647
    %vm1650 = vcmp.eq.f32.partialorder %v1324, 0.0
    %v1651 = vand.u32 %v1324, 2147483648
    %v1652 = vsel %vm1650, %v1651, %v1649
    %v1653 = vrsqrt.pop %v1325
    %v1654 = vmul.f32 %v1653, %v1325
    %v1655 = vmul.f32 %v1654, %v1653
    %v1656 = vmul.f32 0.5, %v1655
    %v1657 = vsub.f32 1.5, %v1656
    %v1658 = vmul.f32 %v1653, %v1657
    %v1659 = vmul.f32 %v1325, %v1658
    %vm1660 = vcmp.eq.f32.partialorder %v1325, inf
    %v1661 = vsel %vm1660, %v1325, %v1659
    %vm1662 = vcmp.eq.f32.partialorder %v1325, 0.0
    %v1663 = vand.u32 %v1325, 2147483648
    %v1664 = vsel %vm1662, %v1663, %v1661
    %v1665 = vrsqrt.pop %v1326
    %v1666 = vmul.f32 %v1665, %v1326
    %v1667 = vmul.f32 %v1666, %v1665
    %v1668 = vmul.f32 0.5, %v1667
    %v1669 = vsub.f32 1.5, %v1668
    %v1670 = vmul.f32 %v1665, %v1669
    %v1671 = vmul.f32 %v1326, %v1670
    %vm1672 = vcmp.eq.f32.partialorder %v1326, inf
    %v1673 = vsel %vm1672, %v1326, %v1671
    %vm1674 = vcmp.eq.f32.partialorder %v1326, 0.0
    %v1675 = vand.u32 %v1326, 2147483648
    %v1676 = vsel %vm1674, %v1675, %v1673
    %v1677 = vrsqrt.pop %v1327
    %v1678 = vmul.f32 %v1677, %v1327
    %v1679 = vmul.f32 %v1678, %v1677
    %v1680 = vmul.f32 0.5, %v1679
    %v1681 = vsub.f32 1.5, %v1680
    %v1682 = vmul.f32 %v1677, %v1681
    %v1683 = vmul.f32 %v1327, %v1682
    %vm1684 = vcmp.eq.f32.partialorder %v1327, inf
    %v1685 = vsel %vm1684, %v1327, %v1683
    %vm1686 = vcmp.eq.f32.partialorder %v1327, 0.0
    %v1687 = vand.u32 %v1327, 2147483648
    %v1688 = vsel %vm1686, %v1687, %v1685
    %v1689 = vrsqrt.pop %v1328
    %v1690 = vmul.f32 %v1689, %v1328
    %v1691 = vmul.f32 %v1690, %v1689
    %v1692 = vmul.f32 0.5, %v1691
    %v1693 = vsub.f32 1.5, %v1692
    %v1694 = vmul.f32 %v1689, %v1693
    %v1695 = vmul.f32 %v1328, %v1694
    %vm1696 = vcmp.eq.f32.partialorder %v1328, inf
    %v1697 = vsel %vm1696, %v1328, %v1695
    %vm1698 = vcmp.eq.f32.partialorder %v1328, 0.0
    %v1699 = vand.u32 %v1328, 2147483648
    %v1700 = vsel %vm1698, %v1699, %v1697
    %v1701 = vrsqrt.pop %v1329
    %v1702 = vmul.f32 %v1701, %v1329
    %v1703 = vmul.f32 %v1702, %v1701
    %v1704 = vmul.f32 0.5, %v1703
    %v1705 = vsub.f32 1.5, %v1704
    %v1706 = vmul.f32 %v1701, %v1705
    %v1707 = vmul.f32 %v1329, %v1706
    %vm1708 = vcmp.eq.f32.partialorder %v1329, inf
    %v1709 = vsel %vm1708, %v1329, %v1707
    %vm1710 = vcmp.eq.f32.partialorder %v1329, 0.0
    %v1711 = vand.u32 %v1329, 2147483648
    %v1712 = vsel %vm1710, %v1711, %v1709
    %v1713 = vrsqrt.pop %v1330
    %v1714 = vmul.f32 %v1713, %v1330
    %v1715 = vmul.f32 %v1714, %v1713
    %v1716 = vmul.f32 0.5, %v1715
    %v1717 = vsub.f32 1.5, %v1716
    %v1718 = vmul.f32 %v1713, %v1717
    %v1719 = vmul.f32 %v1330, %v1718
    %vm1720 = vcmp.eq.f32.partialorder %v1330, inf
    %v1721 = vsel %vm1720, %v1330, %v1719
    %vm1722 = vcmp.eq.f32.partialorder %v1330, 0.0
    %v1723 = vand.u32 %v1330, 2147483648
    %v1724 = vsel %vm1722, %v1723, %v1721
    %v1725 = vrsqrt.pop %v1331
    %v1726 = vmul.f32 %v1725, %v1331
    %v1727 = vmul.f32 %v1726, %v1725
    %v1728 = vmul.f32 0.5, %v1727
    %v1729 = vsub.f32 1.5, %v1728
    %v1730 = vmul.f32 %v1725, %v1729
    %v1731 = vmul.f32 %v1331, %v1730
    %vm1732 = vcmp.eq.f32.partialorder %v1331, inf
    %v1733 = vsel %vm1732, %v1331, %v1731
    %vm1734 = vcmp.eq.f32.partialorder %v1331, 0.0
    %v1735 = vand.u32 %v1331, 2147483648
    %v1736 = vsel %vm1734, %v1735, %v1733
    %v1737 = vrsqrt.pop %v1332
    %v1738 = vmul.f32 %v1737, %v1332
    %v1739 = vmul.f32 %v1738, %v1737
    %v1740 = vmul.f32 0.5, %v1739
    %v1741 = vsub.f32 1.5, %v1740
    %v1742 = vmul.f32 %v1737, %v1741
    %v1743 = vmul.f32 %v1332, %v1742
    %vm1744 = vcmp.eq.f32.partialorder %v1332, inf
    %v1745 = vsel %vm1744, %v1332, %v1743
    %vm1746 = vcmp.eq.f32.partialorder %v1332, 0.0
    %v1747 = vand.u32 %v1332, 2147483648
    %v1748 = vsel %vm1746, %v1747, %v1745
    %v1749 = vrsqrt.pop %v1333
    %v1750 = vmul.f32 %v1749, %v1333
    %v1751 = vmul.f32 %v1750, %v1749
    %v1752 = vmul.f32 0.5, %v1751
    %v1753 = vsub.f32 1.5, %v1752
    %v1754 = vmul.f32 %v1749, %v1753
    %v1755 = vmul.f32 %v1333, %v1754
    %vm1756 = vcmp.eq.f32.partialorder %v1333, inf
    %v1757 = vsel %vm1756, %v1333, %v1755
    %vm1758 = vcmp.eq.f32.partialorder %v1333, 0.0
    %v1759 = vand.u32 %v1333, 2147483648
    %v1760 = vsel %vm1758, %v1759, %v1757
    %v1761 = vrsqrt.pop %v1334
    %v1762 = vmul.f32 %v1761, %v1334
    %v1763 = vmul.f32 %v1762, %v1761
    %v1764 = vmul.f32 0.5, %v1763
    %v1765 = vsub.f32 1.5, %v1764
    %v1766 = vmul.f32 %v1761, %v1765
    %v1767 = vmul.f32 %v1334, %v1766
    %vm1768 = vcmp.eq.f32.partialorder %v1334, inf
    %v1769 = vsel %vm1768, %v1334, %v1767
    %vm1770 = vcmp.eq.f32.partialorder %v1334, 0.0
    %v1771 = vand.u32 %v1334, 2147483648
    %v1772 = vsel %vm1770, %v1771, %v1769
    %v1773 = vrsqrt.pop %v1335
    %v1774 = vmul.f32 %v1773, %v1335
    %v1775 = vmul.f32 %v1774, %v1773
    %v1776 = vmul.f32 0.5, %v1775
    %v1777 = vsub.f32 1.5, %v1776
    %v1778 = vmul.f32 %v1773, %v1777
    %v1779 = vmul.f32 %v1335, %v1778
    %vm1780 = vcmp.eq.f32.partialorder %v1335, inf
    %v1781 = vsel %vm1780, %v1335, %v1779
    %vm1782 = vcmp.eq.f32.partialorder %v1335, 0.0
    %v1783 = vand.u32 %v1335, 2147483648
    %v1784 = vsel %vm1782, %v1783, %v1781
    %v1785 = vrsqrt.pop %v1336
    %v1786 = vmul.f32 %v1785, %v1336
    %v1787 = vmul.f32 %v1786, %v1785
    %v1788 = vmul.f32 0.5, %v1787
    %v1789 = vsub.f32 1.5, %v1788
    %v1790 = vmul.f32 %v1785, %v1789
    %v1791 = vmul.f32 %v1336, %v1790
    %vm1792 = vcmp.eq.f32.partialorder %v1336, inf
    %v1793 = vsel %vm1792, %v1336, %v1791
    %vm1794 = vcmp.eq.f32.partialorder %v1336, 0.0
    %v1795 = vand.u32 %v1336, 2147483648
    %v1796 = vsel %vm1794, %v1795, %v1793
    %v1797 = vrsqrt.pop %v1337
    %v1798 = vmul.f32 %v1797, %v1337
    %v1799 = vmul.f32 %v1798, %v1797
    %v1800 = vmul.f32 0.5, %v1799
    %v1801 = vsub.f32 1.5, %v1800
    %v1802 = vmul.f32 %v1797, %v1801
    %v1803 = vmul.f32 %v1337, %v1802
    %vm1804 = vcmp.eq.f32.partialorder %v1337, inf
    %v1805 = vsel %vm1804, %v1337, %v1803
    %vm1806 = vcmp.eq.f32.partialorder %v1337, 0.0
    %v1807 = vand.u32 %v1337, 2147483648
    %v1808 = vsel %vm1806, %v1807, %v1805
    %v1809 = vrsqrt.pop %v1338
    %v1810 = vmul.f32 %v1809, %v1338
    %v1811 = vmul.f32 %v1810, %v1809
    %v1812 = vmul.f32 0.5, %v1811
    %v1813 = vsub.f32 1.5, %v1812
    %v1814 = vmul.f32 %v1809, %v1813
    %v1815 = vmul.f32 %v1338, %v1814
    %vm1816 = vcmp.eq.f32.partialorder %v1338, inf
    %v1817 = vsel %vm1816, %v1338, %v1815
    %vm1818 = vcmp.eq.f32.partialorder %v1338, 0.0
    %v1819 = vand.u32 %v1338, 2147483648
    %v1820 = vsel %vm1818, %v1819, %v1817
    %v1821 = vrsqrt.pop %v1339
    %v1822 = vmul.f32 %v1821, %v1339
    %v1823 = vmul.f32 %v1822, %v1821
    %v1824 = vmul.f32 0.5, %v1823
    %v1825 = vsub.f32 1.5, %v1824
    %v1826 = vmul.f32 %v1821, %v1825
    %v1827 = vmul.f32 %v1339, %v1826
    %vm1828 = vcmp.eq.f32.partialorder %v1339, inf
    %v1829 = vsel %vm1828, %v1339, %v1827
    %vm1830 = vcmp.eq.f32.partialorder %v1339, 0.0
    %v1831 = vand.u32 %v1339, 2147483648
    %v1832 = vsel %vm1830, %v1831, %v1829
    %v1833 = vrsqrt.pop %v1340
    %v1834 = vmul.f32 %v1833, %v1340
    %v1835 = vmul.f32 %v1834, %v1833
    %v1836 = vmul.f32 0.5, %v1835
    %v1837 = vsub.f32 1.5, %v1836
    %v1838 = vmul.f32 %v1833, %v1837
    %v1839 = vmul.f32 %v1340, %v1838
    %vm1840 = vcmp.eq.f32.partialorder %v1340, inf
    %v1841 = vsel %vm1840, %v1340, %v1839
    %vm1842 = vcmp.eq.f32.partialorder %v1340, 0.0
    %v1843 = vand.u32 %v1340, 2147483648
    %v1844 = vsel %vm1842, %v1843, %v1841
    %v1845 = vrsqrt.pop %v1341
    %v1846 = vmul.f32 %v1845, %v1341
    %v1847 = vmul.f32 %v1846, %v1845
    %v1848 = vmul.f32 0.5, %v1847
    %v1849 = vsub.f32 1.5, %v1848
    %v1850 = vmul.f32 %v1845, %v1849
    %v1851 = vmul.f32 %v1341, %v1850
    %vm1852 = vcmp.eq.f32.partialorder %v1341, inf
    %v1853 = vsel %vm1852, %v1341, %v1851
    %vm1854 = vcmp.eq.f32.partialorder %v1341, 0.0
    %v1855 = vand.u32 %v1341, 2147483648
    %v1856 = vsel %vm1854, %v1855, %v1853
    %v1857 = vrsqrt.pop %v1342
    %v1858 = vmul.f32 %v1857, %v1342
    %v1859 = vmul.f32 %v1858, %v1857
    %v1860 = vmul.f32 0.5, %v1859
    %v1861 = vsub.f32 1.5, %v1860
    %v1862 = vmul.f32 %v1857, %v1861
    %v1863 = vmul.f32 %v1342, %v1862
    %vm1864 = vcmp.eq.f32.partialorder %v1342, inf
    %v1865 = vsel %vm1864, %v1342, %v1863
    %vm1866 = vcmp.eq.f32.partialorder %v1342, 0.0
    %v1867 = vand.u32 %v1342, 2147483648
    %v1868 = vsel %vm1866, %v1867, %v1865
    %v1869 = vrsqrt.pop %v1343
    %v1870 = vmul.f32 %v1869, %v1343
    %v1871 = vmul.f32 %v1870, %v1869
    %v1872 = vmul.f32 0.5, %v1871
    %v1873 = vsub.f32 1.5, %v1872
    %v1874 = vmul.f32 %v1869, %v1873
    %v1875 = vmul.f32 %v1343, %v1874
    %vm1876 = vcmp.eq.f32.partialorder %v1343, inf
    %v1877 = vsel %vm1876, %v1343, %v1875
    %vm1878 = vcmp.eq.f32.partialorder %v1343, 0.0
    %v1879 = vand.u32 %v1343, 2147483648
    %v1880 = vsel %vm1878, %v1879, %v1877
    %v1881 = vrsqrt.pop %v1344
    %v1882 = vmul.f32 %v1881, %v1344
    %v1883 = vmul.f32 %v1882, %v1881
    %v1884 = vmul.f32 0.5, %v1883
    %v1885 = vsub.f32 1.5, %v1884
    %v1886 = vmul.f32 %v1881, %v1885
    %v1887 = vmul.f32 %v1344, %v1886
    %vm1888 = vcmp.eq.f32.partialorder %v1344, inf
    %v1889 = vsel %vm1888, %v1344, %v1887
    %vm1890 = vcmp.eq.f32.partialorder %v1344, 0.0
    %v1891 = vand.u32 %v1344, 2147483648
    %v1892 = vsel %vm1890, %v1891, %v1889
    %v1893 = vrsqrt.pop %v1345
    %v1894 = vmul.f32 %v1893, %v1345
    %v1895 = vmul.f32 %v1894, %v1893
    %v1896 = vmul.f32 0.5, %v1895
    %v1897 = vsub.f32 1.5, %v1896
    %v1898 = vmul.f32 %v1893, %v1897
    %v1899 = vmul.f32 %v1345, %v1898
    %vm1900 = vcmp.eq.f32.partialorder %v1345, inf
    %v1901 = vsel %vm1900, %v1345, %v1899
    %vm1902 = vcmp.eq.f32.partialorder %v1345, 0.0
    %v1903 = vand.u32 %v1345, 2147483648
    %v1904 = vsel %vm1902, %v1903, %v1901
    %v1905 = vrsqrt.pop %v1346
    %v1906 = vmul.f32 %v1905, %v1346
    %v1907 = vmul.f32 %v1906, %v1905
    %v1908 = vmul.f32 0.5, %v1907
    %v1909 = vsub.f32 1.5, %v1908
    %v1910 = vmul.f32 %v1905, %v1909
    %v1911 = vmul.f32 %v1346, %v1910
    %vm1912 = vcmp.eq.f32.partialorder %v1346, inf
    %v1913 = vsel %vm1912, %v1346, %v1911
    %vm1914 = vcmp.eq.f32.partialorder %v1346, 0.0
    %v1915 = vand.u32 %v1346, 2147483648
    %v1916 = vsel %vm1914, %v1915, %v1913
    %v1917 = vrsqrt.pop %v1347
    %v1918 = vmul.f32 %v1917, %v1347
    %v1919 = vmul.f32 %v1918, %v1917
    %v1920 = vmul.f32 0.5, %v1919
    %v1921 = vsub.f32 1.5, %v1920
    %v1922 = vmul.f32 %v1917, %v1921
    %v1923 = vmul.f32 %v1347, %v1922
    %vm1924 = vcmp.eq.f32.partialorder %v1347, inf
    %v1925 = vsel %vm1924, %v1347, %v1923
    %vm1926 = vcmp.eq.f32.partialorder %v1347, 0.0
    %v1927 = vand.u32 %v1347, 2147483648
    %v1928 = vsel %vm1926, %v1927, %v1925
    %v1929 = vrsqrt.pop %v1348
    %v1930 = vmul.f32 %v1929, %v1348
    %v1931 = vmul.f32 %v1930, %v1929
    %v1932 = vmul.f32 0.5, %v1931
    %v1933 = vsub.f32 1.5, %v1932
    %v1934 = vmul.f32 %v1929, %v1933
    %v1935 = vmul.f32 %v1348, %v1934
    %vm1936 = vcmp.eq.f32.partialorder %v1348, inf
    %v1937 = vsel %vm1936, %v1348, %v1935
    %vm1938 = vcmp.eq.f32.partialorder %v1348, 0.0
    %v1939 = vand.u32 %v1348, 2147483648
    %v1940 = vsel %vm1938, %v1939, %v1937
    %v1941 = vrsqrt.pop %v1349
    %v1942 = vmul.f32 %v1941, %v1349
    %v1943 = vmul.f32 %v1942, %v1941
    %v1944 = vmul.f32 0.5, %v1943
    %v1945 = vsub.f32 1.5, %v1944
    %v1946 = vmul.f32 %v1941, %v1945
    %v1947 = vmul.f32 %v1349, %v1946
    %vm1948 = vcmp.eq.f32.partialorder %v1349, inf
    %v1949 = vsel %vm1948, %v1349, %v1947
    %vm1950 = vcmp.eq.f32.partialorder %v1349, 0.0
    %v1951 = vand.u32 %v1349, 2147483648
    %v1952 = vsel %vm1950, %v1951, %v1949
    %v1953 = vrsqrt.pop %v1350
    %v1954 = vmul.f32 %v1953, %v1350
    %v1955 = vmul.f32 %v1954, %v1953
    %v1956 = vmul.f32 0.5, %v1955
    %v1957 = vsub.f32 1.5, %v1956
    %v1958 = vmul.f32 %v1953, %v1957
    %v1959 = vmul.f32 %v1350, %v1958
    %vm1960 = vcmp.eq.f32.partialorder %v1350, inf
    %v1961 = vsel %vm1960, %v1350, %v1959
    %vm1962 = vcmp.eq.f32.partialorder %v1350, 0.0
    %v1963 = vand.u32 %v1350, 2147483648
    %v1964 = vsel %vm1962, %v1963, %v1961
    %v1965 = vrsqrt.pop %v1351
    %v1966 = vmul.f32 %v1965, %v1351
    %v1967 = vmul.f32 %v1966, %v1965
    %v1968 = vmul.f32 0.5, %v1967
    %v1969 = vsub.f32 1.5, %v1968
    %v1970 = vmul.f32 %v1965, %v1969
    %v1971 = vmul.f32 %v1351, %v1970
    %vm1972 = vcmp.eq.f32.partialorder %v1351, inf
    %v1973 = vsel %vm1972, %v1351, %v1971
    %vm1974 = vcmp.eq.f32.partialorder %v1351, 0.0
    %v1975 = vand.u32 %v1351, 2147483648
    %v1976 = vsel %vm1974, %v1975, %v1973
    %v1977 = vrsqrt.pop %v1352
    %v1978 = vmul.f32 %v1977, %v1352
    %v1979 = vmul.f32 %v1978, %v1977
    %v1980 = vmul.f32 0.5, %v1979
    %v1981 = vsub.f32 1.5, %v1980
    %v1982 = vmul.f32 %v1977, %v1981
    %v1983 = vmul.f32 %v1352, %v1982
    %vm1984 = vcmp.eq.f32.partialorder %v1352, inf
    %v1985 = vsel %vm1984, %v1352, %v1983
    %vm1986 = vcmp.eq.f32.partialorder %v1352, 0.0
    %v1987 = vand.u32 %v1352, 2147483648
    %v1988 = vsel %vm1986, %v1987, %v1985
    %v1989 = vrsqrt.pop %v1353
    %v1990 = vmul.f32 %v1989, %v1353
    %v1991 = vmul.f32 %v1990, %v1989
    %v1992 = vmul.f32 0.5, %v1991
    %v1993 = vsub.f32 1.5, %v1992
    %v1994 = vmul.f32 %v1989, %v1993
    %v1995 = vmul.f32 %v1353, %v1994
    %vm1996 = vcmp.eq.f32.partialorder %v1353, inf
    %v1997 = vsel %vm1996, %v1353, %v1995
    %vm1998 = vcmp.eq.f32.partialorder %v1353, 0.0
    %v1999 = vand.u32 %v1353, 2147483648
    %v2000 = vsel %vm1998, %v1999, %v1997
    %v2001 = vrsqrt.pop %v1354
    %v2002 = vmul.f32 %v2001, %v1354
    %v2003 = vmul.f32 %v2002, %v2001
    %v2004 = vmul.f32 0.5, %v2003
    %v2005 = vsub.f32 1.5, %v2004
    %v2006 = vmul.f32 %v2001, %v2005
    %v2007 = vmul.f32 %v1354, %v2006
    %vm2008 = vcmp.eq.f32.partialorder %v1354, inf
    %v2009 = vsel %vm2008, %v1354, %v2007
    %vm2010 = vcmp.eq.f32.partialorder %v1354, 0.0
    %v2011 = vand.u32 %v1354, 2147483648
    %v2012 = vsel %vm2010, %v2011, %v2009
    %v2013 = vrsqrt.pop %v1355
    %v2014 = vmul.f32 %v2013, %v1355
    %v2015 = vmul.f32 %v2014, %v2013
    %v2016 = vmul.f32 0.5, %v2015
    %v2017 = vsub.f32 1.5, %v2016
    %v2018 = vmul.f32 %v2013, %v2017
    %v2019 = vmul.f32 %v1355, %v2018
    %vm2020 = vcmp.eq.f32.partialorder %v1355, inf
    %v2021 = vsel %vm2020, %v1355, %v2019
    %vm2022 = vcmp.eq.f32.partialorder %v1355, 0.0
    %v2023 = vand.u32 %v1355, 2147483648
    %v2024 = vsel %vm2022, %v2023, %v2021
    %v2025 = vrsqrt.pop %v1356
    %v2026 = vmul.f32 %v2025, %v1356
    %v2027 = vmul.f32 %v2026, %v2025
    %v2028 = vmul.f32 0.5, %v2027
    %v2029 = vsub.f32 1.5, %v2028
    %v2030 = vmul.f32 %v2025, %v2029
    %v2031 = vmul.f32 %v1356, %v2030
    %vm2032 = vcmp.eq.f32.partialorder %v1356, inf
    %v2033 = vsel %vm2032, %v1356, %v2031
    %vm2034 = vcmp.eq.f32.partialorder %v1356, 0.0
    %v2035 = vand.u32 %v1356, 2147483648
    %v2036 = vsel %vm2034, %v2035, %v2033
    %v2037 = vrsqrt.pop %v1357
    %v2038 = vmul.f32 %v2037, %v1357
    %v2039 = vmul.f32 %v2038, %v2037
    %v2040 = vmul.f32 0.5, %v2039
    %v2041 = vsub.f32 1.5, %v2040
    %v2042 = vmul.f32 %v2037, %v2041
    %v2043 = vmul.f32 %v1357, %v2042
    %vm2044 = vcmp.eq.f32.partialorder %v1357, inf
    %v2045 = vsel %vm2044, %v1357, %v2043
    %vm2046 = vcmp.eq.f32.partialorder %v1357, 0.0
    %v2047 = vand.u32 %v1357, 2147483648
    %v2048 = vsel %vm2046, %v2047, %v2045
    %v2049 = vrsqrt.pop %v1358
    %v2050 = vmul.f32 %v2049, %v1358
    %v2051 = vmul.f32 %v2050, %v2049
    %v2052 = vmul.f32 0.5, %v2051
    %v2053 = vsub.f32 1.5, %v2052
    %v2054 = vmul.f32 %v2049, %v2053
    %v2055 = vmul.f32 %v1358, %v2054
    %vm2056 = vcmp.eq.f32.partialorder %v1358, inf
    %v2057 = vsel %vm2056, %v1358, %v2055
    %vm2058 = vcmp.eq.f32.partialorder %v1358, 0.0
    %v2059 = vand.u32 %v1358, 2147483648
    %v2060 = vsel %vm2058, %v2059, %v2057
    %v2061 = vrsqrt.pop %v1359
    %v2062 = vmul.f32 %v2061, %v1359
    %v2063 = vmul.f32 %v2062, %v2061
    %v2064 = vmul.f32 0.5, %v2063
    %v2065 = vsub.f32 1.5, %v2064
    %v2066 = vmul.f32 %v2061, %v2065
    %v2067 = vmul.f32 %v1359, %v2066
    %vm2068 = vcmp.eq.f32.partialorder %v1359, inf
    %v2069 = vsel %vm2068, %v1359, %v2067
    %vm2070 = vcmp.eq.f32.partialorder %v1359, 0.0
    %v2071 = vand.u32 %v1359, 2147483648
    %v2072 = vsel %vm2070, %v2071, %v2069
    %v2073 = vrsqrt.pop %v1360
    %v2074 = vmul.f32 %v2073, %v1360
    %v2075 = vmul.f32 %v2074, %v2073
    %v2076 = vmul.f32 0.5, %v2075
    %v2077 = vsub.f32 1.5, %v2076
    %v2078 = vmul.f32 %v2073, %v2077
    %v2079 = vmul.f32 %v1360, %v2078
    %vm2080 = vcmp.eq.f32.partialorder %v1360, inf
    %v2081 = vsel %vm2080, %v1360, %v2079
    %vm2082 = vcmp.eq.f32.partialorder %v1360, 0.0
    %v2083 = vand.u32 %v1360, 2147483648
    %v2084 = vsel %vm2082, %v2083, %v2081
    %v2085 = vrsqrt.pop %v1361
    %v2086 = vmul.f32 %v2085, %v1361
    %v2087 = vmul.f32 %v2086, %v2085
    %v2088 = vmul.f32 0.5, %v2087
    %v2089 = vsub.f32 1.5, %v2088
    %v2090 = vmul.f32 %v2085, %v2089
    %v2091 = vmul.f32 %v1361, %v2090
    %vm2092 = vcmp.eq.f32.partialorder %v1361, inf
    %v2093 = vsel %vm2092, %v1361, %v2091
    %vm2094 = vcmp.eq.f32.partialorder %v1361, 0.0
    %v2095 = vand.u32 %v1361, 2147483648
    %v2096 = vsel %vm2094, %v2095, %v2093
    %v2097 = vrsqrt.pop %v1362
    %v2098 = vmul.f32 %v2097, %v1362
    %v2099 = vmul.f32 %v2098, %v2097
    %v2100 = vmul.f32 0.5, %v2099
    %v2101 = vsub.f32 1.5, %v2100
    %v2102 = vmul.f32 %v2097, %v2101
    %v2103 = vmul.f32 %v1362, %v2102
    %vm2104 = vcmp.eq.f32.partialorder %v1362, inf
    %v2105 = vsel %vm2104, %v1362, %v2103
    %vm2106 = vcmp.eq.f32.partialorder %v1362, 0.0
    %v2107 = vand.u32 %v1362, 2147483648
    %v2108 = vsel %vm2106, %v2107, %v2105
    %v2109 = vrsqrt.pop %v1363
    %v2110 = vmul.f32 %v2109, %v1363
    %v2111 = vmul.f32 %v2110, %v2109
    %v2112 = vmul.f32 0.5, %v2111
    %v2113 = vsub.f32 1.5, %v2112
    %v2114 = vmul.f32 %v2109, %v2113
    %v2115 = vmul.f32 %v1363, %v2114
    %vm2116 = vcmp.eq.f32.partialorder %v1363, inf
    %v2117 = vsel %vm2116, %v1363, %v2115
    %vm2118 = vcmp.eq.f32.partialorder %v1363, 0.0
    %v2119 = vand.u32 %v1363, 2147483648
    %v2120 = vsel %vm2118, %v2119, %v2117
    %v2121 = vrsqrt.pop %v1364
    %v2122 = vmul.f32 %v2121, %v1364
    %v2123 = vmul.f32 %v2122, %v2121
    %v2124 = vmul.f32 0.5, %v2123
    %v2125 = vsub.f32 1.5, %v2124
    %v2126 = vmul.f32 %v2121, %v2125
    %v2127 = vmul.f32 %v1364, %v2126
    %vm2128 = vcmp.eq.f32.partialorder %v1364, inf
    %v2129 = vsel %vm2128, %v1364, %v2127
    %vm2130 = vcmp.eq.f32.partialorder %v1364, 0.0
    %v2131 = vand.u32 %v1364, 2147483648
    %v2132 = vsel %vm2130, %v2131, %v2129
    %v2133 = vsel %vm1285, 1, 0
    %v2134 = vsel %vm1286, 1, 0
    %v2135 = vsel %vm1287, 1, 0
    %v2136 = vsel %vm1288, 1, 0
    %v2137 = vsel %vm1289, 1, 0
    %v2138 = vsel %vm1290, 1, 0
    %v2139 = vsel %vm1291, 1, 0
    %v2140 = vsel %vm1292, 1, 0
    %v2141 = vsel %vm1293, 1, 0
    %v2142 = vsel %vm1294, 1, 0
    %v2143 = vsel %vm1295, 1, 0
    %v2144 = vsel %vm1296, 1, 0
    %v2145 = vsel %vm1297, 1, 0
    %v2146 = vsel %vm1298, 1, 0
    %v2147 = vsel %vm1299, 1, 0
    %v2148 = vsel %vm1300, 1, 0
    %vm2149 = vcmp.eq.s32.totalorder %v2133, 1
    %vm2150 = vcmp.eq.s32.totalorder %v2134, 1
    %vm2151 = vcmp.eq.s32.totalorder %v2135, 1
    %vm2152 = vcmp.eq.s32.totalorder %v2136, 1
    %vm2153 = vcmp.eq.s32.totalorder %v2137, 1
    %vm2154 = vcmp.eq.s32.totalorder %v2138, 1
    %vm2155 = vcmp.eq.s32.totalorder %v2139, 1
    %vm2156 = vcmp.eq.s32.totalorder %v2140, 1
    %vm2157 = vcmp.eq.s32.totalorder %v2141, 1
    %vm2158 = vcmp.eq.s32.totalorder %v2142, 1
    %vm2159 = vcmp.eq.s32.totalorder %v2143, 1
    %vm2160 = vcmp.eq.s32.totalorder %v2144, 1
    %vm2161 = vcmp.eq.s32.totalorder %v2145, 1
    %vm2162 = vcmp.eq.s32.totalorder %v2146, 1
    %vm2163 = vcmp.eq.s32.totalorder %v2147, 1
    %vm2164 = vcmp.eq.s32.totalorder %v2148, 1
    %v2165 = vsel %vm2149, %v1376, 0.0
    %v2166 = vsel %vm2150, %v1388, 0.0
    %v2167 = vsel %vm2151, %v1400, 0.0
    %v2168 = vsel %vm2152, %v1412, 0.0
    %v2169 = vsel %vm2153, %v1424, 0.0
    %v2170 = vsel %vm2154, %v1436, 0.0
    %v2171 = vsel %vm2155, %v1448, 0.0
    %v2172 = vsel %vm2156, %v1460, 0.0
    %v2173 = vsel %vm2157, %v1472, 0.0
    %v2174 = vsel %vm2158, %v1484, 0.0
    %v2175 = vsel %vm2159, %v1496, 0.0
    %v2176 = vsel %vm2160, %v1508, 0.0
    %v2177 = vsel %vm2161, %v1520, 0.0
    %v2178 = vsel %vm2162, %v1532, 0.0
    %v2179 = vsel %vm2163, %v1544, 0.0
    %v2180 = vsel %vm2164, %v1556, 0.0
    %v2181 = vsel %vm2149, %v1568, 0.0
    %v2182 = vsel %vm2150, %v1580, 0.0
    %v2183 = vsel %vm2151, %v1592, 0.0
    %v2184 = vsel %vm2152, %v1604, 0.0
    %v2185 = vsel %vm2153, %v1616, 0.0
    %v2186 = vsel %vm2154, %v1628, 0.0
    %v2187 = vsel %vm2155, %v1640, 0.0
    %v2188 = vsel %vm2156, %v1652, 0.0
    %v2189 = vsel %vm2157, %v1664, 0.0
    %v2190 = vsel %vm2158, %v1676, 0.0
    %v2191 = vsel %vm2159, %v1688, 0.0
    %v2192 = vsel %vm2160, %v1700, 0.0
    %v2193 = vsel %vm2161, %v1712, 0.0
    %v2194 = vsel %vm2162, %v1724, 0.0
    %v2195 = vsel %vm2163, %v1736, 0.0
    %v2196 = vsel %vm2164, %v1748, 0.0
    %v2197 = vsel %vm2149, %v1760, 0.0
    %v2198 = vsel %vm2150, %v1772, 0.0
    %v2199 = vsel %vm2151, %v1784, 0.0
    %v2200 = vsel %vm2152, %v1796, 0.0
    %v2201 = vsel %vm2153, %v1808, 0.0
    %v2202 = vsel %vm2154, %v1820, 0.0
    %v2203 = vsel %vm2155, %v1832, 0.0
    %v2204 = vsel %vm2156, %v1844, 0.0
    %v2205 = vsel %vm2157, %v1856, 0.0
    %v2206 = vsel %vm2158, %v1868, 0.0
    %v2207 = vsel %vm2159, %v1880, 0.0
    %v2208 = vsel %vm2160, %v1892, 0.0
    %v2209 = vsel %vm2161, %v1904, 0.0
    %v2210 = vsel %vm2162, %v1916, 0.0
    %v2211 = vsel %vm2163, %v1928, 0.0
    %v2212 = vsel %vm2164, %v1940, 0.0
    %v2213 = vsel %vm2149, %v1952, 0.0
    %v2214 = vsel %vm2150, %v1964, 0.0
    %v2215 = vsel %vm2151, %v1976, 0.0
    %v2216 = vsel %vm2152, %v1988, 0.0
    %v2217 = vsel %vm2153, %v2000, 0.0
    %v2218 = vsel %vm2154, %v2012, 0.0
    %v2219 = vsel %vm2155, %v2024, 0.0
    %v2220 = vsel %vm2156, %v2036, 0.0
    %v2221 = vsel %vm2157, %v2048, 0.0
    %v2222 = vsel %vm2158, %v2060, 0.0
    %v2223 = vsel %vm2159, %v2072, 0.0
    %v2224 = vsel %vm2160, %v2084, 0.0
    %v2225 = vsel %vm2161, %v2096, 0.0
    %v2226 = vsel %vm2162, %v2108, 0.0
    %v2227 = vsel %vm2163, %v2120, 0.0
    %v2228 = vsel %vm2164, %v2132, 0.0
    %v2229 = vadd.f32 %v2165, %v2166
    %v2230 = vadd.f32 %v2229, %v2167
    %v2231 = vadd.f32 %v2230, %v2168
    %v2232 = vadd.f32 %v2231, %v2169
    %v2233 = vadd.f32 %v2232, %v2170
    %v2234 = vadd.f32 %v2233, %v2171
    %v2235 = vadd.f32 %v2234, %v2172
    %v2236 = vadd.f32 %v2235, %v2173
    %v2237 = vadd.f32 %v2236, %v2174
    %v2238 = vadd.f32 %v2237, %v2175
    %v2239 = vadd.f32 %v2238, %v2176
    %v2240 = vadd.f32 %v2239, %v2177
    %v2241 = vadd.f32 %v2240, %v2178
    %v2242 = vadd.f32 %v2241, %v2179
    %v2243 = vadd.f32 %v2242, %v2180
    %v2244 = vadd.f32 %v2243, %v2181
    %v2245 = vadd.f32 %v2244, %v2182
    %v2246 = vadd.f32 %v2245, %v2183
    %v2247 = vadd.f32 %v2246, %v2184
    %v2248 = vadd.f32 %v2247, %v2185
    %v2249 = vadd.f32 %v2248, %v2186
    %v2250 = vadd.f32 %v2249, %v2187
    %v2251 = vadd.f32 %v2250, %v2188
    %v2252 = vadd.f32 %v2251, %v2189
    %v2253 = vadd.f32 %v2252, %v2190
    %v2254 = vadd.f32 %v2253, %v2191
    %v2255 = vadd.f32 %v2254, %v2192
    %v2256 = vadd.f32 %v2255, %v2193
    %v2257 = vadd.f32 %v2256, %v2194
    %v2258 = vadd.f32 %v2257, %v2195
    %v2259 = vadd.f32 %v2258, %v2196
    %v2260 = vadd.f32 %v2259, %v2197
    %v2261 = vadd.f32 %v2260, %v2198
    %v2262 = vadd.f32 %v2261, %v2199
    %v2263 = vadd.f32 %v2262, %v2200
    %v2264 = vadd.f32 %v2263, %v2201
    %v2265 = vadd.f32 %v2264, %v2202
    %v2266 = vadd.f32 %v2265, %v2203
    %v2267 = vadd.f32 %v2266, %v2204
    %v2268 = vadd.f32 %v2267, %v2205
    %v2269 = vadd.f32 %v2268, %v2206
    %v2270 = vadd.f32 %v2269, %v2207
    %v2271 = vadd.f32 %v2270, %v2208
    %v2272 = vadd.f32 %v2271, %v2209
    %v2273 = vadd.f32 %v2272, %v2210
    %v2274 = vadd.f32 %v2273, %v2211
    %v2275 = vadd.f32 %v2274, %v2212
    %v2276 = vadd.f32 %v2275, %v2213
    %v2277 = vadd.f32 %v2276, %v2214
    %v2278 = vadd.f32 %v2277, %v2215
    %v2279 = vadd.f32 %v2278, %v2216
    %v2280 = vadd.f32 %v2279, %v2217
    %v2281 = vadd.f32 %v2280, %v2218
    %v2282 = vadd.f32 %v2281, %v2219
    %v2283 = vadd.f32 %v2282, %v2220
    %v2284 = vadd.f32 %v2283, %v2221
    %v2285 = vadd.f32 %v2284, %v2222
    %v2286 = vadd.f32 %v2285, %v2223
    %v2287 = vadd.f32 %v2286, %v2224
    %v2288 = vadd.f32 %v2287, %v2225
    %v2289 = vadd.f32 %v2288, %v2226
    %v2290 = vadd.f32 %v2289, %v2227
    %v2291 = vadd.f32 %v2290, %v2228
    %2292 = vadd.xlane.f32.xlu0 %v2291
    %v2293 = vpop.xlane.xlu0 %2292
    %v2294 = vrot.slane %v2293, 4
    %v2295 = vadd.f32 %v2293, %v2294
    %v2296 = vrot.slane %v2295, 2
    %v2297 = vadd.f32 %v2295, %v2296
    %v2298 = vrot.slane %v2297, 1
    %v2299 = vadd.f32 %v2297, %v2298
    %s2300 = vtos %v2299
    %v2301 = vstv %s2300
    %v2302 = vmul.f32 %v2301, 7.87352e-06
    %v2303 = vadd.f32 %v414, %v2302
    %vm2304 = vcmask 0
    %2305 = vst.msk [vmem:[#allocation7] sm:$0x1] %vm2304, %v2303
    // Predicated region
    $region18: #{tpu_custom_call.1} parent=1 // pred_check
      _
    $region19: #{tpu_custom_call.1} parent=1 // pred_check_branch
      %2307 = sbr.rel (0) target = $region21
    $region20: #{tpu_custom_call.1} parent=1 // pred_region
      %2309 = vsyncadd [#allocation4], 0
      %s2311 = sshll.u32 [#allocation7], 4
      %s2312 = int_to_ptr.vmem [resolvable:$true] %s2311
      %s2313 = sshll.u32 %s2, 4
      %s2314 = int_to_ptr.hbm [resolvable:$true] %s2313
      %2316 = dma.vmem_to_hbm [thread:$0]  %s2312, 16, %s2314, [#allocation4]
    $region21: #{tpu_custom_call.1} parent=1 // pred_fallthru
      _
    // Predicated region
    $region22: #{tpu_custom_call.1} parent=1 // pred_check
      _
    $region23: #{tpu_custom_call.1} parent=1 // pred_check_branch
      %2318 = sbr.rel (0) target = $region25
    $region24: #{tpu_custom_call.1} parent=1 // pred_region
      %2320 = dma.done [#allocation4], 16
    $region25: #{tpu_custom_call.1} parent=1 // pred_fallthru
      _
    %2321 = vsyncpa [#allocation3], 1
    %2322 = vsyncpa [#allocation6], 1
    %2323 = vsyncpa [#allocation4], 1

// kernel: tpu_custom_call.1
$region0: #{tpu_custom_call.1}
  #allocation0 [shape = 'u32[]', space=smem, size = 0x4, offset = 0x4, fixed_abs, tag = 'smem constant byte address 0x4 - core index']
  #allocation1 [shape = 'u32[72,128]{1,0:T(1,128)}', space=vmem, size = 0x9000, scoped, tag = 'internal scratch']
  %s0 = inlined_call_operand.hbm [shape: f32[2,2,128,128], index: 0, kind: input, shape index: {}]
  %s1 = inlined_call_operand.hbm [shape: s8[2,128,128], index: 1, kind: input, shape index: {}]
  %s2 = inlined_call_operand.hbm [shape: f32[1,1,1,1], index: 2, kind: output, shape index: {}]
  %s3 = sld [smem:[#allocation0]]
  $region26: #{tpu_custom_call.1} parent=0
    _
  %s5 = ssub.s32 1, %s3
  %s6 = scalar_select 0, %s5, %s3
  $region1: #{tpu_custom_call.1} parent=0
    #allocation2 [shape = 'u8[262144]{0}', space=vmem, size = 0x40000, scoped, tag = 'input window, operand 0, single buffered']
    #allocation3 [shape = 's32[1]{0}', space=sflag, size = 0x4, scoped, tag = 'scoped memory for tpu_custom_call.1']
    #allocation4 [shape = 's32[1]{0}', space=sflag, size = 0x4, scoped, tag = 'scoped memory for tpu_custom_call.1']
    #allocation5 [shape = 'u8[32768]{0}', space=vmem, size = 0x8000, scoped, tag = 'input window, operand 1, single buffered']
    #allocation6 [shape = 's32[1]{0}', space=sflag, size = 0x4, scoped, tag = 'scoped memory for tpu_custom_call.1']
    #allocation7 [shape = 'u8[512]{0}', space=vmem, size = 0x400, scoped, tag = 'output window, operand 0, single buffered']
    %7 = vsyncpa [#allocation3], 0
    %8 = vsyncpa [#allocation6], 0
    %9 = vsyncpa [#allocation4], 0
    // Predicated region
    $region2: #{tpu_custom_call.1} parent=1 // pred_check
      _
    $region3: #{tpu_custom_call.1} parent=1 // pred_check_branch
      %11 = sbr.rel (0) target = $region5
    $region4: #{tpu_custom_call.1} parent=1 // pred_region
      %13 = vsyncadd [#allocation3], 0
      %s14 = sshll.u32 %s0, 4
      %s15 = int_to_ptr.hbm [resolvable:$true] %s14
      %s16 = sshll.u32 [#allocation2], 4
      %s17 = int_to_ptr.vmem [resolvable:$true] %s16
      %22 = dma.hbm_to_vmem [thread:$0]  %s15, 8192, %s17, [#allocation3], 128, 128, 8
    $region5: #{tpu_custom_call.1} parent=1 // pred_fallthru
      _
    // Predicated region
    $region6: #{tpu_custom_call.1} parent=1 // pred_check
      _
    $region7: #{tpu_custom_call.1} parent=1 // pred_check_branch
      %24 = sbr.rel (0) target = $region9
    $region8: #{tpu_custom_call.1} parent=1 // pred_region
      %26 = vsyncadd [#allocation6], 0
      %s27 = sshll.u32 %s1, 4
      %s28 = int_to_ptr.hbm [resolvable:$true] %s27
      %s29 = sshll.u32 [#allocation5], 4
      %s30 = int_to_ptr.vmem [resolvable:$true] %s29
      %35 = dma.hbm_to_vmem [thread:$0]  %s28, 1024, %s30, [#allocation6], 128, 128, 8
    $region9: #{tpu_custom_call.1} parent=1 // pred_fallthru
      _
    // Predicated region
    $region10: #{tpu_custom_call.1} parent=1 // pred_check
      _
    $region11: #{tpu_custom_call.1} parent=1 // pred_check_branch
      %37 = sbr.rel (0) target = $region13
    $region12: #{tpu_custom_call.1} parent=1 // pred_region
      %39 = dma.done [#allocation3], 8192
    $region13: #{tpu_custom_call.1} parent=1 // pred_fallthru
      _
    // Predicated region
    $region14: #{tpu_custom_call.1} parent=1 // pred_check
      _
    $region15: #{tpu_custom_call.1} parent=1 // pred_check_branch
      %41 = sbr.rel (0) target = $region17
    $region16: #{tpu_custom_call.1} parent=1 // pred_region
      %43 = dma.done [#allocation6], 1024
    $region17: #{tpu_custom_call.1} parent=1 // pred_fallthru
      _
    %v44 = vld [vmem:[#allocation2] sm:$0xff]
    %v45 = vld [vmem:[#allocation2 + $0x8] sm:$0xff]
    %v46 = vld [vmem:[#allocation2 + $0x10] sm:$0xff]
    %v47 = vld [vmem:[#allocation2 + $0x18] sm:$0xff]
    %v48 = vld [vmem:[#allocation2 + $0x20] sm:$0xff]
    %v49 = vld [vmem:[#allocation2 + $0x28] sm:$0xff]
    %v50 = vld [vmem:[#allocation2 + $0x30] sm:$0xff]
    %v51 = vld [vmem:[#allocation2 + $0x38] sm:$0xff]
    %v52 = vld [vmem:[#allocation2 + $0x40] sm:$0xff]
    %v53 = vld [vmem:[#allocation2 + $0x48] sm:$0xff]
    %v54 = vld [vmem:[#allocation2 + $0x50] sm:$0xff]
    %v55 = vld [vmem:[#allocation2 + $0x58] sm:$0xff]
    %v56 = vld [vmem:[#allocation2 + $0x60] sm:$0xff]
    %v57 = vld [vmem:[#allocation2 + $0x68] sm:$0xff]
    %v58 = vld [vmem:[#allocation2 + $0x70] sm:$0xff]
    %v59 = vld [vmem:[#allocation2 + $0x78] sm:$0xff]
    %v60 = vld [vmem:[#allocation2 + $0x80] sm:$0xff]
    %v61 = vld [vmem:[#allocation2 + $0x88] sm:$0xff]
    %v62 = vld [vmem:[#allocation2 + $0x90] sm:$0xff]
    %v63 = vld [vmem:[#allocation2 + $0x98] sm:$0xff]
    %v64 = vld [vmem:[#allocation2 + $0xa0] sm:$0xff]
    %v65 = vld [vmem:[#allocation2 + $0xa8] sm:$0xff]
    %v66 = vld [vmem:[#allocation2 + $0xb0] sm:$0xff]
    %v67 = vld [vmem:[#allocation2 + $0xb8] sm:$0xff]
    %v68 = vld [vmem:[#allocation2 + $0xc0] sm:$0xff]
    %v69 = vld [vmem:[#allocation2 + $0xc8] sm:$0xff]
    %v70 = vld [vmem:[#allocation2 + $0xd0] sm:$0xff]
    %v71 = vld [vmem:[#allocation2 + $0xd8] sm:$0xff]
    %v72 = vld [vmem:[#allocation2 + $0xe0] sm:$0xff]
    %v73 = vld [vmem:[#allocation2 + $0xe8] sm:$0xff]
    %v74 = vld [vmem:[#allocation2 + $0xf0] sm:$0xff]
    %v75 = vld [vmem:[#allocation2 + $0xf8] sm:$0xff]
    %v76 = vld [vmem:[#allocation2 + $0x100] sm:$0xff]
    %v77 = vld [vmem:[#allocation2 + $0x108] sm:$0xff]
    %v78 = vld [vmem:[#allocation2 + $0x110] sm:$0xff]
    %v79 = vld [vmem:[#allocation2 + $0x118] sm:$0xff]
    %v80 = vld [vmem:[#allocation2 + $0x120] sm:$0xff]
    %v81 = vld [vmem:[#allocation2 + $0x128] sm:$0xff]
    %v82 = vld [vmem:[#allocation2 + $0x130] sm:$0xff]
    %v83 = vld [vmem:[#allocation2 + $0x138] sm:$0xff]
    %v84 = vld [vmem:[#allocation2 + $0x140] sm:$0xff]
    %v85 = vld [vmem:[#allocation2 + $0x148] sm:$0xff]
    %v86 = vld [vmem:[#allocation2 + $0x150] sm:$0xff]
    %v87 = vld [vmem:[#allocation2 + $0x158] sm:$0xff]
    %v88 = vld [vmem:[#allocation2 + $0x160] sm:$0xff]
    %v89 = vld [vmem:[#allocation2 + $0x168] sm:$0xff]
    %v90 = vld [vmem:[#allocation2 + $0x170] sm:$0xff]
    %v91 = vld [vmem:[#allocation2 + $0x178] sm:$0xff]
    %v92 = vld [vmem:[#allocation2 + $0x180] sm:$0xff]
    %v93 = vld [vmem:[#allocation2 + $0x188] sm:$0xff]
    %v94 = vld [vmem:[#allocation2 + $0x190] sm:$0xff]
    %v95 = vld [vmem:[#allocation2 + $0x198] sm:$0xff]
    %v96 = vld [vmem:[#allocation2 + $0x1a0] sm:$0xff]
    %v97 = vld [vmem:[#allocation2 + $0x1a8] sm:$0xff]
    %v98 = vld [vmem:[#allocation2 + $0x1b0] sm:$0xff]
    %v99 = vld [vmem:[#allocation2 + $0x1b8] sm:$0xff]
    %v100 = vld [vmem:[#allocation2 + $0x1c0] sm:$0xff]
    %v101 = vld [vmem:[#allocation2 + $0x1c8] sm:$0xff]
    %v102 = vld [vmem:[#allocation2 + $0x1d0] sm:$0xff]
    %v103 = vld [vmem:[#allocation2 + $0x1d8] sm:$0xff]
    %v104 = vld [vmem:[#allocation2 + $0x1e0] sm:$0xff]
    %v105 = vld [vmem:[#allocation2 + $0x1e8] sm:$0xff]
    %v106 = vld [vmem:[#allocation2 + $0x1f0] sm:$0xff]
    %v107 = vld [vmem:[#allocation2 + $0x1f8] sm:$0xff]
    %v108 = vld [vmem:[#allocation5] sm:$0xff]
    %v109 = vld [vmem:[#allocation5 + $0x8] sm:$0xff]
    %v110 = vld [vmem:[#allocation5 + $0x10] sm:$0xff]
    %v111 = vld [vmem:[#allocation5 + $0x18] sm:$0xff]
    %v112 = vld [vmem:[#allocation5 + $0x20] sm:$0xff]
    %v113 = vld [vmem:[#allocation5 + $0x28] sm:$0xff]
    %v114 = vld [vmem:[#allocation5 + $0x30] sm:$0xff]
    %v115 = vld [vmem:[#allocation5 + $0x38] sm:$0xff]
    %v116 = vunpack.c.0.s8 %v108
    %v117 = vunpack.c.1.s8 %v108
    %v118 = vunpack.c.2.s8 %v108
    %v119 = vunpack.c.3.s8 %v108
    %v120 = vunpack.c.0.s8 %v109
    %v121 = vunpack.c.1.s8 %v109
    %v122 = vunpack.c.2.s8 %v109
    %v123 = vunpack.c.3.s8 %v109
    %v124 = vunpack.c.0.s8 %v110
    %v125 = vunpack.c.1.s8 %v110
    %v126 = vunpack.c.2.s8 %v110
    %v127 = vunpack.c.3.s8 %v110
    %v128 = vunpack.c.0.s8 %v111
    %v129 = vunpack.c.1.s8 %v111
    %v130 = vunpack.c.2.s8 %v111
    %v131 = vunpack.c.3.s8 %v111
    %v132 = vunpack.c.0.s8 %v112
    %v133 = vunpack.c.1.s8 %v112
    %v134 = vunpack.c.2.s8 %v112
    %v135 = vunpack.c.3.s8 %v112
    %v136 = vunpack.c.0.s8 %v113
    %v137 = vunpack.c.1.s8 %v113
    %v138 = vunpack.c.2.s8 %v113
    %v139 = vunpack.c.3.s8 %v113
    %v140 = vunpack.c.0.s8 %v114
    %v141 = vunpack.c.1.s8 %v114
    %v142 = vunpack.c.2.s8 %v114
    %v143 = vunpack.c.3.s8 %v114
    %v144 = vunpack.c.0.s8 %v115
    %v145 = vunpack.c.1.s8 %v115
    %v146 = vunpack.c.2.s8 %v115
    %v147 = vunpack.c.3.s8 %v115
    %vm148 = vcmp.eq.s32.totalorder %v116, 0
    %vm149 = vcmp.eq.s32.totalorder %v117, 0
    %vm150 = vcmp.eq.s32.totalorder %v118, 0
    %vm151 = vcmp.eq.s32.totalorder %v119, 0
    %vm152 = vcmp.eq.s32.totalorder %v120, 0
    %vm153 = vcmp.eq.s32.totalorder %v121, 0
    %vm154 = vcmp.eq.s32.totalorder %v122, 0
    %vm155 = vcmp.eq.s32.totalorder %v123, 0
    %vm156 = vcmp.eq.s32.totalorder %v124, 0
    %vm157 = vcmp.eq.s32.totalorder %v125, 0
    %vm158 = vcmp.eq.s32.totalorder %v126, 0
    %vm159 = vcmp.eq.s32.totalorder %v127, 0
    %vm160 = vcmp.eq.s32.totalorder %v128, 0
    %vm161 = vcmp.eq.s32.totalorder %v129, 0
    %vm162 = vcmp.eq.s32.totalorder %v130, 0
    %vm163 = vcmp.eq.s32.totalorder %v131, 0
    %vm164 = vcmp.eq.s32.totalorder %v132, 0
    %vm165 = vcmp.eq.s32.totalorder %v133, 0
    %vm166 = vcmp.eq.s32.totalorder %v134, 0
    %vm167 = vcmp.eq.s32.totalorder %v135, 0
    %vm168 = vcmp.eq.s32.totalorder %v136, 0
    %vm169 = vcmp.eq.s32.totalorder %v137, 0
    %vm170 = vcmp.eq.s32.totalorder %v138, 0
    %vm171 = vcmp.eq.s32.totalorder %v139, 0
    %vm172 = vcmp.eq.s32.totalorder %v140, 0
    %vm173 = vcmp.eq.s32.totalorder %v141, 0
    %vm174 = vcmp.eq.s32.totalorder %v142, 0
    %vm175 = vcmp.eq.s32.totalorder %v143, 0
    %vm176 = vcmp.eq.s32.totalorder %v144, 0
    %vm177 = vcmp.eq.s32.totalorder %v145, 0
    %vm178 = vcmp.eq.s32.totalorder %v146, 0
    %vm179 = vcmp.eq.s32.totalorder %v147, 0
    %v180 = vsub.f32 1.0, %v44
    %v181 = vsub.f32 1.0, %v45
    %v182 = vsub.f32 1.0, %v46
    %v183 = vsub.f32 1.0, %v47
    %v184 = vsub.f32 1.0, %v48
    %v185 = vsub.f32 1.0, %v49
    %v186 = vsub.f32 1.0, %v50
    %v187 = vsub.f32 1.0, %v51
    %v188 = vsub.f32 1.0, %v52
    %v189 = vsub.f32 1.0, %v53
    %v190 = vsub.f32 1.0, %v54
    %v191 = vsub.f32 1.0, %v55
    %v192 = vsub.f32 1.0, %v56
    %v193 = vsub.f32 1.0, %v57
    %v194 = vsub.f32 1.0, %v58
    %v195 = vsub.f32 1.0, %v59
    %v196 = vsub.f32 1.0, %v76
    %v197 = vsub.f32 1.0, %v77
    %v198 = vsub.f32 1.0, %v78
    %v199 = vsub.f32 1.0, %v79
    %v200 = vsub.f32 1.0, %v80
    %v201 = vsub.f32 1.0, %v81
    %v202 = vsub.f32 1.0, %v82
    %v203 = vsub.f32 1.0, %v83
    %v204 = vsub.f32 1.0, %v84
    %v205 = vsub.f32 1.0, %v85
    %v206 = vsub.f32 1.0, %v86
    %v207 = vsub.f32 1.0, %v87
    %v208 = vsub.f32 1.0, %v88
    %v209 = vsub.f32 1.0, %v89
    %v210 = vsub.f32 1.0, %v90
    %v211 = vsub.f32 1.0, %v91
    %v212 = vsel %vm148, %v180, %v44
    %v213 = vsel %vm149, %v181, %v45
    %v214 = vsel %vm150, %v182, %v46
    %v215 = vsel %vm151, %v183, %v47
    %v216 = vsel %vm152, %v184, %v48
    %v217 = vsel %vm153, %v185, %v49
    %v218 = vsel %vm154, %v186, %v50
    %v219 = vsel %vm155, %v187, %v51
    %v220 = vsel %vm156, %v188, %v52
    %v221 = vsel %vm157, %v189, %v53
    %v222 = vsel %vm158, %v190, %v54
    %v223 = vsel %vm159, %v191, %v55
    %v224 = vsel %vm160, %v192, %v56
    %v225 = vsel %vm161, %v193, %v57
    %v226 = vsel %vm162, %v194, %v58
    %v227 = vsel %vm163, %v195, %v59
    %v228 = vsel %vm164, %v196, %v76
    %v229 = vsel %vm165, %v197, %v77
    %v230 = vsel %vm166, %v198, %v78
    %v231 = vsel %vm167, %v199, %v79
    %v232 = vsel %vm168, %v200, %v80
    %v233 = vsel %vm169, %v201, %v81
    %v234 = vsel %vm170, %v202, %v82
    %v235 = vsel %vm171, %v203, %v83
    %v236 = vsel %vm172, %v204, %v84
    %v237 = vsel %vm173, %v205, %v85
    %v238 = vsel %vm174, %v206, %v86
    %v239 = vsel %vm175, %v207, %v87
    %v240 = vsel %vm176, %v208, %v88
    %v241 = vsel %vm177, %v209, %v89
    %v242 = vsel %vm178, %v210, %v90
    %v243 = vsel %vm179, %v211, %v91
    %vm244 = vcmp.eq.s32.totalorder %v116, 1
    %vm245 = vcmp.eq.s32.totalorder %v117, 1
    %vm246 = vcmp.eq.s32.totalorder %v118, 1
    %vm247 = vcmp.eq.s32.totalorder %v119, 1
    %vm248 = vcmp.eq.s32.totalorder %v120, 1
    %vm249 = vcmp.eq.s32.totalorder %v121, 1
    %vm250 = vcmp.eq.s32.totalorder %v122, 1
    %vm251 = vcmp.eq.s32.totalorder %v123, 1
    %vm252 = vcmp.eq.s32.totalorder %v124, 1
    %vm253 = vcmp.eq.s32.totalorder %v125, 1
    %vm254 = vcmp.eq.s32.totalorder %v126, 1
    %vm255 = vcmp.eq.s32.totalorder %v127, 1
    %vm256 = vcmp.eq.s32.totalorder %v128, 1
    %vm257 = vcmp.eq.s32.totalorder %v129, 1
    %vm258 = vcmp.eq.s32.totalorder %v130, 1
    %vm259 = vcmp.eq.s32.totalorder %v131, 1
    %vm260 = vcmp.eq.s32.totalorder %v132, 1
    %vm261 = vcmp.eq.s32.totalorder %v133, 1
    %vm262 = vcmp.eq.s32.totalorder %v134, 1
    %vm263 = vcmp.eq.s32.totalorder %v135, 1
    %vm264 = vcmp.eq.s32.totalorder %v136, 1
    %vm265 = vcmp.eq.s32.totalorder %v137, 1
    %vm266 = vcmp.eq.s32.totalorder %v138, 1
    %vm267 = vcmp.eq.s32.totalorder %v139, 1
    %vm268 = vcmp.eq.s32.totalorder %v140, 1
    %vm269 = vcmp.eq.s32.totalorder %v141, 1
    %vm270 = vcmp.eq.s32.totalorder %v142, 1
    %vm271 = vcmp.eq.s32.totalorder %v143, 1
    %vm272 = vcmp.eq.s32.totalorder %v144, 1
    %vm273 = vcmp.eq.s32.totalorder %v145, 1
    %vm274 = vcmp.eq.s32.totalorder %v146, 1
    %vm275 = vcmp.eq.s32.totalorder %v147, 1
    %v276 = vsub.f32 1.0, %v60
    %v277 = vsub.f32 1.0, %v61
    %v278 = vsub.f32 1.0, %v62
    %v279 = vsub.f32 1.0, %v63
    %v280 = vsub.f32 1.0, %v64
    %v281 = vsub.f32 1.0, %v65
    %v282 = vsub.f32 1.0, %v66
    %v283 = vsub.f32 1.0, %v67
    %v284 = vsub.f32 1.0, %v68
    %v285 = vsub.f32 1.0, %v69
    %v286 = vsub.f32 1.0, %v70
    %v287 = vsub.f32 1.0, %v71
    %v288 = vsub.f32 1.0, %v72
    %v289 = vsub.f32 1.0, %v73
    %v290 = vsub.f32 1.0, %v74
    %v291 = vsub.f32 1.0, %v75
    %v292 = vsub.f32 1.0, %v92
    %v293 = vsub.f32 1.0, %v93
    %v294 = vsub.f32 1.0, %v94
    %v295 = vsub.f32 1.0, %v95
    %v296 = vsub.f32 1.0, %v96
    %v297 = vsub.f32 1.0, %v97
    %v298 = vsub.f32 1.0, %v98
    %v299 = vsub.f32 1.0, %v99
    %v300 = vsub.f32 1.0, %v100
    %v301 = vsub.f32 1.0, %v101
    %v302 = vsub.f32 1.0, %v102
    %v303 = vsub.f32 1.0, %v103
    %v304 = vsub.f32 1.0, %v104
    %v305 = vsub.f32 1.0, %v105
    %v306 = vsub.f32 1.0, %v106
    %v307 = vsub.f32 1.0, %v107
    %v308 = vsel %vm244, %v276, %v60
    %v309 = vsel %vm245, %v277, %v61
    %v310 = vsel %vm246, %v278, %v62
    %v311 = vsel %vm247, %v279, %v63
    %v312 = vsel %vm248, %v280, %v64
    %v313 = vsel %vm249, %v281, %v65
    %v314 = vsel %vm250, %v282, %v66
    %v315 = vsel %vm251, %v283, %v67
    %v316 = vsel %vm252, %v284, %v68
    %v317 = vsel %vm253, %v285, %v69
    %v318 = vsel %vm254, %v286, %v70
    %v319 = vsel %vm255, %v287, %v71
    %v320 = vsel %vm256, %v288, %v72
    %v321 = vsel %vm257, %v289, %v73
    %v322 = vsel %vm258, %v290, %v74
    %v323 = vsel %vm259, %v291, %v75
    %v324 = vsel %vm260, %v292, %v92
    %v325 = vsel %vm261, %v293, %v93
    %v326 = vsel %vm262, %v294, %v94
    %v327 = vsel %vm263, %v295, %v95
    %v328 = vsel %vm264, %v296, %v96
    %v329 = vsel %vm265, %v297, %v97
    %v330 = vsel %vm266, %v298, %v98
    %v331 = vsel %vm267, %v299, %v99
    %v332 = vsel %vm268, %v300, %v100
    %v333 = vsel %vm269, %v301, %v101
    %v334 = vsel %vm270, %v302, %v102
    %v335 = vsel %vm271, %v303, %v103
    %v336 = vsel %vm272, %v304, %v104
    %v337 = vsel %vm273, %v305, %v105
    %v338 = vsel %vm274, %v306, %v106
    %v339 = vsel %vm275, %v307, %v107
    %v340 = vadd.f32 %v212, %v308
    %v341 = vadd.f32 %v213, %v309
    %v342 = vadd.f32 %v214, %v310
    %v343 = vadd.f32 %v215, %v311
    %v344 = vadd.f32 %v216, %v312
    %v345 = vadd.f32 %v217, %v313
    %v346 = vadd.f32 %v218, %v314
    %v347 = vadd.f32 %v219, %v315
    %v348 = vadd.f32 %v220, %v316
    %v349 = vadd.f32 %v221, %v317
    %v350 = vadd.f32 %v222, %v318
    %v351 = vadd.f32 %v223, %v319
    %v352 = vadd.f32 %v224, %v320
    %v353 = vadd.f32 %v225, %v321
    %v354 = vadd.f32 %v226, %v322
    %v355 = vadd.f32 %v227, %v323
    %v356 = vadd.f32 %v228, %v324
    %v357 = vadd.f32 %v229, %v325
    %v358 = vadd.f32 %v230, %v326
    %v359 = vadd.f32 %v231, %v327
    %v360 = vadd.f32 %v232, %v328
    %v361 = vadd.f32 %v233, %v329
    %v362 = vadd.f32 %v234, %v330
    %v363 = vadd.f32 %v235, %v331
    %v364 = vadd.f32 %v236, %v332
    %v365 = vadd.f32 %v237, %v333
    %v366 = vadd.f32 %v238, %v334
    %v367 = vadd.f32 %v239, %v335
    %v368 = vadd.f32 %v240, %v336
    %v369 = vadd.f32 %v241, %v337
    %v370 = vadd.f32 %v242, %v338
    %v371 = vadd.f32 %v243, %v339
    %v372 = vadd.f32 %v340, %v341
    %v373 = vadd.f32 %v372, %v342
    %v374 = vadd.f32 %v373, %v343
    %v375 = vadd.f32 %v374, %v344
    %v376 = vadd.f32 %v375, %v345
    %v377 = vadd.f32 %v376, %v346
    %v378 = vadd.f32 %v377, %v347
    %v379 = vadd.f32 %v378, %v348
    %v380 = vadd.f32 %v379, %v349
    %v381 = vadd.f32 %v380, %v350
    %v382 = vadd.f32 %v381, %v351
    %v383 = vadd.f32 %v382, %v352
    %v384 = vadd.f32 %v383, %v353
    %v385 = vadd.f32 %v384, %v354
    %v386 = vadd.f32 %v385, %v355
    %v387 = vadd.f32 %v386, %v356
    %v388 = vadd.f32 %v387, %v357
    %v389 = vadd.f32 %v388, %v358
    %v390 = vadd.f32 %v389, %v359
    %v391 = vadd.f32 %v390, %v360
    %v392 = vadd.f32 %v391, %v361
    %v393 = vadd.f32 %v392, %v362
    %v394 = vadd.f32 %v393, %v363
    %v395 = vadd.f32 %v394, %v364
    %v396 = vadd.f32 %v395, %v365
    %v397 = vadd.f32 %v396, %v366
    %v398 = vadd.f32 %v397, %v367
    %v399 = vadd.f32 %v398, %v368
    %v400 = vadd.f32 %v399, %v369
    %v401 = vadd.f32 %v400, %v370
    %v402 = vadd.f32 %v401, %v371
    %403 = vadd.xlane.f32.xlu0 %v402
    %v404 = vpop.xlane.xlu0 %403
    %v405 = vrot.slane %v404, 4
    %v406 = vadd.f32 %v404, %v405
    %v407 = vrot.slane %v406, 2
    %v408 = vadd.f32 %v406, %v407
    %v409 = vrot.slane %v408, 1
    %v410 = vadd.f32 %v408, %v409
    %s411 = vtos %v410
    %v412 = vstv %s411
    %v413 = vmul.f32 %v412, 7.6293945e-06
    %v414 = vadd.f32 %v413, 0.0
    %vm479 = vcmask 1040384
    %v480 = vrot.slane %v44, 7
    %v481 = vrot.slane %v45, 7
    %v482 = vsel %vm479, %v480, %v481
    %v483 = vrot.slane %v46, 7
    %v484 = vsel %vm479, %v481, %v483
    %v485 = vrot.slane %v47, 7
    %v486 = vsel %vm479, %v483, %v485
    %v487 = vrot.slane %v48, 7
    %v488 = vsel %vm479, %v485, %v487
    %v489 = vrot.slane %v49, 7
    %v490 = vsel %vm479, %v487, %v489
    %v491 = vrot.slane %v50, 7
    %v492 = vsel %vm479, %v489, %v491
    %v493 = vrot.slane %v51, 7
    %v494 = vsel %vm479, %v491, %v493
    %v495 = vrot.slane %v52, 7
    %v496 = vsel %vm479, %v493, %v495
    %v497 = vrot.slane %v53, 7
    %v498 = vsel %vm479, %v495, %v497
    %v499 = vrot.slane %v54, 7
    %v500 = vsel %vm479, %v497, %v499
    %v501 = vrot.slane %v55, 7
    %v502 = vsel %vm479, %v499, %v501
    %v503 = vrot.slane %v56, 7
    %v504 = vsel %vm479, %v501, %v503
    %v505 = vrot.slane %v57, 7
    %v506 = vsel %vm479, %v503, %v505
    %v507 = vrot.slane %v58, 7
    %v508 = vsel %vm479, %v505, %v507
    %v509 = vrot.slane %v59, 7
    %v510 = vsel %vm479, %v507, %v509
    %v511 = vrot.slane %v60, 7
    %v512 = vrot.slane %v61, 7
    %v513 = vsel %vm479, %v511, %v512
    %v514 = vrot.slane %v62, 7
    %v515 = vsel %vm479, %v512, %v514
    %v516 = vrot.slane %v63, 7
    %v517 = vsel %vm479, %v514, %v516
    %v518 = vrot.slane %v64, 7
    %v519 = vsel %vm479, %v516, %v518
    %v520 = vrot.slane %v65, 7
    %v521 = vsel %vm479, %v518, %v520
    %v522 = vrot.slane %v66, 7
    %v523 = vsel %vm479, %v520, %v522
    %v524 = vrot.slane %v67, 7
    %v525 = vsel %vm479, %v522, %v524
    %v526 = vrot.slane %v68, 7
    %v527 = vsel %vm479, %v524, %v526
    %v528 = vrot.slane %v69, 7
    %v529 = vsel %vm479, %v526, %v528
    %v530 = vrot.slane %v70, 7
    %v531 = vsel %vm479, %v528, %v530
    %v532 = vrot.slane %v71, 7
    %v533 = vsel %vm479, %v530, %v532
    %v534 = vrot.slane %v72, 7
    %v535 = vsel %vm479, %v532, %v534
    %v536 = vrot.slane %v73, 7
    %v537 = vsel %vm479, %v534, %v536
    %v538 = vrot.slane %v74, 7
    %v539 = vsel %vm479, %v536, %v538
    %v540 = vrot.slane %v75, 7
    %v541 = vsel %vm479, %v538, %v540
    %v542 = vrot.slane %v76, 7
    %v543 = vrot.slane %v77, 7
    %v544 = vsel %vm479, %v542, %v543
    %v545 = vrot.slane %v78, 7
    %v546 = vsel %vm479, %v543, %v545
    %v547 = vrot.slane %v79, 7
    %v548 = vsel %vm479, %v545, %v547
    %v549 = vrot.slane %v80, 7
    %v550 = vsel %vm479, %v547, %v549
    %v551 = vrot.slane %v81, 7
    %v552 = vsel %vm479, %v549, %v551
    %v553 = vrot.slane %v82, 7
    %v554 = vsel %vm479, %v551, %v553
    %v555 = vrot.slane %v83, 7
    %v556 = vsel %vm479, %v553, %v555
    %v557 = vrot.slane %v84, 7
    %v558 = vsel %vm479, %v555, %v557
    %v559 = vrot.slane %v85, 7
    %v560 = vsel %vm479, %v557, %v559
    %v561 = vrot.slane %v86, 7
    %v562 = vsel %vm479, %v559, %v561
    %v563 = vrot.slane %v87, 7
    %v564 = vsel %vm479, %v561, %v563
    %v565 = vrot.slane %v88, 7
    %v566 = vsel %vm479, %v563, %v565
    %v567 = vrot.slane %v89, 7
    %v568 = vsel %vm479, %v565, %v567
    %v569 = vrot.slane %v90, 7
    %v570 = vsel %vm479, %v567, %v569
    %v571 = vrot.slane %v91, 7
    %v572 = vsel %vm479, %v569, %v571
    %v573 = vrot.slane %v92, 7
    %v574 = vrot.slane %v93, 7
    %v575 = vsel %vm479, %v573, %v574
    %v576 = vrot.slane %v94, 7
    %v577 = vsel %vm479, %v574, %v576
    %v578 = vrot.slane %v95, 7
    %v579 = vsel %vm479, %v576, %v578
    %v580 = vrot.slane %v96, 7
    %v581 = vsel %vm479, %v578, %v580
    %v582 = vrot.slane %v97, 7
    %v583 = vsel %vm479, %v580, %v582
    %v584 = vrot.slane %v98, 7
    %v585 = vsel %vm479, %v582, %v584
    %v586 = vrot.slane %v99, 7
    %v587 = vsel %vm479, %v584, %v586
    %v588 = vrot.slane %v100, 7
    %v589 = vsel %vm479, %v586, %v588
    %v590 = vrot.slane %v101, 7
    %v591 = vsel %vm479, %v588, %v590
    %v592 = vrot.slane %v102, 7
    %v593 = vsel %vm479, %v590, %v592
    %v594 = vrot.slane %v103, 7
    %v595 = vsel %vm479, %v592, %v594
    %v596 = vrot.slane %v104, 7
    %v597 = vsel %vm479, %v594, %v596
    %v598 = vrot.slane %v105, 7
    %v599 = vsel %vm479, %v596, %v598
    %v600 = vrot.slane %v106, 7
    %v601 = vsel %vm479, %v598, %v600
    %v602 = vrot.slane %v107, 7
    %v603 = vsel %vm479, %v600, %v602
    %v668 = vsub.f32 %v44, %v480
    %v669 = vsub.f32 %v45, %v482
    %v670 = vsub.f32 %v46, %v484
    %v671 = vsub.f32 %v47, %v486
    %v672 = vsub.f32 %v48, %v488
    %v673 = vsub.f32 %v49, %v490
    %v674 = vsub.f32 %v50, %v492
    %v675 = vsub.f32 %v51, %v494
    %v676 = vsub.f32 %v52, %v496
    %v677 = vsub.f32 %v53, %v498
    %v678 = vsub.f32 %v54, %v500
    %v679 = vsub.f32 %v55, %v502
    %v680 = vsub.f32 %v56, %v504
    %v681 = vsub.f32 %v57, %v506
    %v682 = vsub.f32 %v58, %v508
    %v683 = vsub.f32 %v59, %v510
    %v684 = vsub.f32 %v60, %v511
    %v685 = vsub.f32 %v61, %v513
    %v686 = vsub.f32 %v62, %v515
    %v687 = vsub.f32 %v63, %v517
    %v688 = vsub.f32 %v64, %v519
    %v689 = vsub.f32 %v65, %v521
    %v690 = vsub.f32 %v66, %v523
    %v691 = vsub.f32 %v67, %v525
    %v692 = vsub.f32 %v68, %v527
    %v693 = vsub.f32 %v69, %v529
    %v694 = vsub.f32 %v70, %v531
    %v695 = vsub.f32 %v71, %v533
    %v696 = vsub.f32 %v72, %v535
    %v697 = vsub.f32 %v73, %v537
    %v698 = vsub.f32 %v74, %v539
    %v699 = vsub.f32 %v75, %v541
    %v700 = vsub.f32 %v76, %v542
    %v701 = vsub.f32 %v77, %v544
    %v702 = vsub.f32 %v78, %v546
    %v703 = vsub.f32 %v79, %v548
    %v704 = vsub.f32 %v80, %v550
    %v705 = vsub.f32 %v81, %v552
    %v706 = vsub.f32 %v82, %v554
    %v707 = vsub.f32 %v83, %v556
    %v708 = vsub.f32 %v84, %v558
    %v709 = vsub.f32 %v85, %v560
    %v710 = vsub.f32 %v86, %v562
    %v711 = vsub.f32 %v87, %v564
    %v712 = vsub.f32 %v88, %v566
    %v713 = vsub.f32 %v89, %v568
    %v714 = vsub.f32 %v90, %v570
    %v715 = vsub.f32 %v91, %v572
    %v716 = vsub.f32 %v92, %v573
    %v717 = vsub.f32 %v93, %v575
    %v718 = vsub.f32 %v94, %v577
    %v719 = vsub.f32 %v95, %v579
    %v720 = vsub.f32 %v96, %v581
    %v721 = vsub.f32 %v97, %v583
    %v722 = vsub.f32 %v98, %v585
    %v723 = vsub.f32 %v99, %v587
    %v724 = vsub.f32 %v100, %v589
    %v725 = vsub.f32 %v101, %v591
    %v726 = vsub.f32 %v102, %v593
    %v727 = vsub.f32 %v103, %v595
    %v728 = vsub.f32 %v104, %v597
    %v729 = vsub.f32 %v105, %v599
    %v730 = vsub.f32 %v106, %v601
    %v731 = vsub.f32 %v107, %v603
    %732 = vrot.lane.b32.xlu0 %v44, 1
    %v733 = vpop.permute.xlu0 %732
    %734 = vrot.lane.b32.xlu0 %v45, 1
    %v735 = vpop.permute.xlu0 %734
    %736 = vrot.lane.b32.xlu0 %v46, 1
    %v737 = vpop.permute.xlu0 %736
    %738 = vrot.lane.b32.xlu0 %v47, 1
    %v739 = vpop.permute.xlu0 %738
    %740 = vrot.lane.b32.xlu0 %v48, 1
    %v741 = vpop.permute.xlu0 %740
    %742 = vrot.lane.b32.xlu0 %v49, 1
    %v743 = vpop.permute.xlu0 %742
    %744 = vrot.lane.b32.xlu0 %v50, 1
    %v745 = vpop.permute.xlu0 %744
    %746 = vrot.lane.b32.xlu0 %v51, 1
    %v747 = vpop.permute.xlu0 %746
    %748 = vrot.lane.b32.xlu0 %v52, 1
    %v749 = vpop.permute.xlu0 %748
    %750 = vrot.lane.b32.xlu0 %v53, 1
    %v751 = vpop.permute.xlu0 %750
    %752 = vrot.lane.b32.xlu0 %v54, 1
    %v753 = vpop.permute.xlu0 %752
    %754 = vrot.lane.b32.xlu0 %v55, 1
    %v755 = vpop.permute.xlu0 %754
    %756 = vrot.lane.b32.xlu0 %v56, 1
    %v757 = vpop.permute.xlu0 %756
    %758 = vrot.lane.b32.xlu0 %v57, 1
    %v759 = vpop.permute.xlu0 %758
    %760 = vrot.lane.b32.xlu0 %v58, 1
    %v761 = vpop.permute.xlu0 %760
    %762 = vrot.lane.b32.xlu0 %v59, 1
    %v763 = vpop.permute.xlu0 %762
    %764 = vrot.lane.b32.xlu0 %v60, 1
    %v765 = vpop.permute.xlu0 %764
    %766 = vrot.lane.b32.xlu0 %v61, 1
    %v767 = vpop.permute.xlu0 %766
    %768 = vrot.lane.b32.xlu0 %v62, 1
    %v769 = vpop.permute.xlu0 %768
    %770 = vrot.lane.b32.xlu0 %v63, 1
    %v771 = vpop.permute.xlu0 %770
    %772 = vrot.lane.b32.xlu0 %v64, 1
    %v773 = vpop.permute.xlu0 %772
    %774 = vrot.lane.b32.xlu0 %v65, 1
    %v775 = vpop.permute.xlu0 %774
    %776 = vrot.lane.b32.xlu0 %v66, 1
    %v777 = vpop.permute.xlu0 %776
    %778 = vrot.lane.b32.xlu0 %v67, 1
    %v779 = vpop.permute.xlu0 %778
    %780 = vrot.lane.b32.xlu0 %v68, 1
    %v781 = vpop.permute.xlu0 %780
    %782 = vrot.lane.b32.xlu0 %v69, 1
    %v783 = vpop.permute.xlu0 %782
    %784 = vrot.lane.b32.xlu0 %v70, 1
    %v785 = vpop.permute.xlu0 %784
    %786 = vrot.lane.b32.xlu0 %v71, 1
    %v787 = vpop.permute.xlu0 %786
    %788 = vrot.lane.b32.xlu0 %v72, 1
    %v789 = vpop.permute.xlu0 %788
    %790 = vrot.lane.b32.xlu0 %v73, 1
    %v791 = vpop.permute.xlu0 %790
    %792 = vrot.lane.b32.xlu0 %v74, 1
    %v793 = vpop.permute.xlu0 %792
    %794 = vrot.lane.b32.xlu0 %v75, 1
    %v795 = vpop.permute.xlu0 %794
    %796 = vrot.lane.b32.xlu0 %v76, 1
    %v797 = vpop.permute.xlu0 %796
    %798 = vrot.lane.b32.xlu0 %v77, 1
    %v799 = vpop.permute.xlu0 %798
    %800 = vrot.lane.b32.xlu0 %v78, 1
    %v801 = vpop.permute.xlu0 %800
    %802 = vrot.lane.b32.xlu0 %v79, 1
    %v803 = vpop.permute.xlu0 %802
    %804 = vrot.lane.b32.xlu0 %v80, 1
    %v805 = vpop.permute.xlu0 %804
    %806 = vrot.lane.b32.xlu0 %v81, 1
    %v807 = vpop.permute.xlu0 %806
    %808 = vrot.lane.b32.xlu0 %v82, 1
    %v809 = vpop.permute.xlu0 %808
    %810 = vrot.lane.b32.xlu0 %v83, 1
    %v811 = vpop.permute.xlu0 %810
    %812 = vrot.lane.b32.xlu0 %v84, 1
    %v813 = vpop.permute.xlu0 %812
    %814 = vrot.lane.b32.xlu0 %v85, 1
    %v815 = vpop.permute.xlu0 %814
    %816 = vrot.lane.b32.xlu0 %v86, 1
    %v817 = vpop.permute.xlu0 %816
    %818 = vrot.lane.b32.xlu0 %v87, 1
    %v819 = vpop.permute.xlu0 %818
    %820 = vrot.lane.b32.xlu0 %v88, 1
    %v821 = vpop.permute.xlu0 %820
    %822 = vrot.lane.b32.xlu0 %v89, 1
    %v823 = vpop.permute.xlu0 %822
    %824 = vrot.lane.b32.xlu0 %v90, 1
    %v825 = vpop.permute.xlu0 %824
    %826 = vrot.lane.b32.xlu0 %v91, 1
    %v827 = vpop.permute.xlu0 %826
    %828 = vrot.lane.b32.xlu0 %v92, 1
    %v829 = vpop.permute.xlu0 %828
    %830 = vrot.lane.b32.xlu0 %v93, 1
    %v831 = vpop.permute.xlu0 %830
    %832 = vrot.lane.b32.xlu0 %v94, 1
    %v833 = vpop.permute.xlu0 %832
    %834 = vrot.lane.b32.xlu0 %v95, 1
    %v835 = vpop.permute.xlu0 %834
    %836 = vrot.lane.b32.xlu0 %v96, 1
    %v837 = vpop.permute.xlu0 %836
    %838 = vrot.lane.b32.xlu0 %v97, 1
    %v839 = vpop.permute.xlu0 %838
    %840 = vrot.lane.b32.xlu0 %v98, 1
    %v841 = vpop.permute.xlu0 %840
    %842 = vrot.lane.b32.xlu0 %v99, 1
    %v843 = vpop.permute.xlu0 %842
    %844 = vrot.lane.b32.xlu0 %v100, 1
    %v845 = vpop.permute.xlu0 %844
    %846 = vrot.lane.b32.xlu0 %v101, 1
    %v847 = vpop.permute.xlu0 %846
    %848 = vrot.lane.b32.xlu0 %v102, 1
    %v849 = vpop.permute.xlu0 %848
    %850 = vrot.lane.b32.xlu0 %v103, 1
    %v851 = vpop.permute.xlu0 %850
    %852 = vrot.lane.b32.xlu0 %v104, 1
    %v853 = vpop.permute.xlu0 %852
    %854 = vrot.lane.b32.xlu0 %v105, 1
    %v855 = vpop.permute.xlu0 %854
    %856 = vrot.lane.b32.xlu0 %v106, 1
    %v857 = vpop.permute.xlu0 %856
    %858 = vrot.lane.b32.xlu0 %v107, 1
    %v859 = vpop.permute.xlu0 %858
    %v924 = vsub.f32 %v44, %v733
    %v925 = vsub.f32 %v45, %v735
    %v926 = vsub.f32 %v46, %v737
    %v927 = vsub.f32 %v47, %v739
    %v928 = vsub.f32 %v48, %v741
    %v929 = vsub.f32 %v49, %v743
    %v930 = vsub.f32 %v50, %v745
    %v931 = vsub.f32 %v51, %v747
    %v932 = vsub.f32 %v52, %v749
    %v933 = vsub.f32 %v53, %v751
    %v934 = vsub.f32 %v54, %v753
    %v935 = vsub.f32 %v55, %v755
    %v936 = vsub.f32 %v56, %v757
    %v937 = vsub.f32 %v57, %v759
    %v938 = vsub.f32 %v58, %v761
    %v939 = vsub.f32 %v59, %v763
    %v940 = vsub.f32 %v60, %v765
    %v941 = vsub.f32 %v61, %v767
    %v942 = vsub.f32 %v62, %v769
    %v943 = vsub.f32 %v63, %v771
    %v944 = vsub.f32 %v64, %v773
    %v945 = vsub.f32 %v65, %v775
    %v946 = vsub.f32 %v66, %v777
    %v947 = vsub.f32 %v67, %v779
    %v948 = vsub.f32 %v68, %v781
    %v949 = vsub.f32 %v69, %v783
    %v950 = vsub.f32 %v70, %v785
    %v951 = vsub.f32 %v71, %v787
    %v952 = vsub.f32 %v72, %v789
    %v953 = vsub.f32 %v73, %v791
    %v954 = vsub.f32 %v74, %v793
    %v955 = vsub.f32 %v75, %v795
    %v956 = vsub.f32 %v76, %v797
    %v957 = vsub.f32 %v77, %v799
    %v958 = vsub.f32 %v78, %v801
    %v959 = vsub.f32 %v79, %v803
    %v960 = vsub.f32 %v80, %v805
    %v961 = vsub.f32 %v81, %v807
    %v962 = vsub.f32 %v82, %v809
    %v963 = vsub.f32 %v83, %v811
    %v964 = vsub.f32 %v84, %v813
    %v965 = vsub.f32 %v85, %v815
    %v966 = vsub.f32 %v86, %v817
    %v967 = vsub.f32 %v87, %v819
    %v968 = vsub.f32 %v88, %v821
    %v969 = vsub.f32 %v89, %v823
    %v970 = vsub.f32 %v90, %v825
    %v971 = vsub.f32 %v91, %v827
    %v972 = vsub.f32 %v92, %v829
    %v973 = vsub.f32 %v93, %v831
    %v974 = vsub.f32 %v94, %v833
    %v975 = vsub.f32 %v95, %v835
    %v976 = vsub.f32 %v96, %v837
    %v977 = vsub.f32 %v97, %v839
    %v978 = vsub.f32 %v98, %v841
    %v979 = vsub.f32 %v99, %v843
    %v980 = vsub.f32 %v100, %v845
    %v981 = vsub.f32 %v101, %v847
    %v982 = vsub.f32 %v102, %v849
    %v983 = vsub.f32 %v103, %v851
    %v984 = vsub.f32 %v104, %v853
    %v985 = vsub.f32 %v105, %v855
    %v986 = vsub.f32 %v106, %v857
    %v987 = vsub.f32 %v107, %v859
    %v988 = vmul.f32 %v668, %v668
    %v989 = vmul.f32 %v669, %v669
    %v990 = vmul.f32 %v670, %v670
    %v991 = vmul.f32 %v671, %v671
    %v992 = vmul.f32 %v672, %v672
    %v993 = vmul.f32 %v673, %v673
    %v994 = vmul.f32 %v674, %v674
    %v995 = vmul.f32 %v675, %v675
    %v996 = vmul.f32 %v676, %v676
    %v997 = vmul.f32 %v677, %v677
    %v998 = vmul.f32 %v678, %v678
    %v999 = vmul.f32 %v679, %v679
    %v1000 = vmul.f32 %v680, %v680
    %v1001 = vmul.f32 %v681, %v681
    %v1002 = vmul.f32 %v682, %v682
    %v1003 = vmul.f32 %v683, %v683
    %v1004 = vmul.f32 %v684, %v684
    %v1005 = vmul.f32 %v685, %v685
    %v1006 = vmul.f32 %v686, %v686
    %v1007 = vmul.f32 %v687, %v687
    %v1008 = vmul.f32 %v688, %v688
    %v1009 = vmul.f32 %v689, %v689
    %v1010 = vmul.f32 %v690, %v690
    %v1011 = vmul.f32 %v691, %v691
    %v1012 = vmul.f32 %v692, %v692
    %v1013 = vmul.f32 %v693, %v693
    %v1014 = vmul.f32 %v694, %v694
    %v1015 = vmul.f32 %v695, %v695
    %v1016 = vmul.f32 %v696, %v696
    %v1017 = vmul.f32 %v697, %v697
    %v1018 = vmul.f32 %v698, %v698
    %v1019 = vmul.f32 %v699, %v699
    %v1020 = vmul.f32 %v700, %v700
    %v1021 = vmul.f32 %v701, %v701
    %v1022 = vmul.f32 %v702, %v702
    %v1023 = vmul.f32 %v703, %v703
    %v1024 = vmul.f32 %v704, %v704
    %v1025 = vmul.f32 %v705, %v705
    %v1026 = vmul.f32 %v706, %v706
    %v1027 = vmul.f32 %v707, %v707
    %v1028 = vmul.f32 %v708, %v708
    %v1029 = vmul.f32 %v709, %v709
    %v1030 = vmul.f32 %v710, %v710
    %v1031 = vmul.f32 %v711, %v711
    %v1032 = vmul.f32 %v712, %v712
    %v1033 = vmul.f32 %v713, %v713
    %v1034 = vmul.f32 %v714, %v714
    %v1035 = vmul.f32 %v715, %v715
    %v1036 = vmul.f32 %v716, %v716
    %v1037 = vmul.f32 %v717, %v717
    %v1038 = vmul.f32 %v718, %v718
    %v1039 = vmul.f32 %v719, %v719
    %v1040 = vmul.f32 %v720, %v720
    %v1041 = vmul.f32 %v721, %v721
    %v1042 = vmul.f32 %v722, %v722
    %v1043 = vmul.f32 %v723, %v723
    %v1044 = vmul.f32 %v724, %v724
    %v1045 = vmul.f32 %v725, %v725
    %v1046 = vmul.f32 %v726, %v726
    %v1047 = vmul.f32 %v727, %v727
    %v1048 = vmul.f32 %v728, %v728
    %v1049 = vmul.f32 %v729, %v729
    %v1050 = vmul.f32 %v730, %v730
    %v1051 = vmul.f32 %v731, %v731
    %v1052 = vmul.f32 %v924, %v924
    %v1053 = vmul.f32 %v925, %v925
    %v1054 = vmul.f32 %v926, %v926
    %v1055 = vmul.f32 %v927, %v927
    %v1056 = vmul.f32 %v928, %v928
    %v1057 = vmul.f32 %v929, %v929
    %v1058 = vmul.f32 %v930, %v930
    %v1059 = vmul.f32 %v931, %v931
    %v1060 = vmul.f32 %v932, %v932
    %v1061 = vmul.f32 %v933, %v933
    %v1062 = vmul.f32 %v934, %v934
    %v1063 = vmul.f32 %v935, %v935
    %v1064 = vmul.f32 %v936, %v936
    %v1065 = vmul.f32 %v937, %v937
    %v1066 = vmul.f32 %v938, %v938
    %v1067 = vmul.f32 %v939, %v939
    %v1068 = vmul.f32 %v940, %v940
    %v1069 = vmul.f32 %v941, %v941
    %v1070 = vmul.f32 %v942, %v942
    %v1071 = vmul.f32 %v943, %v943
    %v1072 = vmul.f32 %v944, %v944
    %v1073 = vmul.f32 %v945, %v945
    %v1074 = vmul.f32 %v946, %v946
    %v1075 = vmul.f32 %v947, %v947
    %v1076 = vmul.f32 %v948, %v948
    %v1077 = vmul.f32 %v949, %v949
    %v1078 = vmul.f32 %v950, %v950
    %v1079 = vmul.f32 %v951, %v951
    %v1080 = vmul.f32 %v952, %v952
    %v1081 = vmul.f32 %v953, %v953
    %v1082 = vmul.f32 %v954, %v954
    %v1083 = vmul.f32 %v955, %v955
    %v1084 = vmul.f32 %v956, %v956
    %v1085 = vmul.f32 %v957, %v957
    %v1086 = vmul.f32 %v958, %v958
    %v1087 = vmul.f32 %v959, %v959
    %v1088 = vmul.f32 %v960, %v960
    %v1089 = vmul.f32 %v961, %v961
    %v1090 = vmul.f32 %v962, %v962
    %v1091 = vmul.f32 %v963, %v963
    %v1092 = vmul.f32 %v964, %v964
    %v1093 = vmul.f32 %v965, %v965
    %v1094 = vmul.f32 %v966, %v966
    %v1095 = vmul.f32 %v967, %v967
    %v1096 = vmul.f32 %v968, %v968
    %v1097 = vmul.f32 %v969, %v969
    %v1098 = vmul.f32 %v970, %v970
    %v1099 = vmul.f32 %v971, %v971
    %v1100 = vmul.f32 %v972, %v972
    %v1101 = vmul.f32 %v973, %v973
    %v1102 = vmul.f32 %v974, %v974
    %v1103 = vmul.f32 %v975, %v975
    %v1104 = vmul.f32 %v976, %v976
    %v1105 = vmul.f32 %v977, %v977
    %v1106 = vmul.f32 %v978, %v978
    %v1107 = vmul.f32 %v979, %v979
    %v1108 = vmul.f32 %v980, %v980
    %v1109 = vmul.f32 %v981, %v981
    %v1110 = vmul.f32 %v982, %v982
    %v1111 = vmul.f32 %v983, %v983
    %v1112 = vmul.f32 %v984, %v984
    %v1113 = vmul.f32 %v985, %v985
    %v1114 = vmul.f32 %v986, %v986
    %v1115 = vmul.f32 %v987, %v987
    %vm1180 = vcmask 1041408
    %v1181 = vrot.slane %v1052, 6
    %v1182 = vrot.slane %v1053, 6
    %v1183 = vsel %vm1180, %v1181, %v1182
    %v1184 = vrot.slane %v1054, 6
    %v1185 = vsel %vm1180, %v1182, %v1184
    %v1186 = vrot.slane %v1055, 6
    %v1187 = vsel %vm1180, %v1184, %v1186
    %v1188 = vrot.slane %v1056, 6
    %v1189 = vsel %vm1180, %v1186, %v1188
    %v1190 = vrot.slane %v1057, 6
    %v1191 = vsel %vm1180, %v1188, %v1190
    %v1192 = vrot.slane %v1058, 6
    %v1193 = vsel %vm1180, %v1190, %v1192
    %v1194 = vrot.slane %v1059, 6
    %v1195 = vsel %vm1180, %v1192, %v1194
    %v1196 = vrot.slane %v1060, 6
    %v1197 = vsel %vm1180, %v1194, %v1196
    %v1198 = vrot.slane %v1061, 6
    %v1199 = vsel %vm1180, %v1196, %v1198
    %v1200 = vrot.slane %v1062, 6
    %v1201 = vsel %vm1180, %v1198, %v1200
    %v1202 = vrot.slane %v1063, 6
    %v1203 = vsel %vm1180, %v1200, %v1202
    %v1204 = vrot.slane %v1064, 6
    %v1205 = vsel %vm1180, %v1202, %v1204
    %v1206 = vrot.slane %v1065, 6
    %v1207 = vsel %vm1180, %v1204, %v1206
    %v1208 = vrot.slane %v1066, 6
    %v1209 = vsel %vm1180, %v1206, %v1208
    %v1210 = vrot.slane %v1067, 6
    %v1211 = vsel %vm1180, %v1208, %v1210
    %v1212 = vrot.slane %v1068, 6
    %v1213 = vrot.slane %v1069, 6
    %v1214 = vsel %vm1180, %v1212, %v1213
    %v1215 = vrot.slane %v1070, 6
    %v1216 = vsel %vm1180, %v1213, %v1215
    %v1217 = vrot.slane %v1071, 6
    %v1218 = vsel %vm1180, %v1215, %v1217
    %v1219 = vrot.slane %v1072, 6
    %v1220 = vsel %vm1180, %v1217, %v1219
    %v1221 = vrot.slane %v1073, 6
    %v1222 = vsel %vm1180, %v1219, %v1221
    %v1223 = vrot.slane %v1074, 6
    %v1224 = vsel %vm1180, %v1221, %v1223
    %v1225 = vrot.slane %v1075, 6
    %v1226 = vsel %vm1180, %v1223, %v1225
    %v1227 = vrot.slane %v1076, 6
    %v1228 = vsel %vm1180, %v1225, %v1227
    %v1229 = vrot.slane %v1077, 6
    %v1230 = vsel %vm1180, %v1227, %v1229
    %v1231 = vrot.slane %v1078, 6
    %v1232 = vsel %vm1180, %v1229, %v1231
    %v1233 = vrot.slane %v1079, 6
    %v1234 = vsel %vm1180, %v1231, %v1233
    %v1235 = vrot.slane %v1080, 6
    %v1236 = vsel %vm1180, %v1233, %v1235
    %v1237 = vrot.slane %v1081, 6
    %v1238 = vsel %vm1180, %v1235, %v1237
    %v1239 = vrot.slane %v1082, 6
    %v1240 = vsel %vm1180, %v1237, %v1239
    %v1241 = vrot.slane %v1083, 6
    %v1242 = vsel %vm1180, %v1239, %v1241
    %v1243 = vrot.slane %v1084, 6
    %v1244 = vrot.slane %v1085, 6
    %v1245 = vsel %vm1180, %v1243, %v1244
    %v1246 = vrot.slane %v1086, 6
    %v1247 = vsel %vm1180, %v1244, %v1246
    %v1248 = vrot.slane %v1087, 6
    %v1249 = vsel %vm1180, %v1246, %v1248
    %v1250 = vrot.slane %v1088, 6
    %v1251 = vsel %vm1180, %v1248, %v1250
    %v1252 = vrot.slane %v1089, 6
    %v1253 = vsel %vm1180, %v1250, %v1252
    %v1254 = vrot.slane %v1090, 6
    %v1255 = vsel %vm1180, %v1252, %v1254
    %v1256 = vrot.slane %v1091, 6
    %v1257 = vsel %vm1180, %v1254, %v1256
    %v1258 = vrot.slane %v1092, 6
    %v1259 = vsel %vm1180, %v1256, %v1258
    %v1260 = vrot.slane %v1093, 6
    %v1261 = vsel %vm1180, %v1258, %v1260
    %v1262 = vrot.slane %v1094, 6
    %v1263 = vsel %vm1180, %v1260, %v1262
    %v1264 = vrot.slane %v1095, 6
    %v1265 = vsel %vm1180, %v1262, %v1264
    %v1266 = vrot.slane %v1096, 6
    %v1267 = vsel %vm1180, %v1264, %v1266
    %v1268 = vrot.slane %v1097, 6
    %v1269 = vsel %vm1180, %v1266, %v1268
    %v1270 = vrot.slane %v1098, 6
    %v1271 = vsel %vm1180, %v1268, %v1270
    %v1272 = vrot.slane %v1099, 6
    %v1273 = vsel %vm1180, %v1270, %v1272
    %v1274 = vrot.slane %v1100, 6
    %v1275 = vrot.slane %v1101, 6
    %v1276 = vsel %vm1180, %v1274, %v1275
    %v1277 = vrot.slane %v1102, 6
    %v1278 = vsel %vm1180, %v1275, %v1277
    %v1279 = vrot.slane %v1103, 6
    %v1280 = vsel %vm1180, %v1277, %v1279
    %v1281 = vrot.slane %v1104, 6
    %v1282 = vsel %vm1180, %v1279, %v1281
    %v1283 = vrot.slane %v1105, 6
    %v1284 = vsel %vm1180, %v1281, %v1283
    %v1285 = vrot.slane %v1106, 6
    %v1286 = vsel %vm1180, %v1283, %v1285
    %v1287 = vrot.slane %v1107, 6
    %v1288 = vsel %vm1180, %v1285, %v1287
    %v1289 = vrot.slane %v1108, 6
    %v1290 = vsel %vm1180, %v1287, %v1289
    %v1291 = vrot.slane %v1109, 6
    %v1292 = vsel %vm1180, %v1289, %v1291
    %v1293 = vrot.slane %v1110, 6
    %v1294 = vsel %vm1180, %v1291, %v1293
    %v1295 = vrot.slane %v1111, 6
    %v1296 = vsel %vm1180, %v1293, %v1295
    %v1297 = vrot.slane %v1112, 6
    %v1298 = vsel %vm1180, %v1295, %v1297
    %v1299 = vrot.slane %v1113, 6
    %v1300 = vsel %vm1180, %v1297, %v1299
    %v1301 = vrot.slane %v1114, 6
    %v1302 = vsel %vm1180, %v1299, %v1301
    %v1303 = vrot.slane %v1115, 6
    %v1304 = vsel %vm1180, %v1301, %v1303
    %1305 = vrot.lane.b32.xlu0 %v1181, 126
    %v1306 = vpop.permute.xlu0 %1305
    %1307 = vrot.lane.b32.xlu0 %v1183, 126
    %v1308 = vpop.permute.xlu0 %1307
    %1309 = vrot.lane.b32.xlu0 %v1185, 126
    %v1310 = vpop.permute.xlu0 %1309
    %1311 = vrot.lane.b32.xlu0 %v1187, 126
    %v1312 = vpop.permute.xlu0 %1311
    %1313 = vrot.lane.b32.xlu0 %v1189, 126
    %v1314 = vpop.permute.xlu0 %1313
    %1315 = vrot.lane.b32.xlu0 %v1191, 126
    %v1316 = vpop.permute.xlu0 %1315
    %1317 = vrot.lane.b32.xlu0 %v1193, 126
    %v1318 = vpop.permute.xlu0 %1317
    %1319 = vrot.lane.b32.xlu0 %v1195, 126
    %v1320 = vpop.permute.xlu0 %1319
    %1321 = vrot.lane.b32.xlu0 %v1197, 126
    %v1322 = vpop.permute.xlu0 %1321
    %1323 = vrot.lane.b32.xlu0 %v1199, 126
    %v1324 = vpop.permute.xlu0 %1323
    %1325 = vrot.lane.b32.xlu0 %v1201, 126
    %v1326 = vpop.permute.xlu0 %1325
    %1327 = vrot.lane.b32.xlu0 %v1203, 126
    %v1328 = vpop.permute.xlu0 %1327
    %1329 = vrot.lane.b32.xlu0 %v1205, 126
    %v1330 = vpop.permute.xlu0 %1329
    %1331 = vrot.lane.b32.xlu0 %v1207, 126
    %v1332 = vpop.permute.xlu0 %1331
    %1333 = vrot.lane.b32.xlu0 %v1209, 126
    %v1334 = vpop.permute.xlu0 %1333
    %1335 = vrot.lane.b32.xlu0 %v1211, 126
    %v1336 = vpop.permute.xlu0 %1335
    %1337 = vrot.lane.b32.xlu0 %v1212, 126
    %v1338 = vpop.permute.xlu0 %1337
    %1339 = vrot.lane.b32.xlu0 %v1214, 126
    %v1340 = vpop.permute.xlu0 %1339
    %1341 = vrot.lane.b32.xlu0 %v1216, 126
    %v1342 = vpop.permute.xlu0 %1341
    %1343 = vrot.lane.b32.xlu0 %v1218, 126
    %v1344 = vpop.permute.xlu0 %1343
    %1345 = vrot.lane.b32.xlu0 %v1220, 126
    %v1346 = vpop.permute.xlu0 %1345
    %1347 = vrot.lane.b32.xlu0 %v1222, 126
    %v1348 = vpop.permute.xlu0 %1347
    %1349 = vrot.lane.b32.xlu0 %v1224, 126
    %v1350 = vpop.permute.xlu0 %1349
    %1351 = vrot.lane.b32.xlu0 %v1226, 126
    %v1352 = vpop.permute.xlu0 %1351
    %1353 = vrot.lane.b32.xlu0 %v1228, 126
    %v1354 = vpop.permute.xlu0 %1353
    %1355 = vrot.lane.b32.xlu0 %v1230, 126
    %v1356 = vpop.permute.xlu0 %1355
    %1357 = vrot.lane.b32.xlu0 %v1232, 126
    %v1358 = vpop.permute.xlu0 %1357
    %1359 = vrot.lane.b32.xlu0 %v1234, 126
    %v1360 = vpop.permute.xlu0 %1359
    %1361 = vrot.lane.b32.xlu0 %v1236, 126
    %v1362 = vpop.permute.xlu0 %1361
    %1363 = vrot.lane.b32.xlu0 %v1238, 126
    %v1364 = vpop.permute.xlu0 %1363
    %1365 = vrot.lane.b32.xlu0 %v1240, 126
    %v1366 = vpop.permute.xlu0 %1365
    %1367 = vrot.lane.b32.xlu0 %v1242, 126
    %v1368 = vpop.permute.xlu0 %1367
    %1369 = vrot.lane.b32.xlu0 %v1243, 126
    %v1370 = vpop.permute.xlu0 %1369
    %1371 = vrot.lane.b32.xlu0 %v1245, 126
    %v1372 = vpop.permute.xlu0 %1371
    %1373 = vrot.lane.b32.xlu0 %v1247, 126
    %v1374 = vpop.permute.xlu0 %1373
    %1375 = vrot.lane.b32.xlu0 %v1249, 126
    %v1376 = vpop.permute.xlu0 %1375
    %1377 = vrot.lane.b32.xlu0 %v1251, 126
    %v1378 = vpop.permute.xlu0 %1377
    %1379 = vrot.lane.b32.xlu0 %v1253, 126
    %v1380 = vpop.permute.xlu0 %1379
    %1381 = vrot.lane.b32.xlu0 %v1255, 126
    %v1382 = vpop.permute.xlu0 %1381
    %1383 = vrot.lane.b32.xlu0 %v1257, 126
    %v1384 = vpop.permute.xlu0 %1383
    %1385 = vrot.lane.b32.xlu0 %v1259, 126
    %v1386 = vpop.permute.xlu0 %1385
    %1387 = vrot.lane.b32.xlu0 %v1261, 126
    %v1388 = vpop.permute.xlu0 %1387
    %1389 = vrot.lane.b32.xlu0 %v1263, 126
    %v1390 = vpop.permute.xlu0 %1389
    %1391 = vrot.lane.b32.xlu0 %v1265, 126
    %v1392 = vpop.permute.xlu0 %1391
    %1393 = vrot.lane.b32.xlu0 %v1267, 126
    %v1394 = vpop.permute.xlu0 %1393
    %1395 = vrot.lane.b32.xlu0 %v1269, 126
    %v1396 = vpop.permute.xlu0 %1395
    %1397 = vrot.lane.b32.xlu0 %v1271, 126
    %v1398 = vpop.permute.xlu0 %1397
    %1399 = vrot.lane.b32.xlu0 %v1273, 126
    %v1400 = vpop.permute.xlu0 %1399
    %1401 = vrot.lane.b32.xlu0 %v1274, 126
    %v1402 = vpop.permute.xlu0 %1401
    %1403 = vrot.lane.b32.xlu0 %v1276, 126
    %v1404 = vpop.permute.xlu0 %1403
    %1405 = vrot.lane.b32.xlu0 %v1278, 126
    %v1406 = vpop.permute.xlu0 %1405
    %1407 = vrot.lane.b32.xlu0 %v1280, 126
    %v1408 = vpop.permute.xlu0 %1407
    %1409 = vrot.lane.b32.xlu0 %v1282, 126
    %v1410 = vpop.permute.xlu0 %1409
    %1411 = vrot.lane.b32.xlu0 %v1284, 126
    %v1412 = vpop.permute.xlu0 %1411
    %1413 = vrot.lane.b32.xlu0 %v1286, 126
    %v1414 = vpop.permute.xlu0 %1413
    %1415 = vrot.lane.b32.xlu0 %v1288, 126
    %v1416 = vpop.permute.xlu0 %1415
    %1417 = vrot.lane.b32.xlu0 %v1290, 126
    %v1418 = vpop.permute.xlu0 %1417
    %1419 = vrot.lane.b32.xlu0 %v1292, 126
    %v1420 = vpop.permute.xlu0 %1419
    %1421 = vrot.lane.b32.xlu0 %v1294, 126
    %v1422 = vpop.permute.xlu0 %1421
    %1423 = vrot.lane.b32.xlu0 %v1296, 126
    %v1424 = vpop.permute.xlu0 %1423
    %1425 = vrot.lane.b32.xlu0 %v1298, 126
    %v1426 = vpop.permute.xlu0 %1425
    %1427 = vrot.lane.b32.xlu0 %v1300, 126
    %v1428 = vpop.permute.xlu0 %1427
    %1429 = vrot.lane.b32.xlu0 %v1302, 126
    %v1430 = vpop.permute.xlu0 %1429
    %1431 = vrot.lane.b32.xlu0 %v1304, 126
    %v1432 = vpop.permute.xlu0 %1431
    %v1497 = vadd.f32 %v988, %v1306
    %v1498 = vadd.f32 %v989, %v1308
    %v1499 = vadd.f32 %v990, %v1310
    %v1500 = vadd.f32 %v991, %v1312
    %v1501 = vadd.f32 %v992, %v1314
    %v1502 = vadd.f32 %v993, %v1316
    %v1503 = vadd.f32 %v994, %v1318
    %v1504 = vadd.f32 %v995, %v1320
    %v1505 = vadd.f32 %v996, %v1322
    %v1506 = vadd.f32 %v997, %v1324
    %v1507 = vadd.f32 %v998, %v1326
    %v1508 = vadd.f32 %v999, %v1328
    %v1509 = vadd.f32 %v1000, %v1330
    %v1510 = vadd.f32 %v1001, %v1332
    %v1511 = vadd.f32 %v1002, %v1334
    %v1512 = vadd.f32 %v1003, %v1336
    %v1513 = vadd.f32 %v1004, %v1338
    %v1514 = vadd.f32 %v1005, %v1340
    %v1515 = vadd.f32 %v1006, %v1342
    %v1516 = vadd.f32 %v1007, %v1344
    %v1517 = vadd.f32 %v1008, %v1346
    %v1518 = vadd.f32 %v1009, %v1348
    %v1519 = vadd.f32 %v1010, %v1350
    %v1520 = vadd.f32 %v1011, %v1352
    %v1521 = vadd.f32 %v1012, %v1354
    %v1522 = vadd.f32 %v1013, %v1356
    %v1523 = vadd.f32 %v1014, %v1358
    %v1524 = vadd.f32 %v1015, %v1360
    %v1525 = vadd.f32 %v1016, %v1362
    %v1526 = vadd.f32 %v1017, %v1364
    %v1527 = vadd.f32 %v1018, %v1366
    %v1528 = vadd.f32 %v1019, %v1368
    %v1529 = vadd.f32 %v1020, %v1370
    %v1530 = vadd.f32 %v1021, %v1372
    %v1531 = vadd.f32 %v1022, %v1374
    %v1532 = vadd.f32 %v1023, %v1376
    %v1533 = vadd.f32 %v1024, %v1378
    %v1534 = vadd.f32 %v1025, %v1380
    %v1535 = vadd.f32 %v1026, %v1382
    %v1536 = vadd.f32 %v1027, %v1384
    %v1537 = vadd.f32 %v1028, %v1386
    %v1538 = vadd.f32 %v1029, %v1388
    %v1539 = vadd.f32 %v1030, %v1390
    %v1540 = vadd.f32 %v1031, %v1392
    %v1541 = vadd.f32 %v1032, %v1394
    %v1542 = vadd.f32 %v1033, %v1396
    %v1543 = vadd.f32 %v1034, %v1398
    %v1544 = vadd.f32 %v1035, %v1400
    %v1545 = vadd.f32 %v1036, %v1402
    %v1546 = vadd.f32 %v1037, %v1404
    %v1547 = vadd.f32 %v1038, %v1406
    %v1548 = vadd.f32 %v1039, %v1408
    %v1549 = vadd.f32 %v1040, %v1410
    %v1550 = vadd.f32 %v1041, %v1412
    %v1551 = vadd.f32 %v1042, %v1414
    %v1552 = vadd.f32 %v1043, %v1416
    %v1553 = vadd.f32 %v1044, %v1418
    %v1554 = vadd.f32 %v1045, %v1420
    %v1555 = vadd.f32 %v1046, %v1422
    %v1556 = vadd.f32 %v1047, %v1424
    %v1557 = vadd.f32 %v1048, %v1426
    %v1558 = vadd.f32 %v1049, %v1428
    %v1559 = vadd.f32 %v1050, %v1430
    %v1560 = vadd.f32 %v1051, %v1432
    %v1561 = vadd.f32 %v1497, 1e-06
    %v1562 = vadd.f32 %v1498, 1e-06
    %v1563 = vadd.f32 %v1499, 1e-06
    %v1564 = vadd.f32 %v1500, 1e-06
    %v1565 = vadd.f32 %v1501, 1e-06
    %v1566 = vadd.f32 %v1502, 1e-06
    %v1567 = vadd.f32 %v1503, 1e-06
    %v1568 = vadd.f32 %v1504, 1e-06
    %v1569 = vadd.f32 %v1505, 1e-06
    %v1570 = vadd.f32 %v1506, 1e-06
    %v1571 = vadd.f32 %v1507, 1e-06
    %v1572 = vadd.f32 %v1508, 1e-06
    %v1573 = vadd.f32 %v1509, 1e-06
    %v1574 = vadd.f32 %v1510, 1e-06
    %v1575 = vadd.f32 %v1511, 1e-06
    %v1576 = vadd.f32 %v1512, 1e-06
    %v1577 = vadd.f32 %v1513, 1e-06
    %v1578 = vadd.f32 %v1514, 1e-06
    %v1579 = vadd.f32 %v1515, 1e-06
    %v1580 = vadd.f32 %v1516, 1e-06
    %v1581 = vadd.f32 %v1517, 1e-06
    %v1582 = vadd.f32 %v1518, 1e-06
    %v1583 = vadd.f32 %v1519, 1e-06
    %v1584 = vadd.f32 %v1520, 1e-06
    %v1585 = vadd.f32 %v1521, 1e-06
    %v1586 = vadd.f32 %v1522, 1e-06
    %v1587 = vadd.f32 %v1523, 1e-06
    %v1588 = vadd.f32 %v1524, 1e-06
    %v1589 = vadd.f32 %v1525, 1e-06
    %v1590 = vadd.f32 %v1526, 1e-06
    %v1591 = vadd.f32 %v1527, 1e-06
    %v1592 = vadd.f32 %v1528, 1e-06
    %v1593 = vadd.f32 %v1529, 1e-06
    %v1594 = vadd.f32 %v1530, 1e-06
    %v1595 = vadd.f32 %v1531, 1e-06
    %v1596 = vadd.f32 %v1532, 1e-06
    %v1597 = vadd.f32 %v1533, 1e-06
    %v1598 = vadd.f32 %v1534, 1e-06
    %v1599 = vadd.f32 %v1535, 1e-06
    %v1600 = vadd.f32 %v1536, 1e-06
    %v1601 = vadd.f32 %v1537, 1e-06
    %v1602 = vadd.f32 %v1538, 1e-06
    %v1603 = vadd.f32 %v1539, 1e-06
    %v1604 = vadd.f32 %v1540, 1e-06
    %v1605 = vadd.f32 %v1541, 1e-06
    %v1606 = vadd.f32 %v1542, 1e-06
    %v1607 = vadd.f32 %v1543, 1e-06
    %v1608 = vadd.f32 %v1544, 1e-06
    %v1609 = vadd.f32 %v1545, 1e-06
    %v1610 = vadd.f32 %v1546, 1e-06
    %v1611 = vadd.f32 %v1547, 1e-06
    %v1612 = vadd.f32 %v1548, 1e-06
    %v1613 = vadd.f32 %v1549, 1e-06
    %v1614 = vadd.f32 %v1550, 1e-06
    %v1615 = vadd.f32 %v1551, 1e-06
    %v1616 = vadd.f32 %v1552, 1e-06
    %v1617 = vadd.f32 %v1553, 1e-06
    %v1618 = vadd.f32 %v1554, 1e-06
    %v1619 = vadd.f32 %v1555, 1e-06
    %v1620 = vadd.f32 %v1556, 1e-06
    %v1621 = vadd.f32 %v1557, 1e-06
    %v1622 = vadd.f32 %v1558, 1e-06
    %v1623 = vadd.f32 %v1559, 1e-06
    %v1624 = vadd.f32 %v1560, 1e-06
    %v1625 = vrsqrt.pop %v1561
    %v1626 = vmul.f32 %v1625, %v1561
    %v1627 = vmul.f32 %v1626, %v1625
    %v1628 = vmul.f32 0.5, %v1627
    %v1629 = vsub.f32 1.5, %v1628
    %v1630 = vmul.f32 %v1625, %v1629
    %v1631 = vmul.f32 %v1561, %v1630
    %vm1632 = vcmp.eq.f32.partialorder %v1561, inf
    %v1633 = vsel %vm1632, %v1561, %v1631
    %vm1634 = vcmp.eq.f32.partialorder %v1561, 0.0
    %v1635 = vand.u32 %v1561, 2147483648
    %v1636 = vsel %vm1634, %v1635, %v1633
    %v1637 = vrsqrt.pop %v1562
    %v1638 = vmul.f32 %v1637, %v1562
    %v1639 = vmul.f32 %v1638, %v1637
    %v1640 = vmul.f32 0.5, %v1639
    %v1641 = vsub.f32 1.5, %v1640
    %v1642 = vmul.f32 %v1637, %v1641
    %v1643 = vmul.f32 %v1562, %v1642
    %vm1644 = vcmp.eq.f32.partialorder %v1562, inf
    %v1645 = vsel %vm1644, %v1562, %v1643
    %vm1646 = vcmp.eq.f32.partialorder %v1562, 0.0
    %v1647 = vand.u32 %v1562, 2147483648
    %v1648 = vsel %vm1646, %v1647, %v1645
    %v1649 = vrsqrt.pop %v1563
    %v1650 = vmul.f32 %v1649, %v1563
    %v1651 = vmul.f32 %v1650, %v1649
    %v1652 = vmul.f32 0.5, %v1651
    %v1653 = vsub.f32 1.5, %v1652
    %v1654 = vmul.f32 %v1649, %v1653
    %v1655 = vmul.f32 %v1563, %v1654
    %vm1656 = vcmp.eq.f32.partialorder %v1563, inf
    %v1657 = vsel %vm1656, %v1563, %v1655
    %vm1658 = vcmp.eq.f32.partialorder %v1563, 0.0
    %v1659 = vand.u32 %v1563, 2147483648
    %v1660 = vsel %vm1658, %v1659, %v1657
    %v1661 = vrsqrt.pop %v1564
    %v1662 = vmul.f32 %v1661, %v1564
    %v1663 = vmul.f32 %v1662, %v1661
    %v1664 = vmul.f32 0.5, %v1663
    %v1665 = vsub.f32 1.5, %v1664
    %v1666 = vmul.f32 %v1661, %v1665
    %v1667 = vmul.f32 %v1564, %v1666
    %vm1668 = vcmp.eq.f32.partialorder %v1564, inf
    %v1669 = vsel %vm1668, %v1564, %v1667
    %vm1670 = vcmp.eq.f32.partialorder %v1564, 0.0
    %v1671 = vand.u32 %v1564, 2147483648
    %v1672 = vsel %vm1670, %v1671, %v1669
    %v1673 = vrsqrt.pop %v1565
    %v1674 = vmul.f32 %v1673, %v1565
    %v1675 = vmul.f32 %v1674, %v1673
    %v1676 = vmul.f32 0.5, %v1675
    %v1677 = vsub.f32 1.5, %v1676
    %v1678 = vmul.f32 %v1673, %v1677
    %v1679 = vmul.f32 %v1565, %v1678
    %vm1680 = vcmp.eq.f32.partialorder %v1565, inf
    %v1681 = vsel %vm1680, %v1565, %v1679
    %vm1682 = vcmp.eq.f32.partialorder %v1565, 0.0
    %v1683 = vand.u32 %v1565, 2147483648
    %v1684 = vsel %vm1682, %v1683, %v1681
    %v1685 = vrsqrt.pop %v1566
    %v1686 = vmul.f32 %v1685, %v1566
    %v1687 = vmul.f32 %v1686, %v1685
    %v1688 = vmul.f32 0.5, %v1687
    %v1689 = vsub.f32 1.5, %v1688
    %v1690 = vmul.f32 %v1685, %v1689
    %v1691 = vmul.f32 %v1566, %v1690
    %vm1692 = vcmp.eq.f32.partialorder %v1566, inf
    %v1693 = vsel %vm1692, %v1566, %v1691
    %vm1694 = vcmp.eq.f32.partialorder %v1566, 0.0
    %v1695 = vand.u32 %v1566, 2147483648
    %v1696 = vsel %vm1694, %v1695, %v1693
    %v1697 = vrsqrt.pop %v1567
    %v1698 = vmul.f32 %v1697, %v1567
    %v1699 = vmul.f32 %v1698, %v1697
    %v1700 = vmul.f32 0.5, %v1699
    %v1701 = vsub.f32 1.5, %v1700
    %v1702 = vmul.f32 %v1697, %v1701
    %v1703 = vmul.f32 %v1567, %v1702
    %vm1704 = vcmp.eq.f32.partialorder %v1567, inf
    %v1705 = vsel %vm1704, %v1567, %v1703
    %vm1706 = vcmp.eq.f32.partialorder %v1567, 0.0
    %v1707 = vand.u32 %v1567, 2147483648
    %v1708 = vsel %vm1706, %v1707, %v1705
    %v1709 = vrsqrt.pop %v1568
    %v1710 = vmul.f32 %v1709, %v1568
    %v1711 = vmul.f32 %v1710, %v1709
    %v1712 = vmul.f32 0.5, %v1711
    %v1713 = vsub.f32 1.5, %v1712
    %v1714 = vmul.f32 %v1709, %v1713
    %v1715 = vmul.f32 %v1568, %v1714
    %vm1716 = vcmp.eq.f32.partialorder %v1568, inf
    %v1717 = vsel %vm1716, %v1568, %v1715
    %vm1718 = vcmp.eq.f32.partialorder %v1568, 0.0
    %v1719 = vand.u32 %v1568, 2147483648
    %v1720 = vsel %vm1718, %v1719, %v1717
    %v1721 = vrsqrt.pop %v1569
    %v1722 = vmul.f32 %v1721, %v1569
    %v1723 = vmul.f32 %v1722, %v1721
    %v1724 = vmul.f32 0.5, %v1723
    %v1725 = vsub.f32 1.5, %v1724
    %v1726 = vmul.f32 %v1721, %v1725
    %v1727 = vmul.f32 %v1569, %v1726
    %vm1728 = vcmp.eq.f32.partialorder %v1569, inf
    %v1729 = vsel %vm1728, %v1569, %v1727
    %vm1730 = vcmp.eq.f32.partialorder %v1569, 0.0
    %v1731 = vand.u32 %v1569, 2147483648
    %v1732 = vsel %vm1730, %v1731, %v1729
    %v1733 = vrsqrt.pop %v1570
    %v1734 = vmul.f32 %v1733, %v1570
    %v1735 = vmul.f32 %v1734, %v1733
    %v1736 = vmul.f32 0.5, %v1735
    %v1737 = vsub.f32 1.5, %v1736
    %v1738 = vmul.f32 %v1733, %v1737
    %v1739 = vmul.f32 %v1570, %v1738
    %vm1740 = vcmp.eq.f32.partialorder %v1570, inf
    %v1741 = vsel %vm1740, %v1570, %v1739
    %vm1742 = vcmp.eq.f32.partialorder %v1570, 0.0
    %v1743 = vand.u32 %v1570, 2147483648
    %v1744 = vsel %vm1742, %v1743, %v1741
    %v1745 = vrsqrt.pop %v1571
    %v1746 = vmul.f32 %v1745, %v1571
    %v1747 = vmul.f32 %v1746, %v1745
    %v1748 = vmul.f32 0.5, %v1747
    %v1749 = vsub.f32 1.5, %v1748
    %v1750 = vmul.f32 %v1745, %v1749
    %v1751 = vmul.f32 %v1571, %v1750
    %vm1752 = vcmp.eq.f32.partialorder %v1571, inf
    %v1753 = vsel %vm1752, %v1571, %v1751
    %vm1754 = vcmp.eq.f32.partialorder %v1571, 0.0
    %v1755 = vand.u32 %v1571, 2147483648
    %v1756 = vsel %vm1754, %v1755, %v1753
    %v1757 = vrsqrt.pop %v1572
    %v1758 = vmul.f32 %v1757, %v1572
    %v1759 = vmul.f32 %v1758, %v1757
    %v1760 = vmul.f32 0.5, %v1759
    %v1761 = vsub.f32 1.5, %v1760
    %v1762 = vmul.f32 %v1757, %v1761
    %v1763 = vmul.f32 %v1572, %v1762
    %vm1764 = vcmp.eq.f32.partialorder %v1572, inf
    %v1765 = vsel %vm1764, %v1572, %v1763
    %vm1766 = vcmp.eq.f32.partialorder %v1572, 0.0
    %v1767 = vand.u32 %v1572, 2147483648
    %v1768 = vsel %vm1766, %v1767, %v1765
    %v1769 = vrsqrt.pop %v1573
    %v1770 = vmul.f32 %v1769, %v1573
    %v1771 = vmul.f32 %v1770, %v1769
    %v1772 = vmul.f32 0.5, %v1771
    %v1773 = vsub.f32 1.5, %v1772
    %v1774 = vmul.f32 %v1769, %v1773
    %v1775 = vmul.f32 %v1573, %v1774
    %vm1776 = vcmp.eq.f32.partialorder %v1573, inf
    %v1777 = vsel %vm1776, %v1573, %v1775
    %vm1778 = vcmp.eq.f32.partialorder %v1573, 0.0
    %v1779 = vand.u32 %v1573, 2147483648
    %v1780 = vsel %vm1778, %v1779, %v1777
    %v1781 = vrsqrt.pop %v1574
    %v1782 = vmul.f32 %v1781, %v1574
    %v1783 = vmul.f32 %v1782, %v1781
    %v1784 = vmul.f32 0.5, %v1783
    %v1785 = vsub.f32 1.5, %v1784
    %v1786 = vmul.f32 %v1781, %v1785
    %v1787 = vmul.f32 %v1574, %v1786
    %vm1788 = vcmp.eq.f32.partialorder %v1574, inf
    %v1789 = vsel %vm1788, %v1574, %v1787
    %vm1790 = vcmp.eq.f32.partialorder %v1574, 0.0
    %v1791 = vand.u32 %v1574, 2147483648
    %v1792 = vsel %vm1790, %v1791, %v1789
    %v1793 = vrsqrt.pop %v1575
    %v1794 = vmul.f32 %v1793, %v1575
    %v1795 = vmul.f32 %v1794, %v1793
    %v1796 = vmul.f32 0.5, %v1795
    %v1797 = vsub.f32 1.5, %v1796
    %v1798 = vmul.f32 %v1793, %v1797
    %v1799 = vmul.f32 %v1575, %v1798
    %vm1800 = vcmp.eq.f32.partialorder %v1575, inf
    %v1801 = vsel %vm1800, %v1575, %v1799
    %vm1802 = vcmp.eq.f32.partialorder %v1575, 0.0
    %v1803 = vand.u32 %v1575, 2147483648
    %v1804 = vsel %vm1802, %v1803, %v1801
    %v1805 = vrsqrt.pop %v1576
    %v1806 = vmul.f32 %v1805, %v1576
    %v1807 = vmul.f32 %v1806, %v1805
    %v1808 = vmul.f32 0.5, %v1807
    %v1809 = vsub.f32 1.5, %v1808
    %v1810 = vmul.f32 %v1805, %v1809
    %v1811 = vmul.f32 %v1576, %v1810
    %vm1812 = vcmp.eq.f32.partialorder %v1576, inf
    %v1813 = vsel %vm1812, %v1576, %v1811
    %vm1814 = vcmp.eq.f32.partialorder %v1576, 0.0
    %v1815 = vand.u32 %v1576, 2147483648
    %v1816 = vsel %vm1814, %v1815, %v1813
    %v1817 = vrsqrt.pop %v1577
    %v1818 = vmul.f32 %v1817, %v1577
    %v1819 = vmul.f32 %v1818, %v1817
    %v1820 = vmul.f32 0.5, %v1819
    %v1821 = vsub.f32 1.5, %v1820
    %v1822 = vmul.f32 %v1817, %v1821
    %v1823 = vmul.f32 %v1577, %v1822
    %vm1824 = vcmp.eq.f32.partialorder %v1577, inf
    %v1825 = vsel %vm1824, %v1577, %v1823
    %vm1826 = vcmp.eq.f32.partialorder %v1577, 0.0
    %v1827 = vand.u32 %v1577, 2147483648
    %v1828 = vsel %vm1826, %v1827, %v1825
    %v1829 = vrsqrt.pop %v1578
    %v1830 = vmul.f32 %v1829, %v1578
    %v1831 = vmul.f32 %v1830, %v1829
    %v1832 = vmul.f32 0.5, %v1831
    %v1833 = vsub.f32 1.5, %v1832
    %v1834 = vmul.f32 %v1829, %v1833
    %v1835 = vmul.f32 %v1578, %v1834
    %vm1836 = vcmp.eq.f32.partialorder %v1578, inf
    %v1837 = vsel %vm1836, %v1578, %v1835
    %vm1838 = vcmp.eq.f32.partialorder %v1578, 0.0
    %v1839 = vand.u32 %v1578, 2147483648
    %v1840 = vsel %vm1838, %v1839, %v1837
    %v1841 = vrsqrt.pop %v1579
    %v1842 = vmul.f32 %v1841, %v1579
    %v1843 = vmul.f32 %v1842, %v1841
    %v1844 = vmul.f32 0.5, %v1843
    %v1845 = vsub.f32 1.5, %v1844
    %v1846 = vmul.f32 %v1841, %v1845
    %v1847 = vmul.f32 %v1579, %v1846
    %vm1848 = vcmp.eq.f32.partialorder %v1579, inf
    %v1849 = vsel %vm1848, %v1579, %v1847
    %vm1850 = vcmp.eq.f32.partialorder %v1579, 0.0
    %v1851 = vand.u32 %v1579, 2147483648
    %v1852 = vsel %vm1850, %v1851, %v1849
    %v1853 = vrsqrt.pop %v1580
    %v1854 = vmul.f32 %v1853, %v1580
    %v1855 = vmul.f32 %v1854, %v1853
    %v1856 = vmul.f32 0.5, %v1855
    %v1857 = vsub.f32 1.5, %v1856
    %v1858 = vmul.f32 %v1853, %v1857
    %v1859 = vmul.f32 %v1580, %v1858
    %vm1860 = vcmp.eq.f32.partialorder %v1580, inf
    %v1861 = vsel %vm1860, %v1580, %v1859
    %vm1862 = vcmp.eq.f32.partialorder %v1580, 0.0
    %v1863 = vand.u32 %v1580, 2147483648
    %v1864 = vsel %vm1862, %v1863, %v1861
    %v1865 = vrsqrt.pop %v1581
    %v1866 = vmul.f32 %v1865, %v1581
    %v1867 = vmul.f32 %v1866, %v1865
    %v1868 = vmul.f32 0.5, %v1867
    %v1869 = vsub.f32 1.5, %v1868
    %v1870 = vmul.f32 %v1865, %v1869
    %v1871 = vmul.f32 %v1581, %v1870
    %vm1872 = vcmp.eq.f32.partialorder %v1581, inf
    %v1873 = vsel %vm1872, %v1581, %v1871
    %vm1874 = vcmp.eq.f32.partialorder %v1581, 0.0
    %v1875 = vand.u32 %v1581, 2147483648
    %v1876 = vsel %vm1874, %v1875, %v1873
    %v1877 = vrsqrt.pop %v1582
    %v1878 = vmul.f32 %v1877, %v1582
    %v1879 = vmul.f32 %v1878, %v1877
    %v1880 = vmul.f32 0.5, %v1879
    %v1881 = vsub.f32 1.5, %v1880
    %v1882 = vmul.f32 %v1877, %v1881
    %v1883 = vmul.f32 %v1582, %v1882
    %vm1884 = vcmp.eq.f32.partialorder %v1582, inf
    %v1885 = vsel %vm1884, %v1582, %v1883
    %vm1886 = vcmp.eq.f32.partialorder %v1582, 0.0
    %v1887 = vand.u32 %v1582, 2147483648
    %v1888 = vsel %vm1886, %v1887, %v1885
    %v1889 = vrsqrt.pop %v1583
    %v1890 = vmul.f32 %v1889, %v1583
    %v1891 = vmul.f32 %v1890, %v1889
    %v1892 = vmul.f32 0.5, %v1891
    %v1893 = vsub.f32 1.5, %v1892
    %v1894 = vmul.f32 %v1889, %v1893
    %v1895 = vmul.f32 %v1583, %v1894
    %vm1896 = vcmp.eq.f32.partialorder %v1583, inf
    %v1897 = vsel %vm1896, %v1583, %v1895
    %vm1898 = vcmp.eq.f32.partialorder %v1583, 0.0
    %v1899 = vand.u32 %v1583, 2147483648
    %v1900 = vsel %vm1898, %v1899, %v1897
    %v1901 = vrsqrt.pop %v1584
    %v1902 = vmul.f32 %v1901, %v1584
    %v1903 = vmul.f32 %v1902, %v1901
    %v1904 = vmul.f32 0.5, %v1903
    %v1905 = vsub.f32 1.5, %v1904
    %v1906 = vmul.f32 %v1901, %v1905
    %v1907 = vmul.f32 %v1584, %v1906
    %vm1908 = vcmp.eq.f32.partialorder %v1584, inf
    %v1909 = vsel %vm1908, %v1584, %v1907
    %vm1910 = vcmp.eq.f32.partialorder %v1584, 0.0
    %v1911 = vand.u32 %v1584, 2147483648
    %v1912 = vsel %vm1910, %v1911, %v1909
    %v1913 = vrsqrt.pop %v1585
    %v1914 = vmul.f32 %v1913, %v1585
    %v1915 = vmul.f32 %v1914, %v1913
    %v1916 = vmul.f32 0.5, %v1915
    %v1917 = vsub.f32 1.5, %v1916
    %v1918 = vmul.f32 %v1913, %v1917
    %v1919 = vmul.f32 %v1585, %v1918
    %vm1920 = vcmp.eq.f32.partialorder %v1585, inf
    %v1921 = vsel %vm1920, %v1585, %v1919
    %vm1922 = vcmp.eq.f32.partialorder %v1585, 0.0
    %v1923 = vand.u32 %v1585, 2147483648
    %v1924 = vsel %vm1922, %v1923, %v1921
    %v1925 = vrsqrt.pop %v1586
    %v1926 = vmul.f32 %v1925, %v1586
    %v1927 = vmul.f32 %v1926, %v1925
    %v1928 = vmul.f32 0.5, %v1927
    %v1929 = vsub.f32 1.5, %v1928
    %v1930 = vmul.f32 %v1925, %v1929
    %v1931 = vmul.f32 %v1586, %v1930
    %vm1932 = vcmp.eq.f32.partialorder %v1586, inf
    %v1933 = vsel %vm1932, %v1586, %v1931
    %vm1934 = vcmp.eq.f32.partialorder %v1586, 0.0
    %v1935 = vand.u32 %v1586, 2147483648
    %v1936 = vsel %vm1934, %v1935, %v1933
    %v1937 = vrsqrt.pop %v1587
    %v1938 = vmul.f32 %v1937, %v1587
    %v1939 = vmul.f32 %v1938, %v1937
    %v1940 = vmul.f32 0.5, %v1939
    %v1941 = vsub.f32 1.5, %v1940
    %v1942 = vmul.f32 %v1937, %v1941
    %v1943 = vmul.f32 %v1587, %v1942
    %vm1944 = vcmp.eq.f32.partialorder %v1587, inf
    %v1945 = vsel %vm1944, %v1587, %v1943
    %vm1946 = vcmp.eq.f32.partialorder %v1587, 0.0
    %v1947 = vand.u32 %v1587, 2147483648
    %v1948 = vsel %vm1946, %v1947, %v1945
    %v1949 = vrsqrt.pop %v1588
    %v1950 = vmul.f32 %v1949, %v1588
    %v1951 = vmul.f32 %v1950, %v1949
    %v1952 = vmul.f32 0.5, %v1951
    %v1953 = vsub.f32 1.5, %v1952
    %v1954 = vmul.f32 %v1949, %v1953
    %v1955 = vmul.f32 %v1588, %v1954
    %vm1956 = vcmp.eq.f32.partialorder %v1588, inf
    %v1957 = vsel %vm1956, %v1588, %v1955
    %vm1958 = vcmp.eq.f32.partialorder %v1588, 0.0
    %v1959 = vand.u32 %v1588, 2147483648
    %v1960 = vsel %vm1958, %v1959, %v1957
    %v1961 = vrsqrt.pop %v1589
    %v1962 = vmul.f32 %v1961, %v1589
    %v1963 = vmul.f32 %v1962, %v1961
    %v1964 = vmul.f32 0.5, %v1963
    %v1965 = vsub.f32 1.5, %v1964
    %v1966 = vmul.f32 %v1961, %v1965
    %v1967 = vmul.f32 %v1589, %v1966
    %vm1968 = vcmp.eq.f32.partialorder %v1589, inf
    %v1969 = vsel %vm1968, %v1589, %v1967
    %vm1970 = vcmp.eq.f32.partialorder %v1589, 0.0
    %v1971 = vand.u32 %v1589, 2147483648
    %v1972 = vsel %vm1970, %v1971, %v1969
    %v1973 = vrsqrt.pop %v1590
    %v1974 = vmul.f32 %v1973, %v1590
    %v1975 = vmul.f32 %v1974, %v1973
    %v1976 = vmul.f32 0.5, %v1975
    %v1977 = vsub.f32 1.5, %v1976
    %v1978 = vmul.f32 %v1973, %v1977
    %v1979 = vmul.f32 %v1590, %v1978
    %vm1980 = vcmp.eq.f32.partialorder %v1590, inf
    %v1981 = vsel %vm1980, %v1590, %v1979
    %vm1982 = vcmp.eq.f32.partialorder %v1590, 0.0
    %v1983 = vand.u32 %v1590, 2147483648
    %v1984 = vsel %vm1982, %v1983, %v1981
    %v1985 = vrsqrt.pop %v1591
    %v1986 = vmul.f32 %v1985, %v1591
    %v1987 = vmul.f32 %v1986, %v1985
    %v1988 = vmul.f32 0.5, %v1987
    %v1989 = vsub.f32 1.5, %v1988
    %v1990 = vmul.f32 %v1985, %v1989
    %v1991 = vmul.f32 %v1591, %v1990
    %vm1992 = vcmp.eq.f32.partialorder %v1591, inf
    %v1993 = vsel %vm1992, %v1591, %v1991
    %vm1994 = vcmp.eq.f32.partialorder %v1591, 0.0
    %v1995 = vand.u32 %v1591, 2147483648
    %v1996 = vsel %vm1994, %v1995, %v1993
    %v1997 = vrsqrt.pop %v1592
    %v1998 = vmul.f32 %v1997, %v1592
    %v1999 = vmul.f32 %v1998, %v1997
    %v2000 = vmul.f32 0.5, %v1999
    %v2001 = vsub.f32 1.5, %v2000
    %v2002 = vmul.f32 %v1997, %v2001
    %v2003 = vmul.f32 %v1592, %v2002
    %vm2004 = vcmp.eq.f32.partialorder %v1592, inf
    %v2005 = vsel %vm2004, %v1592, %v2003
    %vm2006 = vcmp.eq.f32.partialorder %v1592, 0.0
    %v2007 = vand.u32 %v1592, 2147483648
    %v2008 = vsel %vm2006, %v2007, %v2005
    %v2009 = vrsqrt.pop %v1593
    %v2010 = vmul.f32 %v2009, %v1593
    %v2011 = vmul.f32 %v2010, %v2009
    %v2012 = vmul.f32 0.5, %v2011
    %v2013 = vsub.f32 1.5, %v2012
    %v2014 = vmul.f32 %v2009, %v2013
    %v2015 = vmul.f32 %v1593, %v2014
    %vm2016 = vcmp.eq.f32.partialorder %v1593, inf
    %v2017 = vsel %vm2016, %v1593, %v2015
    %vm2018 = vcmp.eq.f32.partialorder %v1593, 0.0
    %v2019 = vand.u32 %v1593, 2147483648
    %v2020 = vsel %vm2018, %v2019, %v2017
    %v2021 = vrsqrt.pop %v1594
    %v2022 = vmul.f32 %v2021, %v1594
    %v2023 = vmul.f32 %v2022, %v2021
    %v2024 = vmul.f32 0.5, %v2023
    %v2025 = vsub.f32 1.5, %v2024
    %v2026 = vmul.f32 %v2021, %v2025
    %v2027 = vmul.f32 %v1594, %v2026
    %vm2028 = vcmp.eq.f32.partialorder %v1594, inf
    %v2029 = vsel %vm2028, %v1594, %v2027
    %vm2030 = vcmp.eq.f32.partialorder %v1594, 0.0
    %v2031 = vand.u32 %v1594, 2147483648
    %v2032 = vsel %vm2030, %v2031, %v2029
    %v2033 = vrsqrt.pop %v1595
    %v2034 = vmul.f32 %v2033, %v1595
    %v2035 = vmul.f32 %v2034, %v2033
    %v2036 = vmul.f32 0.5, %v2035
    %v2037 = vsub.f32 1.5, %v2036
    %v2038 = vmul.f32 %v2033, %v2037
    %v2039 = vmul.f32 %v1595, %v2038
    %vm2040 = vcmp.eq.f32.partialorder %v1595, inf
    %v2041 = vsel %vm2040, %v1595, %v2039
    %vm2042 = vcmp.eq.f32.partialorder %v1595, 0.0
    %v2043 = vand.u32 %v1595, 2147483648
    %v2044 = vsel %vm2042, %v2043, %v2041
    %v2045 = vrsqrt.pop %v1596
    %v2046 = vmul.f32 %v2045, %v1596
    %v2047 = vmul.f32 %v2046, %v2045
    %v2048 = vmul.f32 0.5, %v2047
    %v2049 = vsub.f32 1.5, %v2048
    %v2050 = vmul.f32 %v2045, %v2049
    %v2051 = vmul.f32 %v1596, %v2050
    %vm2052 = vcmp.eq.f32.partialorder %v1596, inf
    %v2053 = vsel %vm2052, %v1596, %v2051
    %vm2054 = vcmp.eq.f32.partialorder %v1596, 0.0
    %v2055 = vand.u32 %v1596, 2147483648
    %v2056 = vsel %vm2054, %v2055, %v2053
    %v2057 = vrsqrt.pop %v1597
    %v2058 = vmul.f32 %v2057, %v1597
    %v2059 = vmul.f32 %v2058, %v2057
    %v2060 = vmul.f32 0.5, %v2059
    %v2061 = vsub.f32 1.5, %v2060
    %v2062 = vmul.f32 %v2057, %v2061
    %v2063 = vmul.f32 %v1597, %v2062
    %vm2064 = vcmp.eq.f32.partialorder %v1597, inf
    %v2065 = vsel %vm2064, %v1597, %v2063
    %vm2066 = vcmp.eq.f32.partialorder %v1597, 0.0
    %v2067 = vand.u32 %v1597, 2147483648
    %v2068 = vsel %vm2066, %v2067, %v2065
    %v2069 = vrsqrt.pop %v1598
    %v2070 = vmul.f32 %v2069, %v1598
    %v2071 = vmul.f32 %v2070, %v2069
    %v2072 = vmul.f32 0.5, %v2071
    %v2073 = vsub.f32 1.5, %v2072
    %v2074 = vmul.f32 %v2069, %v2073
    %v2075 = vmul.f32 %v1598, %v2074
    %vm2076 = vcmp.eq.f32.partialorder %v1598, inf
    %v2077 = vsel %vm2076, %v1598, %v2075
    %vm2078 = vcmp.eq.f32.partialorder %v1598, 0.0
    %v2079 = vand.u32 %v1598, 2147483648
    %v2080 = vsel %vm2078, %v2079, %v2077
    %v2081 = vrsqrt.pop %v1599
    %v2082 = vmul.f32 %v2081, %v1599
    %v2083 = vmul.f32 %v2082, %v2081
    %v2084 = vmul.f32 0.5, %v2083
    %v2085 = vsub.f32 1.5, %v2084
    %v2086 = vmul.f32 %v2081, %v2085
    %v2087 = vmul.f32 %v1599, %v2086
    %vm2088 = vcmp.eq.f32.partialorder %v1599, inf
    %v2089 = vsel %vm2088, %v1599, %v2087
    %vm2090 = vcmp.eq.f32.partialorder %v1599, 0.0
    %v2091 = vand.u32 %v1599, 2147483648
    %v2092 = vsel %vm2090, %v2091, %v2089
    %v2093 = vrsqrt.pop %v1600
    %v2094 = vmul.f32 %v2093, %v1600
    %v2095 = vmul.f32 %v2094, %v2093
    %v2096 = vmul.f32 0.5, %v2095
    %v2097 = vsub.f32 1.5, %v2096
    %v2098 = vmul.f32 %v2093, %v2097
    %v2099 = vmul.f32 %v1600, %v2098
    %vm2100 = vcmp.eq.f32.partialorder %v1600, inf
    %v2101 = vsel %vm2100, %v1600, %v2099
    %vm2102 = vcmp.eq.f32.partialorder %v1600, 0.0
    %v2103 = vand.u32 %v1600, 2147483648
    %v2104 = vsel %vm2102, %v2103, %v2101
    %v2105 = vrsqrt.pop %v1601
    %v2106 = vmul.f32 %v2105, %v1601
    %v2107 = vmul.f32 %v2106, %v2105
    %v2108 = vmul.f32 0.5, %v2107
    %v2109 = vsub.f32 1.5, %v2108
    %v2110 = vmul.f32 %v2105, %v2109
    %v2111 = vmul.f32 %v1601, %v2110
    %vm2112 = vcmp.eq.f32.partialorder %v1601, inf
    %v2113 = vsel %vm2112, %v1601, %v2111
    %vm2114 = vcmp.eq.f32.partialorder %v1601, 0.0
    %v2115 = vand.u32 %v1601, 2147483648
    %v2116 = vsel %vm2114, %v2115, %v2113
    %v2117 = vrsqrt.pop %v1602
    %v2118 = vmul.f32 %v2117, %v1602
    %v2119 = vmul.f32 %v2118, %v2117
    %v2120 = vmul.f32 0.5, %v2119
    %v2121 = vsub.f32 1.5, %v2120
    %v2122 = vmul.f32 %v2117, %v2121
    %v2123 = vmul.f32 %v1602, %v2122
    %vm2124 = vcmp.eq.f32.partialorder %v1602, inf
    %v2125 = vsel %vm2124, %v1602, %v2123
    %vm2126 = vcmp.eq.f32.partialorder %v1602, 0.0
    %v2127 = vand.u32 %v1602, 2147483648
    %v2128 = vsel %vm2126, %v2127, %v2125
    %v2129 = vrsqrt.pop %v1603
    %v2130 = vmul.f32 %v2129, %v1603
    %v2131 = vmul.f32 %v2130, %v2129
    %v2132 = vmul.f32 0.5, %v2131
    %v2133 = vsub.f32 1.5, %v2132
    %v2134 = vmul.f32 %v2129, %v2133
    %v2135 = vmul.f32 %v1603, %v2134
    %vm2136 = vcmp.eq.f32.partialorder %v1603, inf
    %v2137 = vsel %vm2136, %v1603, %v2135
    %vm2138 = vcmp.eq.f32.partialorder %v1603, 0.0
    %v2139 = vand.u32 %v1603, 2147483648
    %v2140 = vsel %vm2138, %v2139, %v2137
    %v2141 = vrsqrt.pop %v1604
    %v2142 = vmul.f32 %v2141, %v1604
    %v2143 = vmul.f32 %v2142, %v2141
    %v2144 = vmul.f32 0.5, %v2143
    %v2145 = vsub.f32 1.5, %v2144
    %v2146 = vmul.f32 %v2141, %v2145
    %v2147 = vmul.f32 %v1604, %v2146
    %vm2148 = vcmp.eq.f32.partialorder %v1604, inf
    %v2149 = vsel %vm2148, %v1604, %v2147
    %vm2150 = vcmp.eq.f32.partialorder %v1604, 0.0
    %v2151 = vand.u32 %v1604, 2147483648
    %v2152 = vsel %vm2150, %v2151, %v2149
    %v2153 = vrsqrt.pop %v1605
    %v2154 = vmul.f32 %v2153, %v1605
    %v2155 = vmul.f32 %v2154, %v2153
    %v2156 = vmul.f32 0.5, %v2155
    %v2157 = vsub.f32 1.5, %v2156
    %v2158 = vmul.f32 %v2153, %v2157
    %v2159 = vmul.f32 %v1605, %v2158
    %vm2160 = vcmp.eq.f32.partialorder %v1605, inf
    %v2161 = vsel %vm2160, %v1605, %v2159
    %vm2162 = vcmp.eq.f32.partialorder %v1605, 0.0
    %v2163 = vand.u32 %v1605, 2147483648
    %v2164 = vsel %vm2162, %v2163, %v2161
    %v2165 = vrsqrt.pop %v1606
    %v2166 = vmul.f32 %v2165, %v1606
    %v2167 = vmul.f32 %v2166, %v2165
    %v2168 = vmul.f32 0.5, %v2167
    %v2169 = vsub.f32 1.5, %v2168
    %v2170 = vmul.f32 %v2165, %v2169
    %v2171 = vmul.f32 %v1606, %v2170
    %vm2172 = vcmp.eq.f32.partialorder %v1606, inf
    %v2173 = vsel %vm2172, %v1606, %v2171
    %vm2174 = vcmp.eq.f32.partialorder %v1606, 0.0
    %v2175 = vand.u32 %v1606, 2147483648
    %v2176 = vsel %vm2174, %v2175, %v2173
    %v2177 = vrsqrt.pop %v1607
    %v2178 = vmul.f32 %v2177, %v1607
    %v2179 = vmul.f32 %v2178, %v2177
    %v2180 = vmul.f32 0.5, %v2179
    %v2181 = vsub.f32 1.5, %v2180
    %v2182 = vmul.f32 %v2177, %v2181
    %v2183 = vmul.f32 %v1607, %v2182
    %vm2184 = vcmp.eq.f32.partialorder %v1607, inf
    %v2185 = vsel %vm2184, %v1607, %v2183
    %vm2186 = vcmp.eq.f32.partialorder %v1607, 0.0
    %v2187 = vand.u32 %v1607, 2147483648
    %v2188 = vsel %vm2186, %v2187, %v2185
    %v2189 = vrsqrt.pop %v1608
    %v2190 = vmul.f32 %v2189, %v1608
    %v2191 = vmul.f32 %v2190, %v2189
    %v2192 = vmul.f32 0.5, %v2191
    %v2193 = vsub.f32 1.5, %v2192
    %v2194 = vmul.f32 %v2189, %v2193
    %v2195 = vmul.f32 %v1608, %v2194
    %vm2196 = vcmp.eq.f32.partialorder %v1608, inf
    %v2197 = vsel %vm2196, %v1608, %v2195
    %vm2198 = vcmp.eq.f32.partialorder %v1608, 0.0
    %v2199 = vand.u32 %v1608, 2147483648
    %v2200 = vsel %vm2198, %v2199, %v2197
    %v2201 = vrsqrt.pop %v1609
    %v2202 = vmul.f32 %v2201, %v1609
    %v2203 = vmul.f32 %v2202, %v2201
    %v2204 = vmul.f32 0.5, %v2203
    %v2205 = vsub.f32 1.5, %v2204
    %v2206 = vmul.f32 %v2201, %v2205
    %v2207 = vmul.f32 %v1609, %v2206
    %vm2208 = vcmp.eq.f32.partialorder %v1609, inf
    %v2209 = vsel %vm2208, %v1609, %v2207
    %vm2210 = vcmp.eq.f32.partialorder %v1609, 0.0
    %v2211 = vand.u32 %v1609, 2147483648
    %v2212 = vsel %vm2210, %v2211, %v2209
    %v2213 = vrsqrt.pop %v1610
    %v2214 = vmul.f32 %v2213, %v1610
    %v2215 = vmul.f32 %v2214, %v2213
    %v2216 = vmul.f32 0.5, %v2215
    %v2217 = vsub.f32 1.5, %v2216
    %v2218 = vmul.f32 %v2213, %v2217
    %v2219 = vmul.f32 %v1610, %v2218
    %vm2220 = vcmp.eq.f32.partialorder %v1610, inf
    %v2221 = vsel %vm2220, %v1610, %v2219
    %vm2222 = vcmp.eq.f32.partialorder %v1610, 0.0
    %v2223 = vand.u32 %v1610, 2147483648
    %v2224 = vsel %vm2222, %v2223, %v2221
    %v2225 = vrsqrt.pop %v1611
    %v2226 = vmul.f32 %v2225, %v1611
    %v2227 = vmul.f32 %v2226, %v2225
    %v2228 = vmul.f32 0.5, %v2227
    %v2229 = vsub.f32 1.5, %v2228
    %v2230 = vmul.f32 %v2225, %v2229
    %v2231 = vmul.f32 %v1611, %v2230
    %vm2232 = vcmp.eq.f32.partialorder %v1611, inf
    %v2233 = vsel %vm2232, %v1611, %v2231
    %vm2234 = vcmp.eq.f32.partialorder %v1611, 0.0
    %v2235 = vand.u32 %v1611, 2147483648
    %v2236 = vsel %vm2234, %v2235, %v2233
    %v2237 = vrsqrt.pop %v1612
    %v2238 = vmul.f32 %v2237, %v1612
    %v2239 = vmul.f32 %v2238, %v2237
    %v2240 = vmul.f32 0.5, %v2239
    %v2241 = vsub.f32 1.5, %v2240
    %v2242 = vmul.f32 %v2237, %v2241
    %v2243 = vmul.f32 %v1612, %v2242
    %vm2244 = vcmp.eq.f32.partialorder %v1612, inf
    %v2245 = vsel %vm2244, %v1612, %v2243
    %vm2246 = vcmp.eq.f32.partialorder %v1612, 0.0
    %v2247 = vand.u32 %v1612, 2147483648
    %v2248 = vsel %vm2246, %v2247, %v2245
    %v2249 = vrsqrt.pop %v1613
    %v2250 = vmul.f32 %v2249, %v1613
    %v2251 = vmul.f32 %v2250, %v2249
    %v2252 = vmul.f32 0.5, %v2251
    %v2253 = vsub.f32 1.5, %v2252
    %v2254 = vmul.f32 %v2249, %v2253
    %v2255 = vmul.f32 %v1613, %v2254
    %vm2256 = vcmp.eq.f32.partialorder %v1613, inf
    %v2257 = vsel %vm2256, %v1613, %v2255
    %vm2258 = vcmp.eq.f32.partialorder %v1613, 0.0
    %v2259 = vand.u32 %v1613, 2147483648
    %v2260 = vsel %vm2258, %v2259, %v2257
    %v2261 = vrsqrt.pop %v1614
    %v2262 = vmul.f32 %v2261, %v1614
    %v2263 = vmul.f32 %v2262, %v2261
    %v2264 = vmul.f32 0.5, %v2263
    %v2265 = vsub.f32 1.5, %v2264
    %v2266 = vmul.f32 %v2261, %v2265
    %v2267 = vmul.f32 %v1614, %v2266
    %vm2268 = vcmp.eq.f32.partialorder %v1614, inf
    %v2269 = vsel %vm2268, %v1614, %v2267
    %vm2270 = vcmp.eq.f32.partialorder %v1614, 0.0
    %v2271 = vand.u32 %v1614, 2147483648
    %v2272 = vsel %vm2270, %v2271, %v2269
    %v2273 = vrsqrt.pop %v1615
    %v2274 = vmul.f32 %v2273, %v1615
    %v2275 = vmul.f32 %v2274, %v2273
    %v2276 = vmul.f32 0.5, %v2275
    %v2277 = vsub.f32 1.5, %v2276
    %v2278 = vmul.f32 %v2273, %v2277
    %v2279 = vmul.f32 %v1615, %v2278
    %vm2280 = vcmp.eq.f32.partialorder %v1615, inf
    %v2281 = vsel %vm2280, %v1615, %v2279
    %vm2282 = vcmp.eq.f32.partialorder %v1615, 0.0
    %v2283 = vand.u32 %v1615, 2147483648
    %v2284 = vsel %vm2282, %v2283, %v2281
    %v2285 = vrsqrt.pop %v1616
    %v2286 = vmul.f32 %v2285, %v1616
    %v2287 = vmul.f32 %v2286, %v2285
    %v2288 = vmul.f32 0.5, %v2287
    %v2289 = vsub.f32 1.5, %v2288
    %v2290 = vmul.f32 %v2285, %v2289
    %v2291 = vmul.f32 %v1616, %v2290
    %vm2292 = vcmp.eq.f32.partialorder %v1616, inf
    %v2293 = vsel %vm2292, %v1616, %v2291
    %vm2294 = vcmp.eq.f32.partialorder %v1616, 0.0
    %v2295 = vand.u32 %v1616, 2147483648
    %v2296 = vsel %vm2294, %v2295, %v2293
    %v2297 = vrsqrt.pop %v1617
    %v2298 = vmul.f32 %v2297, %v1617
    %v2299 = vmul.f32 %v2298, %v2297
    %v2300 = vmul.f32 0.5, %v2299
    %v2301 = vsub.f32 1.5, %v2300
    %v2302 = vmul.f32 %v2297, %v2301
    %v2303 = vmul.f32 %v1617, %v2302
    %vm2304 = vcmp.eq.f32.partialorder %v1617, inf
    %v2305 = vsel %vm2304, %v1617, %v2303
    %vm2306 = vcmp.eq.f32.partialorder %v1617, 0.0
    %v2307 = vand.u32 %v1617, 2147483648
    %v2308 = vsel %vm2306, %v2307, %v2305
    %v2309 = vrsqrt.pop %v1618
    %v2310 = vmul.f32 %v2309, %v1618
    %v2311 = vmul.f32 %v2310, %v2309
    %v2312 = vmul.f32 0.5, %v2311
    %v2313 = vsub.f32 1.5, %v2312
    %v2314 = vmul.f32 %v2309, %v2313
    %v2315 = vmul.f32 %v1618, %v2314
    %vm2316 = vcmp.eq.f32.partialorder %v1618, inf
    %v2317 = vsel %vm2316, %v1618, %v2315
    %vm2318 = vcmp.eq.f32.partialorder %v1618, 0.0
    %v2319 = vand.u32 %v1618, 2147483648
    %v2320 = vsel %vm2318, %v2319, %v2317
    %v2321 = vrsqrt.pop %v1619
    %v2322 = vmul.f32 %v2321, %v1619
    %v2323 = vmul.f32 %v2322, %v2321
    %v2324 = vmul.f32 0.5, %v2323
    %v2325 = vsub.f32 1.5, %v2324
    %v2326 = vmul.f32 %v2321, %v2325
    %v2327 = vmul.f32 %v1619, %v2326
    %vm2328 = vcmp.eq.f32.partialorder %v1619, inf
    %v2329 = vsel %vm2328, %v1619, %v2327
    %vm2330 = vcmp.eq.f32.partialorder %v1619, 0.0
    %v2331 = vand.u32 %v1619, 2147483648
    %v2332 = vsel %vm2330, %v2331, %v2329
    %v2333 = vrsqrt.pop %v1620
    %v2334 = vmul.f32 %v2333, %v1620
    %v2335 = vmul.f32 %v2334, %v2333
    %v2336 = vmul.f32 0.5, %v2335
    %v2337 = vsub.f32 1.5, %v2336
    %v2338 = vmul.f32 %v2333, %v2337
    %v2339 = vmul.f32 %v1620, %v2338
    %vm2340 = vcmp.eq.f32.partialorder %v1620, inf
    %v2341 = vsel %vm2340, %v1620, %v2339
    %vm2342 = vcmp.eq.f32.partialorder %v1620, 0.0
    %v2343 = vand.u32 %v1620, 2147483648
    %v2344 = vsel %vm2342, %v2343, %v2341
    %v2345 = vrsqrt.pop %v1621
    %v2346 = vmul.f32 %v2345, %v1621
    %v2347 = vmul.f32 %v2346, %v2345
    %v2348 = vmul.f32 0.5, %v2347
    %v2349 = vsub.f32 1.5, %v2348
    %v2350 = vmul.f32 %v2345, %v2349
    %v2351 = vmul.f32 %v1621, %v2350
    %vm2352 = vcmp.eq.f32.partialorder %v1621, inf
    %v2353 = vsel %vm2352, %v1621, %v2351
    %vm2354 = vcmp.eq.f32.partialorder %v1621, 0.0
    %v2355 = vand.u32 %v1621, 2147483648
    %v2356 = vsel %vm2354, %v2355, %v2353
    %v2357 = vrsqrt.pop %v1622
    %v2358 = vmul.f32 %v2357, %v1622
    %v2359 = vmul.f32 %v2358, %v2357
    %v2360 = vmul.f32 0.5, %v2359
    %v2361 = vsub.f32 1.5, %v2360
    %v2362 = vmul.f32 %v2357, %v2361
    %v2363 = vmul.f32 %v1622, %v2362
    %vm2364 = vcmp.eq.f32.partialorder %v1622, inf
    %v2365 = vsel %vm2364, %v1622, %v2363
    %vm2366 = vcmp.eq.f32.partialorder %v1622, 0.0
    %v2367 = vand.u32 %v1622, 2147483648
    %v2368 = vsel %vm2366, %v2367, %v2365
    %v2369 = vrsqrt.pop %v1623
    %v2370 = vmul.f32 %v2369, %v1623
    %v2371 = vmul.f32 %v2370, %v2369
    %v2372 = vmul.f32 0.5, %v2371
    %v2373 = vsub.f32 1.5, %v2372
    %v2374 = vmul.f32 %v2369, %v2373
    %v2375 = vmul.f32 %v1623, %v2374
    %vm2376 = vcmp.eq.f32.partialorder %v1623, inf
    %v2377 = vsel %vm2376, %v1623, %v2375
    %vm2378 = vcmp.eq.f32.partialorder %v1623, 0.0
    %v2379 = vand.u32 %v1623, 2147483648
    %v2380 = vsel %vm2378, %v2379, %v2377
    %v2381 = vrsqrt.pop %v1624
    %v2382 = vmul.f32 %v2381, %v1624
    %v2383 = vmul.f32 %v2382, %v2381
    %v2384 = vmul.f32 0.5, %v2383
    %v2385 = vsub.f32 1.5, %v2384
    %v2386 = vmul.f32 %v2381, %v2385
    %v2387 = vmul.f32 %v1624, %v2386
    %vm2388 = vcmp.eq.f32.partialorder %v1624, inf
    %v2389 = vsel %vm2388, %v1624, %v2387
    %vm2390 = vcmp.eq.f32.partialorder %v1624, 0.0
    %v2391 = vand.u32 %v1624, 2147483648
    %v2392 = vsel %vm2390, %v2391, %v2389
    %vm2457 = vcmask 1045504
    %v2458 = vrot.slane %v1636, 2
    %v2459 = vrot.slane %v1648, 2
    %v2460 = vsel %vm2457, %v2458, %v2459
    %v2461 = vrot.slane %v1660, 2
    %v2462 = vsel %vm2457, %v2459, %v2461
    %v2463 = vrot.slane %v1672, 2
    %v2464 = vsel %vm2457, %v2461, %v2463
    %v2465 = vrot.slane %v1684, 2
    %v2466 = vsel %vm2457, %v2463, %v2465
    %v2467 = vrot.slane %v1696, 2
    %v2468 = vsel %vm2457, %v2465, %v2467
    %v2469 = vrot.slane %v1708, 2
    %v2470 = vsel %vm2457, %v2467, %v2469
    %v2471 = vrot.slane %v1720, 2
    %v2472 = vsel %vm2457, %v2469, %v2471
    %v2473 = vrot.slane %v1732, 2
    %v2474 = vsel %vm2457, %v2471, %v2473
    %v2475 = vrot.slane %v1744, 2
    %v2476 = vsel %vm2457, %v2473, %v2475
    %v2477 = vrot.slane %v1756, 2
    %v2478 = vsel %vm2457, %v2475, %v2477
    %v2479 = vrot.slane %v1768, 2
    %v2480 = vsel %vm2457, %v2477, %v2479
    %v2481 = vrot.slane %v1780, 2
    %v2482 = vsel %vm2457, %v2479, %v2481
    %v2483 = vrot.slane %v1792, 2
    %v2484 = vsel %vm2457, %v2481, %v2483
    %v2485 = vrot.slane %v1804, 2
    %v2486 = vsel %vm2457, %v2483, %v2485
    %v2487 = vrot.slane %v1816, 2
    %v2488 = vsel %vm2457, %v2485, %v2487
    %v2489 = vrot.slane %v1828, 2
    %v2490 = vrot.slane %v1840, 2
    %v2491 = vsel %vm2457, %v2489, %v2490
    %v2492 = vrot.slane %v1852, 2
    %v2493 = vsel %vm2457, %v2490, %v2492
    %v2494 = vrot.slane %v1864, 2
    %v2495 = vsel %vm2457, %v2492, %v2494
    %v2496 = vrot.slane %v1876, 2
    %v2497 = vsel %vm2457, %v2494, %v2496
    %v2498 = vrot.slane %v1888, 2
    %v2499 = vsel %vm2457, %v2496, %v2498
    %v2500 = vrot.slane %v1900, 2
    %v2501 = vsel %vm2457, %v2498, %v2500
    %v2502 = vrot.slane %v1912, 2
    %v2503 = vsel %vm2457, %v2500, %v2502
    %v2504 = vrot.slane %v1924, 2
    %v2505 = vsel %vm2457, %v2502, %v2504
    %v2506 = vrot.slane %v1936, 2
    %v2507 = vsel %vm2457, %v2504, %v2506
    %v2508 = vrot.slane %v1948, 2
    %v2509 = vsel %vm2457, %v2506, %v2508
    %v2510 = vrot.slane %v1960, 2
    %v2511 = vsel %vm2457, %v2508, %v2510
    %v2512 = vrot.slane %v1972, 2
    %v2513 = vsel %vm2457, %v2510, %v2512
    %v2514 = vrot.slane %v1984, 2
    %v2515 = vsel %vm2457, %v2512, %v2514
    %v2516 = vrot.slane %v1996, 2
    %v2517 = vsel %vm2457, %v2514, %v2516
    %v2518 = vrot.slane %v2008, 2
    %v2519 = vsel %vm2457, %v2516, %v2518
    %v2520 = vrot.slane %v2020, 2
    %v2521 = vrot.slane %v2032, 2
    %v2522 = vsel %vm2457, %v2520, %v2521
    %v2523 = vrot.slane %v2044, 2
    %v2524 = vsel %vm2457, %v2521, %v2523
    %v2525 = vrot.slane %v2056, 2
    %v2526 = vsel %vm2457, %v2523, %v2525
    %v2527 = vrot.slane %v2068, 2
    %v2528 = vsel %vm2457, %v2525, %v2527
    %v2529 = vrot.slane %v2080, 2
    %v2530 = vsel %vm2457, %v2527, %v2529
    %v2531 = vrot.slane %v2092, 2
    %v2532 = vsel %vm2457, %v2529, %v2531
    %v2533 = vrot.slane %v2104, 2
    %v2534 = vsel %vm2457, %v2531, %v2533
    %v2535 = vrot.slane %v2116, 2
    %v2536 = vsel %vm2457, %v2533, %v2535
    %v2537 = vrot.slane %v2128, 2
    %v2538 = vsel %vm2457, %v2535, %v2537
    %v2539 = vrot.slane %v2140, 2
    %v2540 = vsel %vm2457, %v2537, %v2539
    %v2541 = vrot.slane %v2152, 2
    %v2542 = vsel %vm2457, %v2539, %v2541
    %v2543 = vrot.slane %v2164, 2
    %v2544 = vsel %vm2457, %v2541, %v2543
    %v2545 = vrot.slane %v2176, 2
    %v2546 = vsel %vm2457, %v2543, %v2545
    %v2547 = vrot.slane %v2188, 2
    %v2548 = vsel %vm2457, %v2545, %v2547
    %v2549 = vrot.slane %v2200, 2
    %v2550 = vsel %vm2457, %v2547, %v2549
    %v2551 = vrot.slane %v2212, 2
    %v2552 = vrot.slane %v2224, 2
    %v2553 = vsel %vm2457, %v2551, %v2552
    %v2554 = vrot.slane %v2236, 2
    %v2555 = vsel %vm2457, %v2552, %v2554
    %v2556 = vrot.slane %v2248, 2
    %v2557 = vsel %vm2457, %v2554, %v2556
    %v2558 = vrot.slane %v2260, 2
    %v2559 = vsel %vm2457, %v2556, %v2558
    %v2560 = vrot.slane %v2272, 2
    %v2561 = vsel %vm2457, %v2558, %v2560
    %v2562 = vrot.slane %v2284, 2
    %v2563 = vsel %vm2457, %v2560, %v2562
    %v2564 = vrot.slane %v2296, 2
    %v2565 = vsel %vm2457, %v2562, %v2564
    %v2566 = vrot.slane %v2308, 2
    %v2567 = vsel %vm2457, %v2564, %v2566
    %v2568 = vrot.slane %v2320, 2
    %v2569 = vsel %vm2457, %v2566, %v2568
    %v2570 = vrot.slane %v2332, 2
    %v2571 = vsel %vm2457, %v2568, %v2570
    %v2572 = vrot.slane %v2344, 2
    %v2573 = vsel %vm2457, %v2570, %v2572
    %v2574 = vrot.slane %v2356, 2
    %v2575 = vsel %vm2457, %v2572, %v2574
    %v2576 = vrot.slane %v2368, 2
    %v2577 = vsel %vm2457, %v2574, %v2576
    %v2578 = vrot.slane %v2380, 2
    %v2579 = vsel %vm2457, %v2576, %v2578
    %v2580 = vrot.slane %v2392, 2
    %v2581 = vsel %vm2457, %v2578, %v2580
    %vm2646 = vcmask 1031168
    %v2647 = vsel %vm2646, %v2460, 0.0
    %v2648 = vsel %vm2646, %v2462, 0.0
    %v2649 = vadd.f32 %v2647, %v2648
    %v2650 = vsel %vm2646, %v2464, 0.0
    %v2651 = vadd.f32 %v2649, %v2650
    %v2652 = vsel %vm2646, %v2466, 0.0
    %v2653 = vadd.f32 %v2651, %v2652
    %v2654 = vsel %vm2646, %v2468, 0.0
    %v2655 = vadd.f32 %v2653, %v2654
    %v2656 = vsel %vm2646, %v2470, 0.0
    %v2657 = vadd.f32 %v2655, %v2656
    %v2658 = vsel %vm2646, %v2472, 0.0
    %v2659 = vadd.f32 %v2657, %v2658
    %v2660 = vsel %vm2646, %v2474, 0.0
    %v2661 = vadd.f32 %v2659, %v2660
    %v2662 = vsel %vm2646, %v2476, 0.0
    %v2663 = vadd.f32 %v2661, %v2662
    %v2664 = vsel %vm2646, %v2478, 0.0
    %v2665 = vadd.f32 %v2663, %v2664
    %v2666 = vsel %vm2646, %v2480, 0.0
    %v2667 = vadd.f32 %v2665, %v2666
    %v2668 = vsel %vm2646, %v2482, 0.0
    %v2669 = vadd.f32 %v2667, %v2668
    %v2670 = vsel %vm2646, %v2484, 0.0
    %v2671 = vadd.f32 %v2669, %v2670
    %v2672 = vsel %vm2646, %v2486, 0.0
    %v2673 = vadd.f32 %v2671, %v2672
    %v2674 = vsel %vm2646, %v2488, 0.0
    %v2675 = vadd.f32 %v2673, %v2674
    %vm2676 = vcmask 1029120
    %v2677 = vsel %vm2676, %v2487, 0.0
    %v2678 = vadd.f32 %v2675, %v2677
    %v2679 = vsel %vm2646, %v2491, 0.0
    %v2680 = vadd.f32 %v2678, %v2679
    %v2681 = vsel %vm2646, %v2493, 0.0
    %v2682 = vadd.f32 %v2680, %v2681
    %v2683 = vsel %vm2646, %v2495, 0.0
    %v2684 = vadd.f32 %v2682, %v2683
    %v2685 = vsel %vm2646, %v2497, 0.0
    %v2686 = vadd.f32 %v2684, %v2685
    %v2687 = vsel %vm2646, %v2499, 0.0
    %v2688 = vadd.f32 %v2686, %v2687
    %v2689 = vsel %vm2646, %v2501, 0.0
    %v2690 = vadd.f32 %v2688, %v2689
    %v2691 = vsel %vm2646, %v2503, 0.0
    %v2692 = vadd.f32 %v2690, %v2691
    %v2693 = vsel %vm2646, %v2505, 0.0
    %v2694 = vadd.f32 %v2692, %v2693
    %v2695 = vsel %vm2646, %v2507, 0.0
    %v2696 = vadd.f32 %v2694, %v2695
    %v2697 = vsel %vm2646, %v2509, 0.0
    %v2698 = vadd.f32 %v2696, %v2697
    %v2699 = vsel %vm2646, %v2511, 0.0
    %v2700 = vadd.f32 %v2698, %v2699
    %v2701 = vsel %vm2646, %v2513, 0.0
    %v2702 = vadd.f32 %v2700, %v2701
    %v2703 = vsel %vm2646, %v2515, 0.0
    %v2704 = vadd.f32 %v2702, %v2703
    %v2705 = vsel %vm2646, %v2517, 0.0
    %v2706 = vadd.f32 %v2704, %v2705
    %v2707 = vsel %vm2646, %v2519, 0.0
    %v2708 = vadd.f32 %v2706, %v2707
    %v2709 = vsel %vm2676, %v2518, 0.0
    %v2710 = vadd.f32 %v2708, %v2709
    %v2711 = vsel %vm2646, %v2522, 0.0
    %v2712 = vadd.f32 %v2710, %v2711
    %v2713 = vsel %vm2646, %v2524, 0.0
    %v2714 = vadd.f32 %v2712, %v2713
    %v2715 = vsel %vm2646, %v2526, 0.0
    %v2716 = vadd.f32 %v2714, %v2715
    %v2717 = vsel %vm2646, %v2528, 0.0
    %v2718 = vadd.f32 %v2716, %v2717
    %v2719 = vsel %vm2646, %v2530, 0.0
    %v2720 = vadd.f32 %v2718, %v2719
    %v2721 = vsel %vm2646, %v2532, 0.0
    %v2722 = vadd.f32 %v2720, %v2721
    %v2723 = vsel %vm2646, %v2534, 0.0
    %v2724 = vadd.f32 %v2722, %v2723
    %v2725 = vsel %vm2646, %v2536, 0.0
    %v2726 = vadd.f32 %v2724, %v2725
    %v2727 = vsel %vm2646, %v2538, 0.0
    %v2728 = vadd.f32 %v2726, %v2727
    %v2729 = vsel %vm2646, %v2540, 0.0
    %v2730 = vadd.f32 %v2728, %v2729
    %v2731 = vsel %vm2646, %v2542, 0.0
    %v2732 = vadd.f32 %v2730, %v2731
    %v2733 = vsel %vm2646, %v2544, 0.0
    %v2734 = vadd.f32 %v2732, %v2733
    %v2735 = vsel %vm2646, %v2546, 0.0
    %v2736 = vadd.f32 %v2734, %v2735
    %v2737 = vsel %vm2646, %v2548, 0.0
    %v2738 = vadd.f32 %v2736, %v2737
    %v2739 = vsel %vm2646, %v2550, 0.0
    %v2740 = vadd.f32 %v2738, %v2739
    %v2741 = vsel %vm2676, %v2549, 0.0
    %v2742 = vadd.f32 %v2740, %v2741
    %v2743 = vsel %vm2646, %v2553, 0.0
    %v2744 = vadd.f32 %v2742, %v2743
    %v2745 = vsel %vm2646, %v2555, 0.0
    %v2746 = vadd.f32 %v2744, %v2745
    %v2747 = vsel %vm2646, %v2557, 0.0
    %v2748 = vadd.f32 %v2746, %v2747
    %v2749 = vsel %vm2646, %v2559, 0.0
    %v2750 = vadd.f32 %v2748, %v2749
    %v2751 = vsel %vm2646, %v2561, 0.0
    %v2752 = vadd.f32 %v2750, %v2751
    %v2753 = vsel %vm2646, %v2563, 0.0
    %v2754 = vadd.f32 %v2752, %v2753
    %v2755 = vsel %vm2646, %v2565, 0.0
    %v2756 = vadd.f32 %v2754, %v2755
    %v2757 = vsel %vm2646, %v2567, 0.0
    %v2758 = vadd.f32 %v2756, %v2757
    %v2759 = vsel %vm2646, %v2569, 0.0
    %v2760 = vadd.f32 %v2758, %v2759
    %v2761 = vsel %vm2646, %v2571, 0.0
    %v2762 = vadd.f32 %v2760, %v2761
    %v2763 = vsel %vm2646, %v2573, 0.0
    %v2764 = vadd.f32 %v2762, %v2763
    %v2765 = vsel %vm2646, %v2575, 0.0
    %v2766 = vadd.f32 %v2764, %v2765
    %v2767 = vsel %vm2646, %v2577, 0.0
    %v2768 = vadd.f32 %v2766, %v2767
    %v2769 = vsel %vm2646, %v2579, 0.0
    %v2770 = vadd.f32 %v2768, %v2769
    %v2771 = vsel %vm2646, %v2581, 0.0
    %v2772 = vadd.f32 %v2770, %v2771
    %v2773 = vsel %vm2676, %v2580, 0.0
    %v2774 = vadd.f32 %v2772, %v2773
    %2775 = vadd.xlane.f32.xlu0 %v2774
    %v2776 = vpop.xlane.xlu0 %2775
    %v2777 = vrot.slane %v2776, 4
    %v2778 = vadd.f32 %v2776, %v2777
    %v2779 = vrot.slane %v2778, 2
    %v2780 = vadd.f32 %v2778, %v2779
    %v2781 = vrot.slane %v2780, 1
    %v2782 = vadd.f32 %v2780, %v2781
    %s2783 = vtos %v2782
    %v2784 = vstv %s2783
    %v2785 = vmul.f32 %v2784, 7.87352e-06
    %v2786 = vadd.f32 %v414, %v2785
    %vm2787 = vcmask 0
    %2788 = vst.msk [vmem:[#allocation7] sm:$0x1] %vm2787, %v2786
    // Predicated region
    $region18: #{tpu_custom_call.1} parent=1 // pred_check
      _
    $region19: #{tpu_custom_call.1} parent=1 // pred_check_branch
      %2790 = sbr.rel (0) target = $region21
    $region20: #{tpu_custom_call.1} parent=1 // pred_region
      %2792 = vsyncadd [#allocation4], 0
      %s2794 = sshll.u32 [#allocation7], 4
      %s2795 = int_to_ptr.vmem [resolvable:$true] %s2794
      %s2796 = sshll.u32 %s2, 4
      %s2797 = int_to_ptr.hbm [resolvable:$true] %s2796
      %2799 = dma.vmem_to_hbm [thread:$0]  %s2795, 16, %s2797, [#allocation4]
    $region21: #{tpu_custom_call.1} parent=1 // pred_fallthru
      _
    // Predicated region
    $region22: #{tpu_custom_call.1} parent=1 // pred_check
      _
    $region23: #{tpu_custom_call.1} parent=1 // pred_check_branch
      %2801 = sbr.rel (0) target = $region25
    $region24: #{tpu_custom_call.1} parent=1 // pred_region
      %2803 = dma.done [#allocation4], 16
    $region25: #{tpu_custom_call.1} parent=1 // pred_fallthru
      _
    %2804 = vsyncpa [#allocation3], 1
    %2805 = vsyncpa [#allocation6], 1
    %2806 = vsyncpa [#allocation4], 1

</llo_original>
